<compile_context>
chip_gen: v7x
topology: tpu7x:2x2x1
jax: 0.10.0
libtpu: 0.0.40
codegen_flags: <defaults>
</compile_context>

<pallas_src>
import functools
import math

import jax
import jax.numpy as jnp
from jax import lax
from jax.experimental import pallas as pl
from jax.experimental.pallas import tpu as pltpu


def _round_up(n, m):
    return ((n + m - 1) // m) * m


def _pick_q_tile(s):
    if s <= 256:
        return s
    for t in (256, 128, 64, 32, 16, 8):
        if s % t == 0:
            return t
    return s


def _vmem_capacity_bytes():
    try:
        return int(pltpu.get_tpu_info().vmem_capacity_bytes)
    except Exception:
        return 64 * 1024 * 1024


# -----------------------------------------------------------------------------
# Kernel: one (batch, query-row-tile) grid step computes the full decoder layer
# for q_tile rows.
# -----------------------------------------------------------------------------
def _decoder_layer_kernel(
    xq_ref,       # (1, Tq, Dp)  query-row tile of x
    xf_ref,       # (1, S,  Dp)  full x (self-attn K/V source)
    enc_ref,      # (1, Se, Dp)  encoder output
    wq_sa_ref,    # (Dp, H*hd)
    bq_sa_ref,    # (1, H*hd)
    wkv_sa_ref,   # (Dp, 2*H*hd)
    bkv_sa_ref,   # (1, 2*H*hd)
    wo_sa_ref,    # (H, hd, Dp)
    bo_sa_ref,    # (1, Dp)
    wq_ca_ref,    # (Dp, H*hd)
    bq_ca_ref,    # (1, H*hd)
    wkv_ca_ref,   # (Dp, 2*H*hd)
    bkv_ca_ref,   # (1, 2*H*hd)
    wo_ca_ref,    # (H, hd, Dp)
    bo_ca_ref,    # (1, Dp)
    w1_ref,       # (Dp, Fp)
    b1_ref,       # (1, Fp)
    w2_ref,       # (Fp, Dp)
    b2_ref,       # (1, Dp)
    g_ref,        # (3, Dp)  LayerNorm gammas (padded cols 0)
    beta_ref,     # (3, Dp)  LayerNorm betas  (padded cols 0)
    o_ref,        # (1, Tq, Dp)
    *,
    num_heads,
    head_dim,     # real head dim (no lane padding)
    d_model,      # real model dim (LayerNorm statistics)
    d_pad,        # lane-padded model dim
    q_tile,
):
    H, hd = num_heads, head_dim
    hw = H * hd

    xq = xq_ref[0]                    # (Tq, Dp)  compute dtype
    xf = xf_ref[0]                    # (S,  Dp)
    enc = enc_ref[0]                  # (Se, Dp)
    cdt = xq.dtype                    # MXU operands stay in the input dtype

    scale = jnp.float32(1.0 / math.sqrt(head_dim))
    inv_d = jnp.float32(1.0 / d_model)
    n_pad = jnp.float32(d_pad - d_model)
    q_off = pl.program_id(1) * q_tile         # global row offset of this query tile

    def split_heads(z2, col0=0):
        # (rows, >=col0+H*hd) -> (H, rows, hd); unpadded per-head slices.
        return jnp.stack(
            [z2[:, col0 + h * hd: col0 + (h + 1) * hd] for h in range(H)], axis=0)

    def attend(q2, kv2, wo3, bo, causal):
        # q2: (Sq, H*hd); kv2: (Sk, 2*H*hd); wo3: (H, hd, Dp); compute dtype.
        sq, sk = q2.shape[0], kv2.shape[0]
        q3 = split_heads(q2)                      # (H, Sq, hd)
        k3 = split_heads(kv2, 0)                  # (H, Sk, hd)
        v3 = split_heads(kv2, hw)                 # (H, Sk, hd)
        # head-batched q.k^T (leading batch dim) — MXU, f32 accumulation
        s = jnp.einsum("hqd,hkd->hqk", q3, k3,
                       preferred_element_type=jnp.float32) * scale
        if causal:
            # additive causal mask, built once per attention block (not per head)
            row = lax.broadcasted_iota(jnp.int32, (sq, sk), 0) + q_off
            col = lax.broadcasted_iota(jnp.int32, (sq, sk), 1)
            s = jnp.where((col > row)[None, :, :], jnp.float32(-1e30), s)
        # softmax statistics in f32; normalization deferred until after PV
        s = s - jnp.max(s, axis=-1, keepdims=True)
        p = jnp.exp(s)
        denom = jnp.sum(p, axis=-1, keepdims=True)          # (H, Sq, 1)
        inv = pl.reciprocal(denom, approx=True)
        inv = inv * (jnp.float32(2.0) - denom * inv)        # one Newton step
        attn = jnp.einsum("hqk,hkd->hqd", p.astype(cdt), v3,
                          preferred_element_type=jnp.float32)   # (H, Sq, hd)
        attn = (attn * inv).astype(cdt)          # normalize the small tensor
        # head merge folded into the output projection: batched matmul against
        # (H, hd, Dp) weights, then sum over heads — no concatenate.
        outs = jnp.einsum("hqd,hdD->hqD", attn, wo3,
                          preferred_element_type=jnp.float32)   # (H, Sq, Dp)
        return jnp.sum(outs, axis=0) + bo.astype(jnp.float32)   # (Sq, Dp) f32

    def layer_norm(z, g_row, b_row):
        # z: (Sq, Dp) f32, padded feature columns exactly zero.
        # Centered two-pass variance, with an exact correction for the
        # (Dp - D) zero-padded columns (each contributes mu^2 to sum((z-mu)^2)).
        mu = jnp.sum(z, axis=-1, keepdims=True) * inv_d
        zc = z - mu
        ss = jnp.sum(zc * zc, axis=-1, keepdims=True) - n_pad * mu * mu
        var = jnp.maximum(ss * inv_d, jnp.float32(0.0))
        r = lax.rsqrt(var + jnp.float32(1e-5))
        return zc * r * g_row.astype(jnp.float32) + b_row.astype(jnp.float32)

    # ---- block 1: causal self-attention + residual + LayerNorm --------------
    q_sa = (jnp.dot(xq, wq_sa_ref[...], preferred_element_type=jnp.float32)
            + bq_sa_ref[...].astype(jnp.float32)).astype(cdt)      # (Tq, H*hd)
    kv_sa = (jnp.dot(xf, wkv_sa_ref[...], preferred_element_type=jnp.float32)
             + bkv_sa_ref[...].astype(jnp.float32)).astype(cdt)    # (S, 2*H*hd)
    sa = attend(q_sa, kv_sa, wo_sa_ref[...], bo_sa_ref[...], causal=True)
    x1 = layer_norm(xq.astype(jnp.float32) + sa, g_ref[0:1], beta_ref[0:1])
    x1c = x1.astype(cdt)

    # ---- block 2: cross-attention over encoder output + residual + LN -------
    q_ca = (jnp.dot(x1c, wq_ca_ref[...], preferred_element_type=jnp.float32)
            + bq_ca_ref[...].astype(jnp.float32)).astype(cdt)      # (Tq, H*hd)
    kv_ca = (jnp.dot(enc, wkv_ca_ref[...], preferred_element_type=jnp.float32)
             + bkv_ca_ref[...].astype(jnp.float32)).astype(cdt)    # (Se, 2*H*hd)
    ca = attend(q_ca, kv_ca, wo_ca_ref[...], bo_ca_ref[...], causal=False)
    x2 = layer_norm(x1 + ca, g_ref[1:2], beta_ref[1:2])
    x2c = x2.astype(cdt)

    # ---- block 3: FFN (linear -> ReLU -> linear) + residual + LN ------------
    hid = jnp.maximum(
        jnp.dot(x2c, w1_ref[...], preferred_element_type=jnp.float32)
        + b1_ref[...].astype(jnp.float32), jnp.float32(0.0)).astype(cdt)
    ff = (jnp.dot(hid, w2_ref[...], preferred_element_type=jnp.float32)
          + b2_ref[...].astype(jnp.float32))
    x3 = layer_norm(x2 + ff, g_ref[2:3], beta_ref[2:3])

    o_ref[0] = x3.astype(o_ref.dtype)


# -----------------------------------------------------------------------------
# One-time weight pre-packing (hoisted out of the forward path):
#   * model dim D padded to a lane multiple (Dp), FFN dim F to Fp,
#   * head_dim kept at its real size (no per-head lane padding),
#   * output projections reshaped head-major to (H, hd, Dp).
# -----------------------------------------------------------------------------
def prepack_decoder_params(params, *, num_heads, dtype=jnp.float32, lane=128):
    wsa, bsa, wca, bca, w1, b1, w2, b2, g, beta = params
    D = wsa.shape[-1]
    F = w1.shape[1]
    H = num_heads
    hd = D // H
    Dp = _round_up(D, lane)
    Fp = _round_up(F, lane)
    dt = dtype

    def in_proj(w, b):
        # w: (D, D) (in, out); b: (D,)  -> rows padded to Dp, real H*hd out cols
        wp = jnp.zeros((Dp, D), dt).at[:D, :].set(w.astype(dt))
        bp = b.reshape(1, D).astype(dt)
        return wp, bp

    def out_proj(w, b):
        # w: (D, D) (concat-heads in, out); b: (D,) -> (H, hd, Dp), (1, Dp)
        w3 = w.reshape(H, hd, D)
        wp = jnp.zeros((H, hd, Dp), dt).at[:, :, :D].set(w3.astype(dt))
        bp = jnp.zeros((1, Dp), dt).at[0, :D].set(b.astype(dt))
        return wp, bp

    def pad2(a, r, c):
        return jnp.zeros((r, c), dt).at[:a.shape[0], :a.shape[1]].set(a.astype(dt))

    wq_s, bq_s = in_proj(wsa[0], bsa[0])
    wk_s, bk_s = in_proj(wsa[1], bsa[1])
    wv_s, bv_s = in_proj(wsa[2], bsa[2])
    wo_s, bo_s = out_proj(wsa[3], bsa[3])
    wkv_s = jnp.concatenate([wk_s, wv_s], axis=1)          # (Dp, 2*H*hd)
    bkv_s = jnp.concatenate([bk_s, bv_s], axis=1)

    wq_c, bq_c = in_proj(wca[0], bca[0])
    wk_c, bk_c = in_proj(wca[1], bca[1])
    wv_c, bv_c = in_proj(wca[2], bca[2])
    wo_c, bo_c = out_proj(wca[3], bca[3])
    wkv_c = jnp.concatenate([wk_c, wv_c], axis=1)
    bkv_c = jnp.concatenate([bk_c, bv_c], axis=1)

    w1p = pad2(w1, Dp, Fp)
    b1p = pad2(b1, 1, Fp)
    w2p = pad2(w2, Fp, Dp)
    b2p = pad2(b2, 1, Dp)
    gp = pad2(g, 3, Dp)
    betap = pad2(beta, 3, Dp)

    return (wq_s, bq_s, wkv_s, bkv_s, wo_s, bo_s,
            wq_c, bq_c, wkv_c, bkv_c, wo_c, bo_c,
            w1p, b1p, w2p, b2p, gp, betap)


# -----------------------------------------------------------------------------
# Forward wrapper: pads activations only if needed, launches the fused kernel on
# a (batch, query-row-tile) grid, slices padding off the output.
# -----------------------------------------------------------------------------
def transformer_decoder_layer(x, enc, packed, *, num_heads, q_tile=None):
    B, S, D = x.shape
    _, Se, _ = enc.shape
    H = num_heads
    hd = D // H
    hw = H * hd
    dt = x.dtype

    (wq_s, bq_s, wkv_s, bkv_s, wo_s, bo_s,
     wq_c, bq_c, wkv_c, bkv_c, wo_c, bo_c,
     w1p, b1p, w2p, b2p, gp, betap) = packed
    Dp = gp.shape[1]
    Fp = w1p.shape[1]

    if q_tile is None:
        q_tile = _pick_q_tile(S)
    assert S % q_tile == 0
    n_q = S // q_tile

    # Skip the activation padding entirely when D is already lane-aligned.
    if Dp == D:
        xp, encp = x, enc.astype(dt)
    else:
        xp = jnp.zeros((B, S, Dp), dt).at[:, :, :D].set(x)
        encp = jnp.zeros((B, Se, Dp), dt).at[:, :, :D].set(enc.astype(dt))

    operands = (xp, xp, encp,
                wq_s, bq_s, wkv_s, bkv_s, wo_s, bo_s,
                wq_c, bq_c, wkv_c, bkv_c, wo_c, bo_c,
                w1p, b1p, w2p, b2p, gp, betap)

    def q_map(b, qi):
        return (b, qi, 0)

    def full_map(b, qi):
        return (b, 0, 0)

    def const_map(ndim):
        return lambda b, qi, _n=ndim: (0,) * _n

    in_specs = ([pl.BlockSpec((1, q_tile, Dp), q_map),     # x query-row tile
                 pl.BlockSpec((1, S, Dp), full_map),       # full x (self-attn K/V)
                 pl.BlockSpec((1, Se, Dp), full_map)]      # encoder output
                + [pl.BlockSpec(op.shape, const_map(op.ndim))
                   for op in operands[3:]])
    out_spec = pl.BlockSpec((1, q_tile, Dp), q_map)

    # ---- VMEM budget: weights + double-buffered activation blocks + f32
    # intermediates, clamped to 85% of the physical per-core VMEM. ------------
    itemsize = x.dtype.itemsize
    f32b = 4
    weight_bytes = sum(int(op.size) * op.dtype.itemsize for op in operands[3:])
    block_bytes = (q_tile * Dp + S * Dp + Se * Dp + q_tile * Dp) * itemsize
    inter_bytes = f32b * (2 * H * q_tile * (S + Se)            # scores / probs
                          + (S + Se) * 2 * hw + 2 * q_tile * hw  # QKV projections
                          + 2 * H * q_tile * (Dp + hd)           # out-proj / attn
                          + q_tile * Fp                          # FFN hidden
                          + 8 * q_tile * Dp)                     # residual / LN temps
    need = 2 * (weight_bytes + block_bytes) + inter_bytes
    cap = _vmem_capacity_bytes()
    vmem_limit = int(min(max(int(need * 1.25), 32 * 1024 * 1024),
                         int(0.85 * cap)))

    flops = B * (2 * S * Dp * hw                 # self-attn Q proj
                 + 2 * n_q * S * Dp * 2 * hw     # self-attn KV proj (per q tile)
                 + 4 * H * S * S * hd            # self-attn scores + PV
                 + 2 * S * hw * Dp               # self-attn out proj
                 + 2 * S * Dp * hw               # cross-attn Q proj
                 + 2 * n_q * Se * Dp * 2 * hw    # cross-attn KV proj (per q tile)
                 + 4 * H * S * Se * hd           # cross-attn scores + PV
                 + 2 * S * hw * Dp               # cross-attn out proj
                 + 4 * S * Dp * Fp)              # FFN
    cost = pl.CostEstimate(
        flops=int(flops),
        transcendentals=int(B * H * S * (S + Se)),
        bytes_accessed=int(weight_bytes
                           + B * (2 * S + n_q * S + n_q * Se) * Dp * itemsize))

    kernel = functools.partial(
        _decoder_layer_kernel, num_heads=H, head_dim=hd, d_model=D, d_pad=Dp,
        q_tile=q_tile)

    out_p = pl.pallas_call(
        kernel,
        out_shape=jax.ShapeDtypeStruct((B, S, Dp), dt),
        grid_spec=pltpu.PrefetchScalarGridSpec(
            num_scalar_prefetch=0,
            grid=(B, n_q),
            in_specs=in_specs,
            out_specs=out_spec,
        ),
        compiler_params=pltpu.CompilerParams(
            dimension_semantics=("parallel", "parallel"),
            vmem_limit_bytes=vmem_limit),
        cost_estimate=cost,
    )(*operands)

    return out_p if Dp == D else out_p[:, :, :D]


# -----------------------------------------------------------------------------
# Pure-JAX reference (same math, unpadded) for a sanity check
# -----------------------------------------------------------------------------
def _reference(x, enc, params, *, num_heads):
    wsa, bsa, wca, bca, w1, b1, w2, b2, g, beta = params
    D = x.shape[-1]
    hd = D // num_heads

    def mha(q_in, kv_in, w, b, causal):
        q = q_in @ w[0] + b[0]
        k = kv_in @ w[1] + b[1]
        v = kv_in @ w[2] + b[2]
        B, Sq, _ = q.shape
        Sk = k.shape[1]
        qh = q.reshape(B, Sq, num_heads, hd).transpose(0, 2, 1, 3)
        kh = k.reshape(B, Sk, num_heads, hd).transpose(0, 2, 1, 3)
        vh = v.reshape(B, Sk, num_heads, hd).transpose(0, 2, 1, 3)
        s = jnp.einsum("bhqd,bhkd->bhqk", qh, kh) / jnp.sqrt(jnp.float32(hd))
        if causal:
            row = jnp.arange(Sq)[:, None]
            col = jnp.arange(Sk)[None, :]
            s = jnp.where((col > row)[None, None], -1e30, s)
        p = jax.nn.softmax(s, axis=-1)
        o = jnp.einsum("bhqk,bhkd->bhqd", p, vh)
        o = o.transpose(0, 2, 1, 3).reshape(B, Sq, D)
        return o @ w[3] + b[3]

    def ln(z, gr, br):
        mu = z.mean(-1, keepdims=True)
        var = ((z - mu) ** 2).mean(-1, keepdims=True)
        return (z - mu) / jnp.sqrt(var + 1e-5) * gr + br

    x1 = ln(x + mha(x, x, wsa, bsa, True), g[0], beta[0])
    x2 = ln(x1 + mha(x1, enc, wca, bca, False), g[1], beta[1])
    ff = jnp.maximum(x2 @ w1 + b1, 0.0) @ w2 + b2
    return ln(x2 + ff, g[2], beta[2])


# -----------------------------------------------------------------------------
if __name__ == "__main__":
    B, S, Se = 2, 8, 10
    D, H, F = 32, 2, 6

    key = jax.random.PRNGKey(0)
    ks = jax.random.split(key, 16)

    def nrm(k, shape, scale=0.05):
        return (scale * jax.random.normal(k, shape)).astype(jnp.float32)

    x = nrm(ks[0], (B, S, D), 1.0)
    enc = nrm(ks[1], (B, Se, D), 1.0)

    params = (
        nrm(ks[2], (4, D, D)),                 # self-attn Wq/Wk/Wv/Wo (in, out)
        nrm(ks[3], (4, D)),                    # self-attn biases
        nrm(ks[4], (4, D, D)),                 # cross-attn Wq/Wk/Wv/Wo
        nrm(ks[5], (4, D)),                    # cross-attn biases
        nrm(ks[6], (D, F)),                    # FFN linear1 weight
        nrm(ks[7], (1, F)),                    # FFN linear1 bias
        nrm(ks[8], (F, D)),                    # FFN linear2 weight
        nrm(ks[9], (1, D)),                    # FFN linear2 bias
        jnp.ones((3, D), jnp.float32),         # LayerNorm gammas
        jnp.zeros((3, D), jnp.float32),        # LayerNorm betas
    )

    # weight re-packing is done ONCE, outside the forward path
    packed = prepack_decoder_params(params, num_heads=H, dtype=x.dtype)

    out = transformer_decoder_layer(x, enc, packed, num_heads=H)
    out = jax.block_until_ready(out)

    ref = _reference(x, enc, params, num_heads=H)
    assert out.shape == (B, S, D)
    err = float(jnp.max(jnp.abs(out - ref)))
    assert err < 2e-3, f"mismatch vs reference: max abs err {err}"

    print("KERNEL_OK")
</pallas_src>

<mosaic_0001>
module attributes {stable_mosaic.version = 11 : i64} {
  func.func @_decoder_layer_kernel(%arg0: i32, %arg1: i32, %arg2: memref<1x8x128xf32, #tpu.memory_space<vmem>>, %arg3: memref<1x8x128xf32, #tpu.memory_space<vmem>>, %arg4: memref<1x10x128xf32, #tpu.memory_space<vmem>>, %arg5: memref<128x32xf32, #tpu.memory_space<vmem>>, %arg6: memref<1x32xf32, #tpu.memory_space<vmem>>, %arg7: memref<128x64xf32, #tpu.memory_space<vmem>>, %arg8: memref<1x64xf32, #tpu.memory_space<vmem>>, %arg9: memref<2x16x128xf32, #tpu.memory_space<vmem>>, %arg10: memref<1x128xf32, #tpu.memory_space<vmem>>, %arg11: memref<128x32xf32, #tpu.memory_space<vmem>>, %arg12: memref<1x32xf32, #tpu.memory_space<vmem>>, %arg13: memref<128x64xf32, #tpu.memory_space<vmem>>, %arg14: memref<1x64xf32, #tpu.memory_space<vmem>>, %arg15: memref<2x16x128xf32, #tpu.memory_space<vmem>>, %arg16: memref<1x128xf32, #tpu.memory_space<vmem>>, %arg17: memref<128x128xf32, #tpu.memory_space<vmem>>, %arg18: memref<1x128xf32, #tpu.memory_space<vmem>>, %arg19: memref<128x128xf32, #tpu.memory_space<vmem>>, %arg20: memref<1x128xf32, #tpu.memory_space<vmem>>, %arg21: memref<3x128xf32, #tpu.memory_space<vmem>>, %arg22: memref<3x128xf32, #tpu.memory_space<vmem>>, %arg23: memref<1x8x128xf32, #tpu.memory_space<vmem>>) attributes {dimension_semantics = [#tpu.dimension_semantics<parallel>, #tpu.dimension_semantics<parallel>], iteration_bounds = array<i64: 2, 1>, scalar_prefetch = 0 : i64, scratch_operands = 0 : i64, tpu.core_type = #tpu.core_type<tc>, window_params = [{transform_indices = @transform_0, window_bounds = array<i64: 1, 8, 128>}, {transform_indices = @transform_1, window_bounds = array<i64: 1, 8, 128>}, {transform_indices = @transform_2, window_bounds = array<i64: 1, 10, 128>}, {pipeline_mode = #tpu.pipeline_mode<synchronous>, transform_indices = @transform_3, window_bounds = array<i64: 128, 32>}, {pipeline_mode = #tpu.pipeline_mode<synchronous>, transform_indices = @transform_4, window_bounds = array<i64: 1, 32>}, {pipeline_mode = #tpu.pipeline_mode<synchronous>, transform_indices = @transform_5, window_bounds = array<i64: 128, 64>}, {pipeline_mode = #tpu.pipeline_mode<synchronous>, transform_indices = @transform_6, window_bounds = array<i64: 1, 64>}, {pipeline_mode = #tpu.pipeline_mode<synchronous>, transform_indices = @transform_7, window_bounds = array<i64: 2, 16, 128>}, {pipeline_mode = #tpu.pipeline_mode<synchronous>, transform_indices = @transform_8, window_bounds = array<i64: 1, 128>}, {pipeline_mode = #tpu.pipeline_mode<synchronous>, transform_indices = @transform_9, window_bounds = array<i64: 128, 32>}, {pipeline_mode = #tpu.pipeline_mode<synchronous>, transform_indices = @transform_10, window_bounds = array<i64: 1, 32>}, {pipeline_mode = #tpu.pipeline_mode<synchronous>, transform_indices = @transform_11, window_bounds = array<i64: 128, 64>}, {pipeline_mode = #tpu.pipeline_mode<synchronous>, transform_indices = @transform_12, window_bounds = array<i64: 1, 64>}, {pipeline_mode = #tpu.pipeline_mode<synchronous>, transform_indices = @transform_13, window_bounds = array<i64: 2, 16, 128>}, {pipeline_mode = #tpu.pipeline_mode<synchronous>, transform_indices = @transform_14, window_bounds = array<i64: 1, 128>}, {pipeline_mode = #tpu.pipeline_mode<synchronous>, transform_indices = @transform_15, window_bounds = array<i64: 128, 128>}, {pipeline_mode = #tpu.pipeline_mode<synchronous>, transform_indices = @transform_16, window_bounds = array<i64: 1, 128>}, {pipeline_mode = #tpu.pipeline_mode<synchronous>, transform_indices = @transform_17, window_bounds = array<i64: 128, 128>}, {pipeline_mode = #tpu.pipeline_mode<synchronous>, transform_indices = @transform_18, window_bounds = array<i64: 1, 128>}, {pipeline_mode = #tpu.pipeline_mode<synchronous>, transform_indices = @transform_19, window_bounds = array<i64: 3, 128>}, {pipeline_mode = #tpu.pipeline_mode<synchronous>, transform_indices = @transform_20, window_bounds = array<i64: 3, 128>}, {transform_indices = @transform_21, window_bounds = array<i64: 1, 8, 128>}]} {
    %c0 = arith.constant 0 : index
    %c0_0 = arith.constant 0 : index
    %c0_1 = arith.constant 0 : index
    %0 = vector.load %arg2[%c0, %c0_0, %c0_1] : memref<1x8x128xf32, #tpu.memory_space<vmem>>, vector<1x8x128xf32>
    %1 = vector.shape_cast %0 : vector<1x8x128xf32> to vector<8x128xf32>
    %c0_2 = arith.constant 0 : index
    %c0_3 = arith.constant 0 : index
    %c0_4 = arith.constant 0 : index
    %2 = vector.load %arg3[%c0_2, %c0_3, %c0_4] : memref<1x8x128xf32, #tpu.memory_space<vmem>>, vector<1x8x128xf32>
    %3 = vector.shape_cast %2 : vector<1x8x128xf32> to vector<8x128xf32>
    %c0_5 = arith.constant 0 : index
    %c0_6 = arith.constant 0 : index
    %c0_7 = arith.constant 0 : index
    %4 = vector.load %arg4[%c0_5, %c0_6, %c0_7] : memref<1x10x128xf32, #tpu.memory_space<vmem>>, vector<1x10x128xf32>
    %5 = vector.shape_cast %4 : vector<1x10x128xf32> to vector<10x128xf32>
    %c8_i32 = arith.constant 8 : i32
    %6 = arith.muli %arg1, %c8_i32 : i32
    %c0_8 = arith.constant 0 : index
    %c0_9 = arith.constant 0 : index
    %7 = vector.load %arg5[%c0_8, %c0_9] : memref<128x32xf32, #tpu.memory_space<vmem>>, vector<128x32xf32>
    %cst = arith.constant dense<0.000000e+00> : vector<8x32xf32>
    %8 = tpu.matmul %1, %7, %cst {dimension_numbers = #tpu.dot_dimension_numbers<[1], [0], [0], [1], [0, 0, 1, 1], [], []>} : vector<8x128xf32>, vector<128x32xf32>, vector<8x32xf32> -> vector<8x32xf32>
    %c0_10 = arith.constant 0 : index
    %c0_11 = arith.constant 0 : index
    %9 = vector.load %arg6[%c0_10, %c0_11] : memref<1x32xf32, #tpu.memory_space<vmem>>, vector<1x32xf32>
    %10 = vector.broadcast %9 : vector<1x32xf32> to vector<8x32xf32>
    %11 = arith.addf %8, %10 : vector<8x32xf32>
    %c0_12 = arith.constant 0 : index
    %c0_13 = arith.constant 0 : index
    %12 = vector.load %arg7[%c0_12, %c0_13] : memref<128x64xf32, #tpu.memory_space<vmem>>, vector<128x64xf32>
    %cst_14 = arith.constant dense<0.000000e+00> : vector<8x64xf32>
    %13 = tpu.matmul %3, %12, %cst_14 {dimension_numbers = #tpu.dot_dimension_numbers<[1], [0], [0], [1], [0, 0, 1, 1], [], []>} : vector<8x128xf32>, vector<128x64xf32>, vector<8x64xf32> -> vector<8x64xf32>
    %c0_15 = arith.constant 0 : index
    %c0_16 = arith.constant 0 : index
    %14 = vector.load %arg8[%c0_15, %c0_16] : memref<1x64xf32, #tpu.memory_space<vmem>>, vector<1x64xf32>
    %15 = vector.broadcast %14 : vector<1x64xf32> to vector<8x64xf32>
    %16 = arith.addf %13, %15 : vector<8x64xf32>
    %c0_17 = arith.constant 0 : index
    %c0_18 = arith.constant 0 : index
    %c0_19 = arith.constant 0 : index
    %17 = vector.load %arg9[%c0_17, %c0_18, %c0_19] : memref<2x16x128xf32, #tpu.memory_space<vmem>>, vector<2x16x128xf32>
    %c0_20 = arith.constant 0 : index
    %c0_21 = arith.constant 0 : index
    %18 = vector.load %arg10[%c0_20, %c0_21] : memref<1x128xf32, #tpu.memory_space<vmem>>, vector<1x128xf32>
    %19 = vector.extract_strided_slice %11 {offsets = [0, 0], sizes = [8, 16], strides = [1, 1]} : vector<8x32xf32> to vector<8x16xf32>
    %20 = vector.extract_strided_slice %11 {offsets = [0, 16], sizes = [8, 16], strides = [1, 1]} : vector<8x32xf32> to vector<8x16xf32>
    %21 = vector.shape_cast %19 : vector<8x16xf32> to vector<1x8x16xf32>
    %22 = vector.shape_cast %20 : vector<8x16xf32> to vector<1x8x16xf32>
    %23 = tpu.concatenate %21, %22 in 0 : vector<1x8x16xf32>, vector<1x8x16xf32> -> vector<2x8x16xf32>
    %24 = vector.extract_strided_slice %16 {offsets = [0, 0], sizes = [8, 16], strides = [1, 1]} : vector<8x64xf32> to vector<8x16xf32>
    %25 = vector.extract_strided_slice %16 {offsets = [0, 16], sizes = [8, 16], strides = [1, 1]} : vector<8x64xf32> to vector<8x16xf32>
    %26 = vector.shape_cast %24 : vector<8x16xf32> to vector<1x8x16xf32>
    %27 = vector.shape_cast %25 : vector<8x16xf32> to vector<1x8x16xf32>
    %28 = tpu.concatenate %26, %27 in 0 : vector<1x8x16xf32>, vector<1x8x16xf32> -> vector<2x8x16xf32>
    %29 = vector.extract_strided_slice %16 {offsets = [0, 32], sizes = [8, 16], strides = [1, 1]} : vector<8x64xf32> to vector<8x16xf32>
    %30 = vector.extract_strided_slice %16 {offsets = [0, 48], sizes = [8, 16], strides = [1, 1]} : vector<8x64xf32> to vector<8x16xf32>
    %31 = vector.shape_cast %29 : vector<8x16xf32> to vector<1x8x16xf32>
    %32 = vector.shape_cast %30 : vector<8x16xf32> to vector<1x8x16xf32>
    %33 = tpu.concatenate %31, %32 in 0 : vector<1x8x16xf32>, vector<1x8x16xf32> -> vector<2x8x16xf32>
    "tpu.trace_start"() <{level = 10 : i32, message = "hqd,hkd->hqk"}> : () -> ()
    %cst_22 = arith.constant dense<0.000000e+00> : vector<2x8x8xf32>
    %34 = tpu.matmul %23, %28, %cst_22 {dimension_numbers = #tpu.dot_dimension_numbers<[2], [2], [1], [1], [0, 0, 0, 1, 1, 1], [0], [0]>} : vector<2x8x16xf32>, vector<2x8x16xf32>, vector<2x8x8xf32> -> vector<2x8x8xf32>
    "tpu.trace_stop"() : () -> ()
    %cst_23 = arith.constant 2.500000e-01 : f32
    %35 = vector.broadcast %cst_23 : f32 to vector<2x8x8xf32>
    %36 = arith.mulf %34, %35 : vector<2x8x8xf32>
    %37 = tpu.iota {dimensions = array<i32: 0>} : vector<8x8xi32>
    %38 = vector.broadcast %6 : i32 to vector<8x8xi32>
    %39 = arith.addi %37, %38 : vector<8x8xi32>
    %40 = tpu.iota {dimensions = array<i32: 1>} : vector<8x8xi32>
    %41 = arith.cmpi sgt, %40, %39 : vector<8x8xi32>
    %42 = vector.shape_cast %41 : vector<8x8xi1> to vector<1x8x8xi1>
    %cst_24 = arith.constant -1.000000e+30 : f32
    %43 = vector.shape_cast %42 : vector<1x8x8xi1> to vector<1x8x8xi1>
    %44 = vector.broadcast %43 : vector<1x8x8xi1> to vector<2x8x8xi1>
    %45 = vector.broadcast %cst_24 : f32 to vector<2x8x8xf32>
    %46 = arith.select %44, %45, %36 : vector<2x8x8xi1>, vector<2x8x8xf32>
    %cst_25 = arith.constant dense<0xFF800000> : vector<2x8xf32>
    %47 = vector.multi_reduction <maximumf>, %46, %cst_25 [2] : vector<2x8x8xf32> to vector<2x8xf32>
    %48 = vector.shape_cast %47 : vector<2x8xf32> to vector<2x8x1xf32>
    %49 = vector.broadcast %48 : vector<2x8x1xf32> to vector<2x8x8xf32>
    %50 = arith.subf %46, %49 : vector<2x8x8xf32>
    %51 = math.exp %50 : vector<2x8x8xf32>
    %cst_26 = arith.constant dense<0.000000e+00> : vector<2x8xf32>
    %52 = vector.multi_reduction <add>, %51, %cst_26 [2] : vector<2x8x8xf32> to vector<2x8xf32>
    %53 = vector.shape_cast %52 : vector<2x8xf32> to vector<2x8x1xf32>
    %54 = tpu.reciprocal %53 {approx = true} : vector<2x8x1xf32> -> vector<2x8x1xf32>
    %55 = arith.mulf %53, %54 : vector<2x8x1xf32>
    %cst_27 = arith.constant 2.000000e+00 : f32
    %56 = vector.broadcast %cst_27 : f32 to vector<2x8x1xf32>
    %57 = arith.subf %56, %55 : vector<2x8x1xf32>
    %58 = arith.mulf %54, %57 : vector<2x8x1xf32>
    "tpu.trace_start"() <{level = 10 : i32, message = "hqk,hkd->hqd"}> : () -> ()
    %cst_28 = arith.constant dense<0.000000e+00> : vector<2x8x16xf32>
    %59 = tpu.matmul %51, %33, %cst_28 {dimension_numbers = #tpu.dot_dimension_numbers<[2], [1], [1], [2], [0, 0, 0, 1, 1, 2], [0], [0]>} : vector<2x8x8xf32>, vector<2x8x16xf32>, vector<2x8x16xf32> -> vector<2x8x16xf32>
    "tpu.trace_stop"() : () -> ()
    %60 = vector.broadcast %58 : vector<2x8x1xf32> to vector<2x8x16xf32>
    %61 = arith.mulf %59, %60 : vector<2x8x16xf32>
    "tpu.trace_start"() <{level = 10 : i32, message = "hqd,hdD->hqD"}> : () -> ()
    %cst_29 = arith.constant dense<0.000000e+00> : vector<2x8x128xf32>
    %62 = tpu.matmul %61, %17, %cst_29 {dimension_numbers = #tpu.dot_dimension_numbers<[2], [1], [1], [2], [0, 0, 0, 1, 1, 2], [0], [0]>} : vector<2x8x16xf32>, vector<2x16x128xf32>, vector<2x8x128xf32> -> vector<2x8x128xf32>
    "tpu.trace_stop"() : () -> ()
    %cst_30 = arith.constant dense<0.000000e+00> : vector<8x128xf32>
    %63 = vector.multi_reduction <add>, %62, %cst_30 [0] : vector<2x8x128xf32> to vector<8x128xf32>
    %64 = vector.broadcast %18 : vector<1x128xf32> to vector<8x128xf32>
    %65 = arith.addf %63, %64 : vector<8x128xf32>
    %66 = arith.addf %1, %65 : vector<8x128xf32>
    %c0_31 = arith.constant 0 : index
    %c0_32 = arith.constant 0 : index
    %67 = vector.load %arg21[%c0_31, %c0_32] : memref<3x128xf32, #tpu.memory_space<vmem>>, vector<1x128xf32>
    %c0_33 = arith.constant 0 : index
    %c0_34 = arith.constant 0 : index
    %68 = vector.load %arg22[%c0_33, %c0_34] : memref<3x128xf32, #tpu.memory_space<vmem>>, vector<1x128xf32>
    %cst_35 = arith.constant dense<0.000000e+00> : vector<8xf32>
    %69 = vector.multi_reduction <add>, %66, %cst_35 [1] : vector<8x128xf32> to vector<8xf32>
    %70 = vector.shape_cast %69 : vector<8xf32> to vector<8x1xf32>
    %cst_36 = arith.constant 3.125000e-02 : f32
    %71 = vector.broadcast %cst_36 : f32 to vector<8x1xf32>
    %72 = arith.mulf %70, %71 : vector<8x1xf32>
    %73 = vector.broadcast %72 : vector<8x1xf32> to vector<8x128xf32>
    %74 = arith.subf %66, %73 : vector<8x128xf32>
    %75 = arith.mulf %74, %74 : vector<8x128xf32>
    %cst_37 = arith.constant dense<0.000000e+00> : vector<8xf32>
    %76 = vector.multi_reduction <add>, %75, %cst_37 [1] : vector<8x128xf32> to vector<8xf32>
    %77 = vector.shape_cast %76 : vector<8xf32> to vector<8x1xf32>
    %cst_38 = arith.constant 9.600000e+01 : f32
    %78 = vector.broadcast %cst_38 : f32 to vector<8x1xf32>
    %79 = arith.mulf %78, %72 : vector<8x1xf32>
    %80 = arith.mulf %79, %72 : vector<8x1xf32>
    %81 = arith.subf %77, %80 : vector<8x1xf32>
    %cst_39 = arith.constant 3.125000e-02 : f32
    %82 = vector.broadcast %cst_39 : f32 to vector<8x1xf32>
    %83 = arith.mulf %81, %82 : vector<8x1xf32>
    %cst_40 = arith.constant 0.000000e+00 : f32
    %84 = vector.broadcast %cst_40 : f32 to vector<8x1xf32>
    %85 = arith.maximumf %83, %84 : vector<8x1xf32>
    %cst_41 = arith.constant 9.99999974E-6 : f32
    %86 = vector.broadcast %cst_41 : f32 to vector<8x1xf32>
    %87 = arith.addf %85, %86 : vector<8x1xf32>
    %88 = math.rsqrt %87 : vector<8x1xf32>
    %89 = vector.broadcast %88 : vector<8x1xf32> to vector<8x128xf32>
    %90 = arith.mulf %74, %89 : vector<8x128xf32>
    %91 = vector.broadcast %67 : vector<1x128xf32> to vector<8x128xf32>
    %92 = arith.mulf %90, %91 : vector<8x128xf32>
    %93 = vector.broadcast %68 : vector<1x128xf32> to vector<8x128xf32>
    %94 = arith.addf %92, %93 : vector<8x128xf32>
    %c0_42 = arith.constant 0 : index
    %c0_43 = arith.constant 0 : index
    %95 = vector.load %arg11[%c0_42, %c0_43] : memref<128x32xf32, #tpu.memory_space<vmem>>, vector<128x32xf32>
    %cst_44 = arith.constant dense<0.000000e+00> : vector<8x32xf32>
    %96 = tpu.matmul %94, %95, %cst_44 {dimension_numbers = #tpu.dot_dimension_numbers<[1], [0], [0], [1], [0, 0, 1, 1], [], []>} : vector<8x128xf32>, vector<128x32xf32>, vector<8x32xf32> -> vector<8x32xf32>
    %c0_45 = arith.constant 0 : index
    %c0_46 = arith.constant 0 : index
    %97 = vector.load %arg12[%c0_45, %c0_46] : memref<1x32xf32, #tpu.memory_space<vmem>>, vector<1x32xf32>
    %98 = vector.broadcast %97 : vector<1x32xf32> to vector<8x32xf32>
    %99 = arith.addf %96, %98 : vector<8x32xf32>
    %c0_47 = arith.constant 0 : index
    %c0_48 = arith.constant 0 : index
    %100 = vector.load %arg13[%c0_47, %c0_48] : memref<128x64xf32, #tpu.memory_space<vmem>>, vector<128x64xf32>
    %cst_49 = arith.constant dense<0.000000e+00> : vector<10x64xf32>
    %101 = tpu.matmul %5, %100, %cst_49 {dimension_numbers = #tpu.dot_dimension_numbers<[1], [0], [0], [1], [0, 0, 1, 1], [], []>} : vector<10x128xf32>, vector<128x64xf32>, vector<10x64xf32> -> vector<10x64xf32>
    %c0_50 = arith.constant 0 : index
    %c0_51 = arith.constant 0 : index
    %102 = vector.load %arg14[%c0_50, %c0_51] : memref<1x64xf32, #tpu.memory_space<vmem>>, vector<1x64xf32>
    %103 = vector.broadcast %102 : vector<1x64xf32> to vector<10x64xf32>
    %104 = arith.addf %101, %103 : vector<10x64xf32>
    %c0_52 = arith.constant 0 : index
    %c0_53 = arith.constant 0 : index
    %c0_54 = arith.constant 0 : index
    %105 = vector.load %arg15[%c0_52, %c0_53, %c0_54] : memref<2x16x128xf32, #tpu.memory_space<vmem>>, vector<2x16x128xf32>
    %c0_55 = arith.constant 0 : index
    %c0_56 = arith.constant 0 : index
    %106 = vector.load %arg16[%c0_55, %c0_56] : memref<1x128xf32, #tpu.memory_space<vmem>>, vector<1x128xf32>
    %107 = vector.extract_strided_slice %99 {offsets = [0, 0], sizes = [8, 16], strides = [1, 1]} : vector<8x32xf32> to vector<8x16xf32>
    %108 = vector.extract_strided_slice %99 {offsets = [0, 16], sizes = [8, 16], strides = [1, 1]} : vector<8x32xf32> to vector<8x16xf32>
    %109 = vector.shape_cast %107 : vector<8x16xf32> to vector<1x8x16xf32>
    %110 = vector.shape_cast %108 : vector<8x16xf32> to vector<1x8x16xf32>
    %111 = tpu.concatenate %109, %110 in 0 : vector<1x8x16xf32>, vector<1x8x16xf32> -> vector<2x8x16xf32>
    %112 = vector.extract_strided_slice %104 {offsets = [0, 0], sizes = [10, 16], strides = [1, 1]} : vector<10x64xf32> to vector<10x16xf32>
    %113 = vector.extract_strided_slice %104 {offsets = [0, 16], sizes = [10, 16], strides = [1, 1]} : vector<10x64xf32> to vector<10x16xf32>
    %114 = vector.shape_cast %112 : vector<10x16xf32> to vector<1x10x16xf32>
    %115 = vector.shape_cast %113 : vector<10x16xf32> to vector<1x10x16xf32>
    %116 = tpu.concatenate %114, %115 in 0 : vector<1x10x16xf32>, vector<1x10x16xf32> -> vector<2x10x16xf32>
    %117 = vector.extract_strided_slice %104 {offsets = [0, 32], sizes = [10, 16], strides = [1, 1]} : vector<10x64xf32> to vector<10x16xf32>
    %118 = vector.extract_strided_slice %104 {offsets = [0, 48], sizes = [10, 16], strides = [1, 1]} : vector<10x64xf32> to vector<10x16xf32>
    %119 = vector.shape_cast %117 : vector<10x16xf32> to vector<1x10x16xf32>
    %120 = vector.shape_cast %118 : vector<10x16xf32> to vector<1x10x16xf32>
    %121 = tpu.concatenate %119, %120 in 0 : vector<1x10x16xf32>, vector<1x10x16xf32> -> vector<2x10x16xf32>
    "tpu.trace_start"() <{level = 10 : i32, message = "hqd,hkd->hqk"}> : () -> ()
    %cst_57 = arith.constant dense<0.000000e+00> : vector<2x8x10xf32>
    %122 = tpu.matmul %111, %116, %cst_57 {dimension_numbers = #tpu.dot_dimension_numbers<[2], [2], [1], [1], [0, 0, 0, 1, 1, 1], [0], [0]>} : vector<2x8x16xf32>, vector<2x10x16xf32>, vector<2x8x10xf32> -> vector<2x8x10xf32>
    "tpu.trace_stop"() : () -> ()
    %cst_58 = arith.constant 2.500000e-01 : f32
    %123 = vector.broadcast %cst_58 : f32 to vector<2x8x10xf32>
    %124 = arith.mulf %122, %123 : vector<2x8x10xf32>
    %cst_59 = arith.constant dense<0xFF800000> : vector<2x8xf32>
    %125 = vector.multi_reduction <maximumf>, %124, %cst_59 [2] : vector<2x8x10xf32> to vector<2x8xf32>
    %126 = vector.shape_cast %125 : vector<2x8xf32> to vector<2x8x1xf32>
    %127 = vector.broadcast %126 : vector<2x8x1xf32> to vector<2x8x10xf32>
    %128 = arith.subf %124, %127 : vector<2x8x10xf32>
    %129 = math.exp %128 : vector<2x8x10xf32>
    %cst_60 = arith.constant dense<0.000000e+00> : vector<2x8xf32>
    %130 = vector.multi_reduction <add>, %129, %cst_60 [2] : vector<2x8x10xf32> to vector<2x8xf32>
    %131 = vector.shape_cast %130 : vector<2x8xf32> to vector<2x8x1xf32>
    %132 = tpu.reciprocal %131 {approx = true} : vector<2x8x1xf32> -> vector<2x8x1xf32>
    %133 = arith.mulf %131, %132 : vector<2x8x1xf32>
    %cst_61 = arith.constant 2.000000e+00 : f32
    %134 = vector.broadcast %cst_61 : f32 to vector<2x8x1xf32>
    %135 = arith.subf %134, %133 : vector<2x8x1xf32>
    %136 = arith.mulf %132, %135 : vector<2x8x1xf32>
    "tpu.trace_start"() <{level = 10 : i32, message = "hqk,hkd->hqd"}> : () -> ()
    %cst_62 = arith.constant dense<0.000000e+00> : vector<2x8x16xf32>
    %137 = tpu.matmul %129, %121, %cst_62 {dimension_numbers = #tpu.dot_dimension_numbers<[2], [1], [1], [2], [0, 0, 0, 1, 1, 2], [0], [0]>} : vector<2x8x10xf32>, vector<2x10x16xf32>, vector<2x8x16xf32> -> vector<2x8x16xf32>
    "tpu.trace_stop"() : () -> ()
    %138 = vector.broadcast %136 : vector<2x8x1xf32> to vector<2x8x16xf32>
    %139 = arith.mulf %137, %138 : vector<2x8x16xf32>
    "tpu.trace_start"() <{level = 10 : i32, message = "hqd,hdD->hqD"}> : () -> ()
    %cst_63 = arith.constant dense<0.000000e+00> : vector<2x8x128xf32>
    %140 = tpu.matmul %139, %105, %cst_63 {dimension_numbers = #tpu.dot_dimension_numbers<[2], [1], [1], [2], [0, 0, 0, 1, 1, 2], [0], [0]>} : vector<2x8x16xf32>, vector<2x16x128xf32>, vector<2x8x128xf32> -> vector<2x8x128xf32>
    "tpu.trace_stop"() : () -> ()
    %cst_64 = arith.constant dense<0.000000e+00> : vector<8x128xf32>
    %141 = vector.multi_reduction <add>, %140, %cst_64 [0] : vector<2x8x128xf32> to vector<8x128xf32>
    %142 = vector.broadcast %106 : vector<1x128xf32> to vector<8x128xf32>
    %143 = arith.addf %141, %142 : vector<8x128xf32>
    %144 = arith.addf %94, %143 : vector<8x128xf32>
    %c1 = arith.constant 1 : index
    %c0_65 = arith.constant 0 : index
    %145 = vector.load %arg21[%c1, %c0_65] : memref<3x128xf32, #tpu.memory_space<vmem>>, vector<1x128xf32>
    %c1_66 = arith.constant 1 : index
    %c0_67 = arith.constant 0 : index
    %146 = vector.load %arg22[%c1_66, %c0_67] : memref<3x128xf32, #tpu.memory_space<vmem>>, vector<1x128xf32>
    %cst_68 = arith.constant dense<0.000000e+00> : vector<8xf32>
    %147 = vector.multi_reduction <add>, %144, %cst_68 [1] : vector<8x128xf32> to vector<8xf32>
    %148 = vector.shape_cast %147 : vector<8xf32> to vector<8x1xf32>
    %cst_69 = arith.constant 3.125000e-02 : f32
    %149 = vector.broadcast %cst_69 : f32 to vector<8x1xf32>
    %150 = arith.mulf %148, %149 : vector<8x1xf32>
    %151 = vector.broadcast %150 : vector<8x1xf32> to vector<8x128xf32>
    %152 = arith.subf %144, %151 : vector<8x128xf32>
    %153 = arith.mulf %152, %152 : vector<8x128xf32>
    %cst_70 = arith.constant dense<0.000000e+00> : vector<8xf32>
    %154 = vector.multi_reduction <add>, %153, %cst_70 [1] : vector<8x128xf32> to vector<8xf32>
    %155 = vector.shape_cast %154 : vector<8xf32> to vector<8x1xf32>
    %cst_71 = arith.constant 9.600000e+01 : f32
    %156 = vector.broadcast %cst_71 : f32 to vector<8x1xf32>
    %157 = arith.mulf %156, %150 : vector<8x1xf32>
    %158 = arith.mulf %157, %150 : vector<8x1xf32>
    %159 = arith.subf %155, %158 : vector<8x1xf32>
    %cst_72 = arith.constant 3.125000e-02 : f32
    %160 = vector.broadcast %cst_72 : f32 to vector<8x1xf32>
    %161 = arith.mulf %159, %160 : vector<8x1xf32>
    %cst_73 = arith.constant 0.000000e+00 : f32
    %162 = vector.broadcast %cst_73 : f32 to vector<8x1xf32>
    %163 = arith.maximumf %161, %162 : vector<8x1xf32>
    %cst_74 = arith.constant 9.99999974E-6 : f32
    %164 = vector.broadcast %cst_74 : f32 to vector<8x1xf32>
    %165 = arith.addf %163, %164 : vector<8x1xf32>
    %166 = math.rsqrt %165 : vector<8x1xf32>
    %167 = vector.broadcast %166 : vector<8x1xf32> to vector<8x128xf32>
    %168 = arith.mulf %152, %167 : vector<8x128xf32>
    %169 = vector.broadcast %145 : vector<1x128xf32> to vector<8x128xf32>
    %170 = arith.mulf %168, %169 : vector<8x128xf32>
    %171 = vector.broadcast %146 : vector<1x128xf32> to vector<8x128xf32>
    %172 = arith.addf %170, %171 : vector<8x128xf32>
    %c0_75 = arith.constant 0 : index
    %c0_76 = arith.constant 0 : index
    %173 = vector.load %arg17[%c0_75, %c0_76] : memref<128x128xf32, #tpu.memory_space<vmem>>, vector<128x128xf32>
    %cst_77 = arith.constant dense<0.000000e+00> : vector<8x128xf32>
    %174 = tpu.matmul %172, %173, %cst_77 {dimension_numbers = #tpu.dot_dimension_numbers<[1], [0], [0], [1], [0, 0, 1, 1], [], []>} : vector<8x128xf32>, vector<128x128xf32>, vector<8x128xf32> -> vector<8x128xf32>
    %c0_78 = arith.constant 0 : index
    %c0_79 = arith.constant 0 : index
    %175 = vector.load %arg18[%c0_78, %c0_79] : memref<1x128xf32, #tpu.memory_space<vmem>>, vector<1x128xf32>
    %176 = vector.broadcast %175 : vector<1x128xf32> to vector<8x128xf32>
    %177 = arith.addf %174, %176 : vector<8x128xf32>
    %cst_80 = arith.constant 0.000000e+00 : f32
    %178 = vector.broadcast %cst_80 : f32 to vector<8x128xf32>
    %179 = arith.maximumf %177, %178 : vector<8x128xf32>
    %c0_81 = arith.constant 0 : index
    %c0_82 = arith.constant 0 : index
    %180 = vector.load %arg19[%c0_81, %c0_82] : memref<128x128xf32, #tpu.memory_space<vmem>>, vector<128x128xf32>
    %cst_83 = arith.constant dense<0.000000e+00> : vector<8x128xf32>
    %181 = tpu.matmul %179, %180, %cst_83 {dimension_numbers = #tpu.dot_dimension_numbers<[1], [0], [0], [1], [0, 0, 1, 1], [], []>} : vector<8x128xf32>, vector<128x128xf32>, vector<8x128xf32> -> vector<8x128xf32>
    %c0_84 = arith.constant 0 : index
    %c0_85 = arith.constant 0 : index
    %182 = vector.load %arg20[%c0_84, %c0_85] : memref<1x128xf32, #tpu.memory_space<vmem>>, vector<1x128xf32>
    %183 = vector.broadcast %182 : vector<1x128xf32> to vector<8x128xf32>
    %184 = arith.addf %181, %183 : vector<8x128xf32>
    %185 = arith.addf %172, %184 : vector<8x128xf32>
    %c2 = arith.constant 2 : index
    %c0_86 = arith.constant 0 : index
    %186 = vector.load %arg21[%c2, %c0_86] : memref<3x128xf32, #tpu.memory_space<vmem>>, vector<1x128xf32>
    %c2_87 = arith.constant 2 : index
    %c0_88 = arith.constant 0 : index
    %187 = vector.load %arg22[%c2_87, %c0_88] : memref<3x128xf32, #tpu.memory_space<vmem>>, vector<1x128xf32>
    %cst_89 = arith.constant dense<0.000000e+00> : vector<8xf32>
    %188 = vector.multi_reduction <add>, %185, %cst_89 [1] : vector<8x128xf32> to vector<8xf32>
    %189 = vector.shape_cast %188 : vector<8xf32> to vector<8x1xf32>
    %cst_90 = arith.constant 3.125000e-02 : f32
    %190 = vector.broadcast %cst_90 : f32 to vector<8x1xf32>
    %191 = arith.mulf %189, %190 : vector<8x1xf32>
    %192 = vector.broadcast %191 : vector<8x1xf32> to vector<8x128xf32>
    %193 = arith.subf %185, %192 : vector<8x128xf32>
    %194 = arith.mulf %193, %193 : vector<8x128xf32>
    %cst_91 = arith.constant dense<0.000000e+00> : vector<8xf32>
    %195 = vector.multi_reduction <add>, %194, %cst_91 [1] : vector<8x128xf32> to vector<8xf32>
    %196 = vector.shape_cast %195 : vector<8xf32> to vector<8x1xf32>
    %cst_92 = arith.constant 9.600000e+01 : f32
    %197 = vector.broadcast %cst_92 : f32 to vector<8x1xf32>
    %198 = arith.mulf %197, %191 : vector<8x1xf32>
    %199 = arith.mulf %198, %191 : vector<8x1xf32>
    %200 = arith.subf %196, %199 : vector<8x1xf32>
    %cst_93 = arith.constant 3.125000e-02 : f32
    %201 = vector.broadcast %cst_93 : f32 to vector<8x1xf32>
    %202 = arith.mulf %200, %201 : vector<8x1xf32>
    %cst_94 = arith.constant 0.000000e+00 : f32
    %203 = vector.broadcast %cst_94 : f32 to vector<8x1xf32>
    %204 = arith.maximumf %202, %203 : vector<8x1xf32>
    %cst_95 = arith.constant 9.99999974E-6 : f32
    %205 = vector.broadcast %cst_95 : f32 to vector<8x1xf32>
    %206 = arith.addf %204, %205 : vector<8x1xf32>
    %207 = math.rsqrt %206 : vector<8x1xf32>
    %208 = vector.broadcast %207 : vector<8x1xf32> to vector<8x128xf32>
    %209 = arith.mulf %193, %208 : vector<8x128xf32>
    %210 = vector.broadcast %186 : vector<1x128xf32> to vector<8x128xf32>
    %211 = arith.mulf %209, %210 : vector<8x128xf32>
    %212 = vector.broadcast %187 : vector<1x128xf32> to vector<8x128xf32>
    %213 = arith.addf %211, %212 : vector<8x128xf32>
    %c0_96 = arith.constant 0 : index
    %c0_97 = arith.constant 0 : index
    %c0_98 = arith.constant 0 : index
    %214 = vector.load %arg23[%c0_96, %c0_97, %c0_98] : memref<1x8x128xf32, #tpu.memory_space<vmem>>, vector<1x8x128xf32>
    %215 = vector.shape_cast %214 : vector<1x8x128xf32> to vector<8x128xf32>
    %216 = vector.shape_cast %213 : vector<8x128xf32> to vector<1x8x128xf32>
    tpu.vector_store %arg23[%c0_96, %c0_97, %c0_98], %216 {strides = array<i32>} : memref<1x8x128xf32, #tpu.memory_space<vmem>>, vector<1x8x128xf32>,
    return
  }
  func.func @transform_0(%arg0: i32, %arg1: i32) -> (i32, i32, i32) {
    %c0_i32 = arith.constant 0 : i32
    %c0_i32_0 = arith.constant 0 : i32
    return %arg0, %arg1, %c0_i32 : i32, i32, i32
  }
  func.func @transform_1(%arg0: i32, %arg1: i32) -> (i32, i32, i32) {
    %c0_i32 = arith.constant 0 : i32
    %c0_i32_0 = arith.constant 0 : i32
    %c0_i32_1 = arith.constant 0 : i32
    return %arg0, %c0_i32, %c0_i32_0 : i32, i32, i32
  }
  func.func @transform_2(%arg0: i32, %arg1: i32) -> (i32, i32, i32) {
    %c0_i32 = arith.constant 0 : i32
    %c0_i32_0 = arith.constant 0 : i32
    %c0_i32_1 = arith.constant 0 : i32
    return %arg0, %c0_i32, %c0_i32_0 : i32, i32, i32
  }
  func.func @transform_3(%arg0: i32, %arg1: i32) -> (i32, i32) {
    %c0_i32 = arith.constant 0 : i32
    %c0_i32_0 = arith.constant 0 : i32
    %c0_i32_1 = arith.constant 0 : i32
    return %c0_i32, %c0_i32_0 : i32, i32
  }
  func.func @transform_4(%arg0: i32, %arg1: i32) -> (i32, i32) {
    %c0_i32 = arith.constant 0 : i32
    %c0_i32_0 = arith.constant 0 : i32
    %c0_i32_1 = arith.constant 0 : i32
    return %c0_i32, %c0_i32_0 : i32, i32
  }
  func.func @transform_5(%arg0: i32, %arg1: i32) -> (i32, i32) {
    %c0_i32 = arith.constant 0 : i32
    %c0_i32_0 = arith.constant 0 : i32
    %c0_i32_1 = arith.constant 0 : i32
    return %c0_i32, %c0_i32_0 : i32, i32
  }
  func.func @transform_6(%arg0: i32, %arg1: i32) -> (i32, i32) {
    %c0_i32 = arith.constant 0 : i32
    %c0_i32_0 = arith.constant 0 : i32
    %c0_i32_1 = arith.constant 0 : i32
    return %c0_i32, %c0_i32_0 : i32, i32
  }
  func.func @transform_7(%arg0: i32, %arg1: i32) -> (i32, i32, i32) {
    %c0_i32 = arith.constant 0 : i32
    %c0_i32_0 = arith.constant 0 : i32
    %c0_i32_1 = arith.constant 0 : i32
    %c0_i32_2 = arith.constant 0 : i32
    return %c0_i32, %c0_i32_0, %c0_i32_1 : i32, i32, i32
  }
  func.func @transform_8(%arg0: i32, %arg1: i32) -> (i32, i32) {
    %c0_i32 = arith.constant 0 : i32
    %c0_i32_0 = arith.constant 0 : i32
    %c0_i32_1 = arith.constant 0 : i32
    return %c0_i32, %c0_i32_0 : i32, i32
  }
  func.func @transform_9(%arg0: i32, %arg1: i32) -> (i32, i32) {
    %c0_i32 = arith.constant 0 : i32
    %c0_i32_0 = arith.constant 0 : i32
    %c0_i32_1 = arith.constant 0 : i32
    return %c0_i32, %c0_i32_0 : i32, i32
  }
  func.func @transform_10(%arg0: i32, %arg1: i32) -> (i32, i32) {
    %c0_i32 = arith.constant 0 : i32
    %c0_i32_0 = arith.constant 0 : i32
    %c0_i32_1 = arith.constant 0 : i32
    return %c0_i32, %c0_i32_0 : i32, i32
  }
  func.func @transform_11(%arg0: i32, %arg1: i32) -> (i32, i32) {
    %c0_i32 = arith.constant 0 : i32
    %c0_i32_0 = arith.constant 0 : i32
    %c0_i32_1 = arith.constant 0 : i32
    return %c0_i32, %c0_i32_0 : i32, i32
  }
  func.func @transform_12(%arg0: i32, %arg1: i32) -> (i32, i32) {
    %c0_i32 = arith.constant 0 : i32
    %c0_i32_0 = arith.constant 0 : i32
    %c0_i32_1 = arith.constant 0 : i32
    return %c0_i32, %c0_i32_0 : i32, i32
  }
  func.func @transform_13(%arg0: i32, %arg1: i32) -> (i32, i32, i32) {
    %c0_i32 = arith.constant 0 : i32
    %c0_i32_0 = arith.constant 0 : i32
    %c0_i32_1 = arith.constant 0 : i32
    %c0_i32_2 = arith.constant 0 : i32
    return %c0_i32, %c0_i32_0, %c0_i32_1 : i32, i32, i32
  }
  func.func @transform_14(%arg0: i32, %arg1: i32) -> (i32, i32) {
    %c0_i32 = arith.constant 0 : i32
    %c0_i32_0 = arith.constant 0 : i32
    %c0_i32_1 = arith.constant 0 : i32
    return %c0_i32, %c0_i32_0 : i32, i32
  }
  func.func @transform_15(%arg0: i32, %arg1: i32) -> (i32, i32) {
    %c0_i32 = arith.constant 0 : i32
    %c0_i32_0 = arith.constant 0 : i32
    %c0_i32_1 = arith.constant 0 : i32
    return %c0_i32, %c0_i32_0 : i32, i32
  }
  func.func @transform_16(%arg0: i32, %arg1: i32) -> (i32, i32) {
    %c0_i32 = arith.constant 0 : i32
    %c0_i32_0 = arith.constant 0 : i32
    %c0_i32_1 = arith.constant 0 : i32
    return %c0_i32, %c0_i32_0 : i32, i32
  }
  func.func @transform_17(%arg0: i32, %arg1: i32) -> (i32, i32) {
    %c0_i32 = arith.constant 0 : i32
    %c0_i32_0 = arith.constant 0 : i32
    %c0_i32_1 = arith.constant 0 : i32
    return %c0_i32, %c0_i32_0 : i32, i32
  }
  func.func @transform_18(%arg0: i32, %arg1: i32) -> (i32, i32) {
    %c0_i32 = arith.constant 0 : i32
    %c0_i32_0 = arith.constant 0 : i32
    %c0_i32_1 = arith.constant 0 : i32
    return %c0_i32, %c0_i32_0 : i32, i32
  }
  func.func @transform_19(%arg0: i32, %arg1: i32) -> (i32, i32) {
    %c0_i32 = arith.constant 0 : i32
    %c0_i32_0 = arith.constant 0 : i32
    %c0_i32_1 = arith.constant 0 : i32
    return %c0_i32, %c0_i32_0 : i32, i32
  }
  func.func @transform_20(%arg0: i32, %arg1: i32) -> (i32, i32) {
    %c0_i32 = arith.constant 0 : i32
    %c0_i32_0 = arith.constant 0 : i32
    %c0_i32_1 = arith.constant 0 : i32
    return %c0_i32, %c0_i32_0 : i32, i32
  }
  func.func @transform_21(%arg0: i32, %arg1: i32) -> (i32, i32, i32) {
    %c0_i32 = arith.constant 0 : i32
    %c0_i32_0 = arith.constant 0 : i32
    return %arg0, %arg1, %c0_i32 : i32, i32, i32
  }
}

</mosaic_0001>

<llo_original>
// kernel: tpu_custom_call.1
$region0: #{tpu_custom_call.1}
  #allocation0 [shape = 'u32[]', space=smem, size = 0x4, offset = 0x4, fixed_abs, tag = 'smem constant byte address 0x4 - core index']
  #allocation1 [shape = 'u32[144,128]{1,0:T(1,128)}', space=vmem, size = 0x12000, scoped, tag = 'internal scratch']
  %s0 = inlined_call_operand.vmem [shape: f32[2,8,128], index: 0, kind: input, shape index: {}]
  %s1 = inlined_call_operand.vmem [shape: f32[2,8,128], index: 1, kind: input, shape index: {}]
  %s2 = inlined_call_operand.vmem [shape: f32[2,10,128], index: 2, kind: input, shape index: {}]
  %s3 = inlined_call_operand.vmem [shape: f32[128,32], index: 3, kind: input, shape index: {}]
  %s4 = inlined_call_operand.vmem [shape: f32[1,32], index: 4, kind: input, shape index: {}]
  %s5 = inlined_call_operand.vmem [shape: f32[128,64], index: 5, kind: input, shape index: {}]
  %s6 = inlined_call_operand.vmem [shape: f32[1,64], index: 6, kind: input, shape index: {}]
  %s7 = inlined_call_operand.vmem [shape: f32[2,16,128], index: 7, kind: input, shape index: {}]
  %s8 = inlined_call_operand.vmem [shape: f32[1,128], index: 8, kind: input, shape index: {}]
  %s9 = inlined_call_operand.vmem [shape: f32[128,32], index: 9, kind: input, shape index: {}]
  %s10 = inlined_call_operand.vmem [shape: f32[1,32], index: 10, kind: input, shape index: {}]
  %s11 = inlined_call_operand.vmem [shape: f32[128,64], index: 11, kind: input, shape index: {}]
  %s12 = inlined_call_operand.vmem [shape: f32[1,64], index: 12, kind: input, shape index: {}]
  %s13 = inlined_call_operand.vmem [shape: f32[2,16,128], index: 13, kind: input, shape index: {}]
  %s14 = inlined_call_operand.vmem [shape: f32[1,128], index: 14, kind: input, shape index: {}]
  %s15 = inlined_call_operand.vmem [shape: f32[128,128], index: 15, kind: input, shape index: {}]
  %s16 = inlined_call_operand.vmem [shape: f32[1,128], index: 16, kind: input, shape index: {}]
  %s17 = inlined_call_operand.vmem [shape: f32[128,128], index: 17, kind: input, shape index: {}]
  %s18 = inlined_call_operand.vmem [shape: f32[1,128], index: 18, kind: input, shape index: {}]
  %s19 = inlined_call_operand.vmem [shape: f32[3,128], index: 19, kind: input, shape index: {}]
  %s20 = inlined_call_operand.vmem [shape: f32[3,128], index: 20, kind: input, shape index: {}]
  %s21 = inlined_call_operand.hbm [shape: f32[2,8,128], index: 21, kind: output, shape index: {}]
  %s22 = sld [smem:[#allocation0]]
  $region117: #{tpu_custom_call.1} parent=0
    _
  %s24 = ssub.s32 1, %s22
  %s25 = scalar_select 0, %s24, %s22
  $region1: #{tpu_custom_call.1} parent=0
    #allocation2 [shape = 'u8[8192]{0}', space=vmem, size = 0x2000, scoped, tag = 'output window, operand 0']
    #allocation3 [shape = 's32[2]{0}', space=sflag, size = 0x8, scoped, tag = 'scoped memory for tpu_custom_call.1']
    %26 = vsyncpa [#allocation3], 0
    %s27 = scalar_lea.sflag [#allocation3], 1
    %28 = vsyncpa %s27, 0
    loop: start=0, step=1, limit=4
    $region2: #{tpu_custom_call.1} parent=1 // loop_pre_header
      _
    $region3: #{tpu_custom_call.1} parent=1 // loop_header
      %s30 = sphi 0, %s34
      %p31 = scmp.ge.s32.totalorder %s30, 4
      %s37 = sphi 0, %s49
      %s38 = sphi 0, %s45
      %s39 = sphi 0, %s37
      %s40 = sphi 0, %s38
      %s41 = sphi 0, %s39
      %s42 = sphi 0, %s40
      %s54 = sphi 0, %s56
      %s57 = sphi 0, %s54
      %s58 = sphi 0, %s57
      %s74 = sphi 0, %s58
      %s80 = sphi 0, %s82
      %s83 = sphi 0, %s80
      %s84 = sphi 0, %s83
      %s100 = sphi 0, %s84
      %s106 = sphi 0, %s108
      %s109 = sphi 0, %s106
      %s110 = sphi 0, %s109
      %s126 = sphi 0, %s110
      %s130 = sphi 0, %s130
      %s132 = sphi 0, %s130
      %s133 = sphi 0, %s132
      %s147 = sphi 0, %s133
      %s151 = sphi 0, %s151
      %s153 = sphi 0, %s151
      %s154 = sphi 0, %s153
      %s168 = sphi 0, %s154
      %s172 = sphi 0, %s172
      %s174 = sphi 0, %s172
      %s175 = sphi 0, %s174
      %s189 = sphi 0, %s175
      %s193 = sphi 0, %s193
      %s195 = sphi 0, %s193
      %s196 = sphi 0, %s195
      %s210 = sphi 0, %s196
      %s214 = sphi 0, %s214
      %s216 = sphi 0, %s214
      %s217 = sphi 0, %s216
      %s231 = sphi 0, %s217
      %s235 = sphi 0, %s235
      %s237 = sphi 0, %s235
      %s238 = sphi 0, %s237
      %s252 = sphi 0, %s238
      %s256 = sphi 0, %s256
      %s258 = sphi 0, %s256
      %s259 = sphi 0, %s258
      %s273 = sphi 0, %s259
      %s277 = sphi 0, %s277
      %s279 = sphi 0, %s277
      %s280 = sphi 0, %s279
      %s294 = sphi 0, %s280
      %s298 = sphi 0, %s298
      %s300 = sphi 0, %s298
      %s301 = sphi 0, %s300
      %s315 = sphi 0, %s301
      %s319 = sphi 0, %s319
      %s321 = sphi 0, %s319
      %s322 = sphi 0, %s321
      %s336 = sphi 0, %s322
      %s340 = sphi 0, %s340
      %s342 = sphi 0, %s340
      %s343 = sphi 0, %s342
      %s357 = sphi 0, %s343
      %s361 = sphi 0, %s361
      %s363 = sphi 0, %s361
      %s364 = sphi 0, %s363
      %s378 = sphi 0, %s364
      %s382 = sphi 0, %s382
      %s384 = sphi 0, %s382
      %s385 = sphi 0, %s384
      %s399 = sphi 0, %s385
      %s403 = sphi 0, %s403
      %s405 = sphi 0, %s403
      %s406 = sphi 0, %s405
      %s420 = sphi 0, %s406
      %s424 = sphi 0, %s424
      %s426 = sphi 0, %s424
      %s427 = sphi 0, %s426
      %s441 = sphi 0, %s427
      %s445 = sphi 0, %s445
      %s447 = sphi 0, %s445
      %s448 = sphi 0, %s447
      %s462 = sphi 0, %s448
      %s466 = sphi 0, %s466
      %s468 = sphi 0, %s466
      %s469 = sphi 0, %s468
      %s483 = sphi 0, %s469
      %s487 = sphi 0, %s487
      %s489 = sphi 0, %s487
      %s490 = sphi 0, %s489
      %s504 = sphi 0, %s490
      %s512 = sphi 0, %s514
      %s515 = sphi 0, %s512
      %s516 = sphi 0, %s515
      %s532 = sphi 0, %s516
    $region4: #{tpu_custom_call.1} parent=1 // loop_header_branch
      %33 = sbr.rel (%p31) target = $region8
    $region5: #{tpu_custom_call.1} parent=1 // loop_body
      %s35 = ssub.s32 %s30, 1
      %s36 = ssub.s32 %s30, 2
      %s43 = sadd.s32 1, %s38
      %p44 = scmp.ge.s32.totalorder %s43, 1
      %s45 = scalar_select %p44, 0, %s43
      %s46 = sadd.s32 1, %s37
      %s47 = scalar_select %p44, %s46, %s37
      %p48 = scmp.ge.s32.totalorder %s47, 2
      %s49 = scalar_select %p48, 0, %s47
      %s50 = ssub.s32 %s37, %s49
      %s51 = ssub.s32 %s38, %s45
      %s52 = sor.u32 %s50, %s51
      %p53 = scmp.eq.s32.totalorder %s52, 0
      %s55 = sadd.s32 %s54, 1
      %s56 = scalar_select %p53, %s54, %s55
      %p59 = pneg %p53
      %p60 = scmp.eq.s32.totalorder %s30, 1
      %p61 = por %p59, %p60
      %p62 = scmp.ne.s32.totalorder %s54, %s57
      %p63 = scmp.eq.s32.totalorder %s30, 0
      %p64 = por %p62, %p63
      %p65 = scmp.ne.s32.totalorder %s54, %s57
      %p66 = scmp.eq.s32.totalorder %s35, 1
      %p67 = por %p65, %p66
      %p68 = scmp.ne.s32.totalorder %s57, %s58
      %p69 = scmp.eq.s32.totalorder %s35, 0
      %p70 = por %p68, %p69
      %p71 = scmp.ne.s32.totalorder %s57, %s58
      %p72 = scmp.eq.s32.totalorder %s36, 1
      %p73 = por %p71, %p72
      %p75 = scmp.ne.s32.totalorder %s58, %s74
      %p76 = scmp.eq.s32.totalorder %s36, 0
      %p77 = por %p75, %p76
      %s78 = ssub.s32 %s37, %s49
      %p79 = scmp.eq.s32.totalorder %s78, 0
      %s81 = sadd.s32 %s80, 1
      %s82 = scalar_select %p79, %s80, %s81
      %p85 = pneg %p79
      %p86 = scmp.eq.s32.totalorder %s30, 1
      %p87 = por %p85, %p86
      %p88 = scmp.ne.s32.totalorder %s80, %s83
      %p89 = scmp.eq.s32.totalorder %s30, 0
      %p90 = por %p88, %p89
      %p91 = scmp.ne.s32.totalorder %s80, %s83
      %p92 = scmp.eq.s32.totalorder %s35, 1
      %p93 = por %p91, %p92
      %p94 = scmp.ne.s32.totalorder %s83, %s84
      %p95 = scmp.eq.s32.totalorder %s35, 0
      %p96 = por %p94, %p95
      %p97 = scmp.ne.s32.totalorder %s83, %s84
      %p98 = scmp.eq.s32.totalorder %s36, 1
      %p99 = por %p97, %p98
      %p101 = scmp.ne.s32.totalorder %s84, %s100
      %p102 = scmp.eq.s32.totalorder %s36, 0
      %p103 = por %p101, %p102
      %s104 = ssub.s32 %s37, %s49
      %p105 = scmp.eq.s32.totalorder %s104, 0
      %s107 = sadd.s32 %s106, 1
      %s108 = scalar_select %p105, %s106, %s107
      %p111 = pneg %p105
      %p112 = scmp.eq.s32.totalorder %s30, 1
      %p113 = por %p111, %p112
      %p114 = scmp.ne.s32.totalorder %s106, %s109
      %p115 = scmp.eq.s32.totalorder %s30, 0
      %p116 = por %p114, %p115
      %p117 = scmp.ne.s32.totalorder %s106, %s109
      %p118 = scmp.eq.s32.totalorder %s35, 1
      %p119 = por %p117, %p118
      %p120 = scmp.ne.s32.totalorder %s109, %s110
      %p121 = scmp.eq.s32.totalorder %s35, 0
      %p122 = por %p120, %p121
      %p123 = scmp.ne.s32.totalorder %s109, %s110
      %p124 = scmp.eq.s32.totalorder %s36, 1
      %p125 = por %p123, %p124
      %p127 = scmp.ne.s32.totalorder %s110, %s126
      %p128 = scmp.eq.s32.totalorder %s36, 0
      %p129 = por %p127, %p128
      %s131 = sadd.s32 %s130, 1
      %p134 = scmp.eq.s32.totalorder %s30, 1
      %p135 = scmp.ne.s32.totalorder %s130, %s132
      %p136 = scmp.eq.s32.totalorder %s30, 0
      %p137 = por %p135, %p136
      %p138 = scmp.ne.s32.totalorder %s130, %s132
      %p139 = scmp.eq.s32.totalorder %s35, 1
      %p140 = por %p138, %p139
      %p141 = scmp.ne.s32.totalorder %s132, %s133
      %p142 = scmp.eq.s32.totalorder %s35, 0
      %p143 = por %p141, %p142
      %p144 = scmp.ne.s32.totalorder %s132, %s133
      %p145 = scmp.eq.s32.totalorder %s36, 1
      %p146 = por %p144, %p145
      %p148 = scmp.ne.s32.totalorder %s133, %s147
      %p149 = scmp.eq.s32.totalorder %s36, 0
      %p150 = por %p148, %p149
      %s152 = sadd.s32 %s151, 1
      %p155 = scmp.eq.s32.totalorder %s30, 1
      %p156 = scmp.ne.s32.totalorder %s151, %s153
      %p157 = scmp.eq.s32.totalorder %s30, 0
      %p158 = por %p156, %p157
      %p159 = scmp.ne.s32.totalorder %s151, %s153
      %p160 = scmp.eq.s32.totalorder %s35, 1
      %p161 = por %p159, %p160
      %p162 = scmp.ne.s32.totalorder %s153, %s154
      %p163 = scmp.eq.s32.totalorder %s35, 0
      %p164 = por %p162, %p163
      %p165 = scmp.ne.s32.totalorder %s153, %s154
      %p166 = scmp.eq.s32.totalorder %s36, 1
      %p167 = por %p165, %p166
      %p169 = scmp.ne.s32.totalorder %s154, %s168
      %p170 = scmp.eq.s32.totalorder %s36, 0
      %p171 = por %p169, %p170
      %s173 = sadd.s32 %s172, 1
      %p176 = scmp.eq.s32.totalorder %s30, 1
      %p177 = scmp.ne.s32.totalorder %s172, %s174
      %p178 = scmp.eq.s32.totalorder %s30, 0
      %p179 = por %p177, %p178
      %p180 = scmp.ne.s32.totalorder %s172, %s174
      %p181 = scmp.eq.s32.totalorder %s35, 1
      %p182 = por %p180, %p181
      %p183 = scmp.ne.s32.totalorder %s174, %s175
      %p184 = scmp.eq.s32.totalorder %s35, 0
      %p185 = por %p183, %p184
      %p186 = scmp.ne.s32.totalorder %s174, %s175
      %p187 = scmp.eq.s32.totalorder %s36, 1
      %p188 = por %p186, %p187
      %p190 = scmp.ne.s32.totalorder %s175, %s189
      %p191 = scmp.eq.s32.totalorder %s36, 0
      %p192 = por %p190, %p191
      %s194 = sadd.s32 %s193, 1
      %p197 = scmp.eq.s32.totalorder %s30, 1
      %p198 = scmp.ne.s32.totalorder %s193, %s195
      %p199 = scmp.eq.s32.totalorder %s30, 0
      %p200 = por %p198, %p199
      %p201 = scmp.ne.s32.totalorder %s193, %s195
      %p202 = scmp.eq.s32.totalorder %s35, 1
      %p203 = por %p201, %p202
      %p204 = scmp.ne.s32.totalorder %s195, %s196
      %p205 = scmp.eq.s32.totalorder %s35, 0
      %p206 = por %p204, %p205
      %p207 = scmp.ne.s32.totalorder %s195, %s196
      %p208 = scmp.eq.s32.totalorder %s36, 1
      %p209 = por %p207, %p208
      %p211 = scmp.ne.s32.totalorder %s196, %s210
      %p212 = scmp.eq.s32.totalorder %s36, 0
      %p213 = por %p211, %p212
      %s215 = sadd.s32 %s214, 1
      %p218 = scmp.eq.s32.totalorder %s30, 1
      %p219 = scmp.ne.s32.totalorder %s214, %s216
      %p220 = scmp.eq.s32.totalorder %s30, 0
      %p221 = por %p219, %p220
      %p222 = scmp.ne.s32.totalorder %s214, %s216
      %p223 = scmp.eq.s32.totalorder %s35, 1
      %p224 = por %p222, %p223
      %p225 = scmp.ne.s32.totalorder %s216, %s217
      %p226 = scmp.eq.s32.totalorder %s35, 0
      %p227 = por %p225, %p226
      %p228 = scmp.ne.s32.totalorder %s216, %s217
      %p229 = scmp.eq.s32.totalorder %s36, 1
      %p230 = por %p228, %p229
      %p232 = scmp.ne.s32.totalorder %s217, %s231
      %p233 = scmp.eq.s32.totalorder %s36, 0
      %p234 = por %p232, %p233
      %s236 = sadd.s32 %s235, 1
      %p239 = scmp.eq.s32.totalorder %s30, 1
      %p240 = scmp.ne.s32.totalorder %s235, %s237
      %p241 = scmp.eq.s32.totalorder %s30, 0
      %p242 = por %p240, %p241
      %p243 = scmp.ne.s32.totalorder %s235, %s237
      %p244 = scmp.eq.s32.totalorder %s35, 1
      %p245 = por %p243, %p244
      %p246 = scmp.ne.s32.totalorder %s237, %s238
      %p247 = scmp.eq.s32.totalorder %s35, 0
      %p248 = por %p246, %p247
      %p249 = scmp.ne.s32.totalorder %s237, %s238
      %p250 = scmp.eq.s32.totalorder %s36, 1
      %p251 = por %p249, %p250
      %p253 = scmp.ne.s32.totalorder %s238, %s252
      %p254 = scmp.eq.s32.totalorder %s36, 0
      %p255 = por %p253, %p254
      %s257 = sadd.s32 %s256, 1
      %p260 = scmp.eq.s32.totalorder %s30, 1
      %p261 = scmp.ne.s32.totalorder %s256, %s258
      %p262 = scmp.eq.s32.totalorder %s30, 0
      %p263 = por %p261, %p262
      %p264 = scmp.ne.s32.totalorder %s256, %s258
      %p265 = scmp.eq.s32.totalorder %s35, 1
      %p266 = por %p264, %p265
      %p267 = scmp.ne.s32.totalorder %s258, %s259
      %p268 = scmp.eq.s32.totalorder %s35, 0
      %p269 = por %p267, %p268
      %p270 = scmp.ne.s32.totalorder %s258, %s259
      %p271 = scmp.eq.s32.totalorder %s36, 1
      %p272 = por %p270, %p271
      %p274 = scmp.ne.s32.totalorder %s259, %s273
      %p275 = scmp.eq.s32.totalorder %s36, 0
      %p276 = por %p274, %p275
      %s278 = sadd.s32 %s277, 1
      %p281 = scmp.eq.s32.totalorder %s30, 1
      %p282 = scmp.ne.s32.totalorder %s277, %s279
      %p283 = scmp.eq.s32.totalorder %s30, 0
      %p284 = por %p282, %p283
      %p285 = scmp.ne.s32.totalorder %s277, %s279
      %p286 = scmp.eq.s32.totalorder %s35, 1
      %p287 = por %p285, %p286
      %p288 = scmp.ne.s32.totalorder %s279, %s280
      %p289 = scmp.eq.s32.totalorder %s35, 0
      %p290 = por %p288, %p289
      %p291 = scmp.ne.s32.totalorder %s279, %s280
      %p292 = scmp.eq.s32.totalorder %s36, 1
      %p293 = por %p291, %p292
      %p295 = scmp.ne.s32.totalorder %s280, %s294
      %p296 = scmp.eq.s32.totalorder %s36, 0
      %p297 = por %p295, %p296
      %s299 = sadd.s32 %s298, 1
      %p302 = scmp.eq.s32.totalorder %s30, 1
      %p303 = scmp.ne.s32.totalorder %s298, %s300
      %p304 = scmp.eq.s32.totalorder %s30, 0
      %p305 = por %p303, %p304
      %p306 = scmp.ne.s32.totalorder %s298, %s300
      %p307 = scmp.eq.s32.totalorder %s35, 1
      %p308 = por %p306, %p307
      %p309 = scmp.ne.s32.totalorder %s300, %s301
      %p310 = scmp.eq.s32.totalorder %s35, 0
      %p311 = por %p309, %p310
      %p312 = scmp.ne.s32.totalorder %s300, %s301
      %p313 = scmp.eq.s32.totalorder %s36, 1
      %p314 = por %p312, %p313
      %p316 = scmp.ne.s32.totalorder %s301, %s315
      %p317 = scmp.eq.s32.totalorder %s36, 0
      %p318 = por %p316, %p317
      %s320 = sadd.s32 %s319, 1
      %p323 = scmp.eq.s32.totalorder %s30, 1
      %p324 = scmp.ne.s32.totalorder %s319, %s321
      %p325 = scmp.eq.s32.totalorder %s30, 0
      %p326 = por %p324, %p325
      %p327 = scmp.ne.s32.totalorder %s319, %s321
      %p328 = scmp.eq.s32.totalorder %s35, 1
      %p329 = por %p327, %p328
      %p330 = scmp.ne.s32.totalorder %s321, %s322
      %p331 = scmp.eq.s32.totalorder %s35, 0
      %p332 = por %p330, %p331
      %p333 = scmp.ne.s32.totalorder %s321, %s322
      %p334 = scmp.eq.s32.totalorder %s36, 1
      %p335 = por %p333, %p334
      %p337 = scmp.ne.s32.totalorder %s322, %s336
      %p338 = scmp.eq.s32.totalorder %s36, 0
      %p339 = por %p337, %p338
      %s341 = sadd.s32 %s340, 1
      %p344 = scmp.eq.s32.totalorder %s30, 1
      %p345 = scmp.ne.s32.totalorder %s340, %s342
      %p346 = scmp.eq.s32.totalorder %s30, 0
      %p347 = por %p345, %p346
      %p348 = scmp.ne.s32.totalorder %s340, %s342
      %p349 = scmp.eq.s32.totalorder %s35, 1
      %p350 = por %p348, %p349
      %p351 = scmp.ne.s32.totalorder %s342, %s343
      %p352 = scmp.eq.s32.totalorder %s35, 0
      %p353 = por %p351, %p352
      %p354 = scmp.ne.s32.totalorder %s342, %s343
      %p355 = scmp.eq.s32.totalorder %s36, 1
      %p356 = por %p354, %p355
      %p358 = scmp.ne.s32.totalorder %s343, %s357
      %p359 = scmp.eq.s32.totalorder %s36, 0
      %p360 = por %p358, %p359
      %s362 = sadd.s32 %s361, 1
      %p365 = scmp.eq.s32.totalorder %s30, 1
      %p366 = scmp.ne.s32.totalorder %s361, %s363
      %p367 = scmp.eq.s32.totalorder %s30, 0
      %p368 = por %p366, %p367
      %p369 = scmp.ne.s32.totalorder %s361, %s363
      %p370 = scmp.eq.s32.totalorder %s35, 1
      %p371 = por %p369, %p370
      %p372 = scmp.ne.s32.totalorder %s363, %s364
      %p373 = scmp.eq.s32.totalorder %s35, 0
      %p374 = por %p372, %p373
      %p375 = scmp.ne.s32.totalorder %s363, %s364
      %p376 = scmp.eq.s32.totalorder %s36, 1
      %p377 = por %p375, %p376
      %p379 = scmp.ne.s32.totalorder %s364, %s378
      %p380 = scmp.eq.s32.totalorder %s36, 0
      %p381 = por %p379, %p380
      %s383 = sadd.s32 %s382, 1
      %p386 = scmp.eq.s32.totalorder %s30, 1
      %p387 = scmp.ne.s32.totalorder %s382, %s384
      %p388 = scmp.eq.s32.totalorder %s30, 0
      %p389 = por %p387, %p388
      %p390 = scmp.ne.s32.totalorder %s382, %s384
      %p391 = scmp.eq.s32.totalorder %s35, 1
      %p392 = por %p390, %p391
      %p393 = scmp.ne.s32.totalorder %s384, %s385
      %p394 = scmp.eq.s32.totalorder %s35, 0
      %p395 = por %p393, %p394
      %p396 = scmp.ne.s32.totalorder %s384, %s385
      %p397 = scmp.eq.s32.totalorder %s36, 1
      %p398 = por %p396, %p397
      %p400 = scmp.ne.s32.totalorder %s385, %s399
      %p401 = scmp.eq.s32.totalorder %s36, 0
      %p402 = por %p400, %p401
      %s404 = sadd.s32 %s403, 1
      %p407 = scmp.eq.s32.totalorder %s30, 1
      %p408 = scmp.ne.s32.totalorder %s403, %s405
      %p409 = scmp.eq.s32.totalorder %s30, 0
      %p410 = por %p408, %p409
      %p411 = scmp.ne.s32.totalorder %s403, %s405
      %p412 = scmp.eq.s32.totalorder %s35, 1
      %p413 = por %p411, %p412
      %p414 = scmp.ne.s32.totalorder %s405, %s406
      %p415 = scmp.eq.s32.totalorder %s35, 0
      %p416 = por %p414, %p415
      %p417 = scmp.ne.s32.totalorder %s405, %s406
      %p418 = scmp.eq.s32.totalorder %s36, 1
      %p419 = por %p417, %p418
      %p421 = scmp.ne.s32.totalorder %s406, %s420
      %p422 = scmp.eq.s32.totalorder %s36, 0
      %p423 = por %p421, %p422
      %s425 = sadd.s32 %s424, 1
      %p428 = scmp.eq.s32.totalorder %s30, 1
      %p429 = scmp.ne.s32.totalorder %s424, %s426
      %p430 = scmp.eq.s32.totalorder %s30, 0
      %p431 = por %p429, %p430
      %p432 = scmp.ne.s32.totalorder %s424, %s426
      %p433 = scmp.eq.s32.totalorder %s35, 1
      %p434 = por %p432, %p433
      %p435 = scmp.ne.s32.totalorder %s426, %s427
      %p436 = scmp.eq.s32.totalorder %s35, 0
      %p437 = por %p435, %p436
      %p438 = scmp.ne.s32.totalorder %s426, %s427
      %p439 = scmp.eq.s32.totalorder %s36, 1
      %p440 = por %p438, %p439
      %p442 = scmp.ne.s32.totalorder %s427, %s441
      %p443 = scmp.eq.s32.totalorder %s36, 0
      %p444 = por %p442, %p443
      %s446 = sadd.s32 %s445, 1
      %p449 = scmp.eq.s32.totalorder %s30, 1
      %p450 = scmp.ne.s32.totalorder %s445, %s447
      %p451 = scmp.eq.s32.totalorder %s30, 0
      %p452 = por %p450, %p451
      %p453 = scmp.ne.s32.totalorder %s445, %s447
      %p454 = scmp.eq.s32.totalorder %s35, 1
      %p455 = por %p453, %p454
      %p456 = scmp.ne.s32.totalorder %s447, %s448
      %p457 = scmp.eq.s32.totalorder %s35, 0
      %p458 = por %p456, %p457
      %p459 = scmp.ne.s32.totalorder %s447, %s448
      %p460 = scmp.eq.s32.totalorder %s36, 1
      %p461 = por %p459, %p460
      %p463 = scmp.ne.s32.totalorder %s448, %s462
      %p464 = scmp.eq.s32.totalorder %s36, 0
      %p465 = por %p463, %p464
      %s467 = sadd.s32 %s466, 1
      %p470 = scmp.eq.s32.totalorder %s30, 1
      %p471 = scmp.ne.s32.totalorder %s466, %s468
      %p472 = scmp.eq.s32.totalorder %s30, 0
      %p473 = por %p471, %p472
      %p474 = scmp.ne.s32.totalorder %s466, %s468
      %p475 = scmp.eq.s32.totalorder %s35, 1
      %p476 = por %p474, %p475
      %p477 = scmp.ne.s32.totalorder %s468, %s469
      %p478 = scmp.eq.s32.totalorder %s35, 0
      %p479 = por %p477, %p478
      %p480 = scmp.ne.s32.totalorder %s468, %s469
      %p481 = scmp.eq.s32.totalorder %s36, 1
      %p482 = por %p480, %p481
      %p484 = scmp.ne.s32.totalorder %s469, %s483
      %p485 = scmp.eq.s32.totalorder %s36, 0
      %p486 = por %p484, %p485
      %s488 = sadd.s32 %s487, 1
      %p491 = scmp.eq.s32.totalorder %s30, 1
      %p492 = scmp.ne.s32.totalorder %s487, %s489
      %p493 = scmp.eq.s32.totalorder %s30, 0
      %p494 = por %p492, %p493
      %p495 = scmp.ne.s32.totalorder %s487, %s489
      %p496 = scmp.eq.s32.totalorder %s35, 1
      %p497 = por %p495, %p496
      %p498 = scmp.ne.s32.totalorder %s489, %s490
      %p499 = scmp.eq.s32.totalorder %s35, 0
      %p500 = por %p498, %p499
      %p501 = scmp.ne.s32.totalorder %s489, %s490
      %p502 = scmp.eq.s32.totalorder %s36, 1
      %p503 = por %p501, %p502
      %p505 = scmp.ne.s32.totalorder %s490, %s504
      %p506 = scmp.eq.s32.totalorder %s36, 0
      %p507 = por %p505, %p506
      %s508 = ssub.s32 %s37, %s49
      %s509 = ssub.s32 %s38, %s45
      %s510 = sor.u32 %s508, %s509
      %p511 = scmp.eq.s32.totalorder %s510, 0
      %s513 = sadd.s32 %s512, 1
      %s514 = scalar_select %p511, %s512, %s513
      %p517 = pneg %p511
      %p518 = scmp.eq.s32.totalorder %s30, 1
      %p519 = por %p517, %p518
      %p520 = scmp.ne.s32.totalorder %s512, %s515
      %p521 = scmp.eq.s32.totalorder %s30, 0
      %p522 = por %p520, %p521
      %p523 = scmp.ne.s32.totalorder %s512, %s515
      %p524 = scmp.eq.s32.totalorder %s35, 1
      %p525 = por %p523, %p524
      %p526 = scmp.ne.s32.totalorder %s515, %s516
      %p527 = scmp.eq.s32.totalorder %s35, 0
      %p528 = por %p526, %p527
      %p529 = scmp.ne.s32.totalorder %s515, %s516
      %p530 = scmp.eq.s32.totalorder %s36, 1
      %p531 = por %p529, %p530
      %p533 = scmp.ne.s32.totalorder %s516, %s532
      %p534 = scmp.eq.s32.totalorder %s36, 0
      %p535 = por %p533, %p534
      %p536 = scmp.le.s32.totalorder 1, %s30
      %p537 = scmp.lt.s32.totalorder %s30, 3
      %p538 = pnand %p536, %p537
      %p539 = pneg %p538
      // Predicated region
      $region9: #{tpu_custom_call.1} parent=5 // pred_check
        _
      $region10: #{tpu_custom_call.1} parent=5 // pred_check_branch
        %541 = sbr.rel (%p538) target = $region12
      $region11: #{tpu_custom_call.1} parent=5 // pred_region
        %s542 = ssub.s32 %s30, 1
        // Predicated region
        $region13: #{tpu_custom_call.1} parent=11 // pred_check
          %p543 = pneg %p143
        $region14: #{tpu_custom_call.1} parent=11 // pred_check_branch
          %545 = sbr.rel (%p543) target = $region16
        $region15: #{tpu_custom_call.1} parent=11 // pred_region
          _
        $region16: #{tpu_custom_call.1} parent=11 // pred_fallthru
          _
        // Predicated region
        $region17: #{tpu_custom_call.1} parent=11 // pred_check
          %p546 = pneg %p164
        $region18: #{tpu_custom_call.1} parent=11 // pred_check_branch
          %548 = sbr.rel (%p546) target = $region20
        $region19: #{tpu_custom_call.1} parent=11 // pred_region
          _
        $region20: #{tpu_custom_call.1} parent=11 // pred_fallthru
          _
        // Predicated region
        $region21: #{tpu_custom_call.1} parent=11 // pred_check
          %p549 = pneg %p185
        $region22: #{tpu_custom_call.1} parent=11 // pred_check_branch
          %551 = sbr.rel (%p549) target = $region24
        $region23: #{tpu_custom_call.1} parent=11 // pred_region
          _
        $region24: #{tpu_custom_call.1} parent=11 // pred_fallthru
          _
        // Predicated region
        $region25: #{tpu_custom_call.1} parent=11 // pred_check
          %p552 = pneg %p206
        $region26: #{tpu_custom_call.1} parent=11 // pred_check_branch
          %554 = sbr.rel (%p552) target = $region28
        $region27: #{tpu_custom_call.1} parent=11 // pred_region
          _
        $region28: #{tpu_custom_call.1} parent=11 // pred_fallthru
          _
        // Predicated region
        $region29: #{tpu_custom_call.1} parent=11 // pred_check
          %p555 = pneg %p227
        $region30: #{tpu_custom_call.1} parent=11 // pred_check_branch
          %557 = sbr.rel (%p555) target = $region32
        $region31: #{tpu_custom_call.1} parent=11 // pred_region
          _
        $region32: #{tpu_custom_call.1} parent=11 // pred_fallthru
          _
        // Predicated region
        $region33: #{tpu_custom_call.1} parent=11 // pred_check
          %p558 = pneg %p248
        $region34: #{tpu_custom_call.1} parent=11 // pred_check_branch
          %560 = sbr.rel (%p558) target = $region36
        $region35: #{tpu_custom_call.1} parent=11 // pred_region
          _
        $region36: #{tpu_custom_call.1} parent=11 // pred_fallthru
          _
        // Predicated region
        $region37: #{tpu_custom_call.1} parent=11 // pred_check
          %p561 = pneg %p269
        $region38: #{tpu_custom_call.1} parent=11 // pred_check_branch
          %563 = sbr.rel (%p561) target = $region40
        $region39: #{tpu_custom_call.1} parent=11 // pred_region
          _
        $region40: #{tpu_custom_call.1} parent=11 // pred_fallthru
          _
        // Predicated region
        $region41: #{tpu_custom_call.1} parent=11 // pred_check
          %p564 = pneg %p290
        $region42: #{tpu_custom_call.1} parent=11 // pred_check_branch
          %566 = sbr.rel (%p564) target = $region44
        $region43: #{tpu_custom_call.1} parent=11 // pred_region
          _
        $region44: #{tpu_custom_call.1} parent=11 // pred_fallthru
          _
        // Predicated region
        $region45: #{tpu_custom_call.1} parent=11 // pred_check
          %p567 = pneg %p311
        $region46: #{tpu_custom_call.1} parent=11 // pred_check_branch
          %569 = sbr.rel (%p567) target = $region48
        $region47: #{tpu_custom_call.1} parent=11 // pred_region
          _
        $region48: #{tpu_custom_call.1} parent=11 // pred_fallthru
          _
        // Predicated region
        $region49: #{tpu_custom_call.1} parent=11 // pred_check
          %p570 = pneg %p332
        $region50: #{tpu_custom_call.1} parent=11 // pred_check_branch
          %572 = sbr.rel (%p570) target = $region52
        $region51: #{tpu_custom_call.1} parent=11 // pred_region
          _
        $region52: #{tpu_custom_call.1} parent=11 // pred_fallthru
          _
        // Predicated region
        $region53: #{tpu_custom_call.1} parent=11 // pred_check
          %p573 = pneg %p353
        $region54: #{tpu_custom_call.1} parent=11 // pred_check_branch
          %575 = sbr.rel (%p573) target = $region56
        $region55: #{tpu_custom_call.1} parent=11 // pred_region
          _
        $region56: #{tpu_custom_call.1} parent=11 // pred_fallthru
          _
        // Predicated region
        $region57: #{tpu_custom_call.1} parent=11 // pred_check
          %p576 = pneg %p374
        $region58: #{tpu_custom_call.1} parent=11 // pred_check_branch
          %578 = sbr.rel (%p576) target = $region60
        $region59: #{tpu_custom_call.1} parent=11 // pred_region
          _
        $region60: #{tpu_custom_call.1} parent=11 // pred_fallthru
          _
        // Predicated region
        $region61: #{tpu_custom_call.1} parent=11 // pred_check
          %p579 = pneg %p395
        $region62: #{tpu_custom_call.1} parent=11 // pred_check_branch
          %581 = sbr.rel (%p579) target = $region64
        $region63: #{tpu_custom_call.1} parent=11 // pred_region
          _
        $region64: #{tpu_custom_call.1} parent=11 // pred_fallthru
          _
        // Predicated region
        $region65: #{tpu_custom_call.1} parent=11 // pred_check
          %p582 = pneg %p416
        $region66: #{tpu_custom_call.1} parent=11 // pred_check_branch
          %584 = sbr.rel (%p582) target = $region68
        $region67: #{tpu_custom_call.1} parent=11 // pred_region
          _
        $region68: #{tpu_custom_call.1} parent=11 // pred_fallthru
          _
        // Predicated region
        $region69: #{tpu_custom_call.1} parent=11 // pred_check
          %p585 = pneg %p437
        $region70: #{tpu_custom_call.1} parent=11 // pred_check_branch
          %587 = sbr.rel (%p585) target = $region72
        $region71: #{tpu_custom_call.1} parent=11 // pred_region
          _
        $region72: #{tpu_custom_call.1} parent=11 // pred_fallthru
          _
        // Predicated region
        $region73: #{tpu_custom_call.1} parent=11 // pred_check
          %p588 = pneg %p458
        $region74: #{tpu_custom_call.1} parent=11 // pred_check_branch
          %590 = sbr.rel (%p588) target = $region76
        $region75: #{tpu_custom_call.1} parent=11 // pred_region
          _
        $region76: #{tpu_custom_call.1} parent=11 // pred_fallthru
          _
        // Predicated region
        $region77: #{tpu_custom_call.1} parent=11 // pred_check
          %p591 = pneg %p479
        $region78: #{tpu_custom_call.1} parent=11 // pred_check_branch
          %593 = sbr.rel (%p591) target = $region80
        $region79: #{tpu_custom_call.1} parent=11 // pred_region
          _
        $region80: #{tpu_custom_call.1} parent=11 // pred_fallthru
          _
        // Predicated region
        $region81: #{tpu_custom_call.1} parent=11 // pred_check
          %p594 = pneg %p500
        $region82: #{tpu_custom_call.1} parent=11 // pred_check_branch
          %596 = sbr.rel (%p594) target = $region84
        $region83: #{tpu_custom_call.1} parent=11 // pred_region
          _
        $region84: #{tpu_custom_call.1} parent=11 // pred_fallthru
          _
      $region12: #{tpu_custom_call.1} parent=5 // pred_fallthru
        _
      %p597 = scmp.lt.s32.totalorder %s30, 2
      // Predicated region
      $region85: #{tpu_custom_call.1} parent=5 // pred_check
        %p598 = pneg %p597
      $region86: #{tpu_custom_call.1} parent=5 // pred_check_branch
        %600 = sbr.rel (%p598) target = $region88
      $region87: #{tpu_custom_call.1} parent=5 // pred_region
        // Predicated region
        $region89: #{tpu_custom_call.1} parent=87 // pred_check
          %p601 = pneg %p64
        $region90: #{tpu_custom_call.1} parent=87 // pred_check_branch
          %603 = sbr.rel (%p601) target = $region92
        $region91: #{tpu_custom_call.1} parent=87 // pred_region
          %p604 = scmp.lt.s32.totalorder %s37, 1
          %s605 = scalar_select %p604, %s37, 1
          %p606 = scmp.lt.s32.totalorder %s38, 0
          %s607 = scalar_select %p606, %s38, 0
          %s608 = sadd.s32 %s607, %s605
          %s609 = smul.addr %s608, 8
          %s610 = scalar_lea.vmem %s0, %s609
        $region92: #{tpu_custom_call.1} parent=87 // pred_fallthru
          _
        // Predicated region
        $region93: #{tpu_custom_call.1} parent=87 // pred_check
          %p611 = pneg %p90
        $region94: #{tpu_custom_call.1} parent=87 // pred_check_branch
          %613 = sbr.rel (%p611) target = $region96
        $region95: #{tpu_custom_call.1} parent=87 // pred_region
          %p614 = scmp.lt.s32.totalorder %s37, 1
          %s615 = scalar_select %p614, %s37, 1
          %s616 = smul.addr %s615, 8
          %s617 = scalar_lea.vmem %s1, %s616
        $region96: #{tpu_custom_call.1} parent=87 // pred_fallthru
          _
        // Predicated region
        $region97: #{tpu_custom_call.1} parent=87 // pred_check
          %p618 = pneg %p116
        $region98: #{tpu_custom_call.1} parent=87 // pred_check_branch
          %620 = sbr.rel (%p618) target = $region100
        $region99: #{tpu_custom_call.1} parent=87 // pred_region
          %p621 = scmp.lt.s32.totalorder %s37, 1
          %s622 = scalar_select %p621, %s37, 1
          %s623 = smul.addr %s622, 2
          %s624 = smul.addr %s623, 8
          %s625 = scalar_lea.vmem %s2, %s624
        $region100: #{tpu_custom_call.1} parent=87 // pred_fallthru
          _
      $region88: #{tpu_custom_call.1} parent=5 // pred_fallthru
        _
      %p626 = scmp.le.s32.totalorder 1, %s30
      %p627 = scmp.lt.s32.totalorder %s30, 3
      %p628 = pnand %p626, %p627
      %p629 = pneg %p628
      // Predicated region
      $region101: #{tpu_custom_call.1} parent=5 // pred_check
        _
      $region102: #{tpu_custom_call.1} parent=5 // pred_check_branch
        %631 = sbr.rel (%p628) target = $region104
      $region103: #{tpu_custom_call.1} parent=5 // pred_region
        %s632 = ssub.s32 %s30, 1
        %p633 = scmp.lt.s32.totalorder %s39, 1
        %s634 = scalar_select %p633, %s39, 1
        %p635 = scmp.lt.s32.totalorder %s40, 0
        %s636 = scalar_select %p635, %s40, 0
        %s637 = sadd.s32 %s636, %s634
        %s638 = smul.addr %s637, 8
        %s639 = scalar_lea.vmem %s0, %s638
        %p640 = pneg %p70
        %p641 = pneg %p67
        %p642 = scmp.lt.s32.totalorder %s39, 1
        %s643 = scalar_select %p642, %s39, 1
        %s644 = smul.addr %s643, 8
        %s645 = scalar_lea.vmem %s1, %s644
        %p646 = pneg %p96
        %p647 = pneg %p93
        %p648 = scmp.lt.s32.totalorder %s39, 1
        %s649 = scalar_select %p648, %s39, 1
        %s650 = smul.addr %s649, 2
        %s651 = smul.addr %s650, 8
        %s652 = scalar_lea.vmem %s2, %s651
        %p653 = pneg %p122
        %p654 = pneg %p119
        %p655 = pneg %p143
        %p656 = pneg %p140
        %p657 = pneg %p164
        %p658 = pneg %p161
        %p659 = pneg %p185
        %p660 = pneg %p182
        %p661 = pneg %p206
        %p662 = pneg %p203
        %p663 = pneg %p227
        %p664 = pneg %p224
        %p665 = pneg %p248
        %p666 = pneg %p245
        %p667 = pneg %p269
        %p668 = pneg %p266
        %p669 = pneg %p290
        %p670 = pneg %p287
        %p671 = pneg %p311
        %p672 = pneg %p308
        %p673 = pneg %p332
        %p674 = pneg %p329
        %p675 = pneg %p353
        %p676 = pneg %p350
        %p677 = pneg %p374
        %p678 = pneg %p371
        %p679 = pneg %p395
        %p680 = pneg %p392
        %p681 = pneg %p416
        %p682 = pneg %p413
        %p683 = pneg %p437
        %p684 = pneg %p434
        %p685 = pneg %p458
        %p686 = pneg %p455
        %p687 = pneg %p479
        %p688 = pneg %p476
        %p689 = pneg %p500
        %p690 = pneg %p497
        %p691 = pneg %p528
        %p692 = pneg %p525
        %s693 = sand.u32 %s515, 1
        %s694 = scalar_lea.sflag [#allocation3], %s693
        %s695 = sand.u32 %s515, 1
        %s696 = smul.addr %s695, 8
        %s697 = scalar_lea.vmem [#allocation2], %s696
        %p698 = scmp.lt.s32.totalorder %s39, 1
        %s699 = scalar_select %p698, %s39, 1
        %p700 = scmp.lt.s32.totalorder %s40, 0
        %s701 = scalar_select %p700, %s40, 0
        %s702 = sadd.s32 %s701, %s699
        %s703 = smul.addr %s702, 8
        %s704 = scalar_lea.vmem %s0, %s703
        %p705 = scmp.lt.s32.totalorder %s39, 1
        %s706 = scalar_select %p705, %s39, 1
        %s707 = smul.addr %s706, 8
        %s708 = scalar_lea.vmem %s1, %s707
        %p709 = scmp.lt.s32.totalorder %s39, 1
        %s710 = scalar_select %p709, %s39, 1
        %s711 = smul.addr %s710, 2
        %s712 = smul.addr %s711, 8
        %s713 = scalar_lea.vmem %s2, %s712
        %v714 = vld [vmem:[%s704] sm:$0xff]
        %v715 = vld [vmem:[%s708] sm:$0xff]
        %v716 = vld [vmem:[%s713] sm:$0xff]
        %v717 = vld [vmem:[%s713 + $0x8] sm:$0x3]
        %s718 = smul.u32 %s40, 8
        %v719 = vld [vmem:[%s3] sm:$0xff]
        %v720 = vld [vmem:[%s3 + $0x8] sm:$0xff]
        %v721 = vld [vmem:[%s3 + $0x10] sm:$0xff]
        %v722 = vld [vmem:[%s3 + $0x18] sm:$0xff]
        %v723 = vld [vmem:[%s3 + $0x20] sm:$0xff]
        %v724 = vld [vmem:[%s3 + $0x28] sm:$0xff]
        %v725 = vld [vmem:[%s3 + $0x30] sm:$0xff]
        %v726 = vld [vmem:[%s3 + $0x38] sm:$0xff]
        %v727 = vld [vmem:[%s3 + $0x40] sm:$0xff]
        %v728 = vld [vmem:[%s3 + $0x48] sm:$0xff]
        %v729 = vld [vmem:[%s3 + $0x50] sm:$0xff]
        %v730 = vld [vmem:[%s3 + $0x58] sm:$0xff]
        %v731 = vld [vmem:[%s3 + $0x60] sm:$0xff]
        %v732 = vld [vmem:[%s3 + $0x68] sm:$0xff]
        %v733 = vld [vmem:[%s3 + $0x70] sm:$0xff]
        %v734 = vld [vmem:[%s3 + $0x78] sm:$0xff]
        %v735 = vld [vmem:[%s4] sm:$0x1]
        %v737 = vlaneseq
        %v738 = vshrl.u32 %v737, 7
        %v739 = vsub.s32 0, %v738
        %v740 = vrot.slane %v735, %v739
        %742 = vmatprep.subr.mxu0 0.0
        %743 = vmatpush1.msra.mxu0 %v719
        %744 = vmatprep.subr.mxu0 0.0
        %745 = vmatpush1.msra.mxu0 %v720
        %746 = vmatprep.subr.mxu0 0.0
        %747 = vmatpush1.msra.mxu0 %v721
        %748 = vmatprep.subr.mxu0 0.0
        %749 = vmatpush1.msra.mxu0 %v722
        %750 = vmatprep.subr.mxu0 0.0
        %751 = vmatpush1.msra.mxu0 %v723
        %752 = vmatprep.subr.mxu0 0.0
        %753 = vmatpush1.msra.mxu0 %v724
        %754 = vmatprep.subr.mxu0 0.0
        %755 = vmatpush1.msra.mxu0 %v725
        %756 = vmatprep.subr.mxu0 0.0
        %757 = vmatpush1.msra.mxu0 %v726
        %758 = vmatprep.subr.mxu0 0.0
        %759 = vmatpush1.msra.mxu0 %v727
        %760 = vmatprep.subr.mxu0 0.0
        %761 = vmatpush1.msra.mxu0 %v728
        %762 = vmatprep.subr.mxu0 0.0
        %763 = vmatpush1.msra.mxu0 %v729
        %764 = vmatprep.subr.mxu0 0.0
        %765 = vmatpush1.msra.mxu0 %v730
        %766 = vmatprep.subr.mxu0 0.0
        %767 = vmatpush1.msra.mxu0 %v731
        %768 = vmatprep.subr.mxu0 0.0
        %769 = vmatpush1.msra.mxu0 %v732
        %770 = vmatprep.subr.mxu0 0.0
        %771 = vmatpush1.msra.mxu0 %v733
        %772 = vmatprep.subr.mxu0 0.0
        %773 = vmatpush1.msra.mxu0 %v734
        %774 = vmatprep.subr.mxu0 0.0
        %775 = vmatpush1.msra.mxu0 0.0
        %776 = vmatprep.subr.mxu0 0.0
        %777 = vmatpush1.msra.mxu0 0.0
        %778 = vmatprep.subr.mxu0 0.0
        %779 = vmatpush1.msra.mxu0 0.0
        %780 = vmatprep.subr.mxu0 0.0
        %781 = vmatpush1.msra.mxu0 0.0
        %782 = vmatprep.subr.mxu0 0.0
        %783 = vmatpush1.msra.mxu0 0.0
        %784 = vmatprep.subr.mxu0 0.0
        %785 = vmatpush1.msra.mxu0 0.0
        %786 = vmatprep.subr.mxu0 0.0
        %787 = vmatpush1.msra.mxu0 0.0
        %788 = vmatprep.subr.mxu0 0.0
        %789 = vmatpush1.msra.mxu0 0.0
        %790 = vmatprep.subr.mxu0 0.0
        %791 = vmatpush1.msra.mxu0 0.0
        %792 = vmatprep.subr.mxu0 0.0
        %793 = vmatpush1.msra.mxu0 0.0
        %794 = vmatprep.subr.mxu0 0.0
        %795 = vmatpush1.msra.mxu0 0.0
        %796 = vmatprep.subr.mxu0 0.0
        %797 = vmatpush1.msra.mxu0 0.0
        %798 = vmatprep.subr.mxu0 0.0
        %799 = vmatpush1.msra.mxu0 0.0
        %800 = vmatprep.subr.mxu0 0.0
        %801 = vmatpush1.msra.mxu0 0.0
        %802 = vmatprep.subr.mxu0 0.0
        %803 = vmatpush1.msra.mxu0 0.0
        %804 = vmatprep.subr.mxu0 0.0
        %805 = vmatpush1.msra.mxu0 0.0
        %806 = vmatprep.mubr.f32.mxu0 0.0
        %807 = vmatmul.mubr.f32.gmra.mrb[0].mxu0 %v714
        %v808 = vpop.f32.mrb[0].mxu0
        %v809 = vadd.f32 %v740, %v808
        %v810 = vpop.f32.mrb[0].mxu0
        %811 = vdwg.mxu0
        %v812 = vld [vmem:[%s5] sm:$0xff]
        %v813 = vld [vmem:[%s5 + $0x8] sm:$0xff]
        %v814 = vld [vmem:[%s5 + $0x10] sm:$0xff]
        %v815 = vld [vmem:[%s5 + $0x18] sm:$0xff]
        %v816 = vld [vmem:[%s5 + $0x20] sm:$0xff]
        %v817 = vld [vmem:[%s5 + $0x28] sm:$0xff]
        %v818 = vld [vmem:[%s5 + $0x30] sm:$0xff]
        %v819 = vld [vmem:[%s5 + $0x38] sm:$0xff]
        %v820 = vld [vmem:[%s5 + $0x40] sm:$0xff]
        %v821 = vld [vmem:[%s5 + $0x48] sm:$0xff]
        %v822 = vld [vmem:[%s5 + $0x50] sm:$0xff]
        %v823 = vld [vmem:[%s5 + $0x58] sm:$0xff]
        %v824 = vld [vmem:[%s5 + $0x60] sm:$0xff]
        %v825 = vld [vmem:[%s5 + $0x68] sm:$0xff]
        %v826 = vld [vmem:[%s5 + $0x70] sm:$0xff]
        %v827 = vld [vmem:[%s5 + $0x78] sm:$0xff]
        %v828 = vld [vmem:[%s6] sm:$0x1]
        %v830 = vlaneseq
        %v831 = vshrl.u32 %v830, 7
        %v832 = vsub.s32 0, %v831
        %v833 = vrot.slane %v828, %v832
        %835 = vmatprep.subr.mxu0 0.0
        %836 = vmatpush1.msra.mxu0 %v812
        %837 = vmatprep.subr.mxu0 0.0
        %838 = vmatpush1.msra.mxu0 %v813
        %839 = vmatprep.subr.mxu0 0.0
        %840 = vmatpush1.msra.mxu0 %v814
        %841 = vmatprep.subr.mxu0 0.0
        %842 = vmatpush1.msra.mxu0 %v815
        %843 = vmatprep.subr.mxu0 0.0
        %844 = vmatpush1.msra.mxu0 %v816
        %845 = vmatprep.subr.mxu0 0.0
        %846 = vmatpush1.msra.mxu0 %v817
        %847 = vmatprep.subr.mxu0 0.0
        %848 = vmatpush1.msra.mxu0 %v818
        %849 = vmatprep.subr.mxu0 0.0
        %850 = vmatpush1.msra.mxu0 %v819
        %851 = vmatprep.subr.mxu0 0.0
        %852 = vmatpush1.msra.mxu0 %v820
        %853 = vmatprep.subr.mxu0 0.0
        %854 = vmatpush1.msra.mxu0 %v821
        %855 = vmatprep.subr.mxu0 0.0
        %856 = vmatpush1.msra.mxu0 %v822
        %857 = vmatprep.subr.mxu0 0.0
        %858 = vmatpush1.msra.mxu0 %v823
        %859 = vmatprep.subr.mxu0 0.0
        %860 = vmatpush1.msra.mxu0 %v824
        %861 = vmatprep.subr.mxu0 0.0
        %862 = vmatpush1.msra.mxu0 %v825
        %863 = vmatprep.subr.mxu0 0.0
        %864 = vmatpush1.msra.mxu0 %v826
        %865 = vmatprep.subr.mxu0 0.0
        %866 = vmatpush1.msra.mxu0 %v827
        %867 = vmatprep.subr.mxu0 0.0
        %868 = vmatpush1.msra.mxu0 0.0
        %869 = vmatprep.subr.mxu0 0.0
        %870 = vmatpush1.msra.mxu0 0.0
        %871 = vmatprep.subr.mxu0 0.0
        %872 = vmatpush1.msra.mxu0 0.0
        %873 = vmatprep.subr.mxu0 0.0
        %874 = vmatpush1.msra.mxu0 0.0
        %875 = vmatprep.subr.mxu0 0.0
        %876 = vmatpush1.msra.mxu0 0.0
        %877 = vmatprep.subr.mxu0 0.0
        %878 = vmatpush1.msra.mxu0 0.0
        %879 = vmatprep.subr.mxu0 0.0
        %880 = vmatpush1.msra.mxu0 0.0
        %881 = vmatprep.subr.mxu0 0.0
        %882 = vmatpush1.msra.mxu0 0.0
        %883 = vmatprep.subr.mxu0 0.0
        %884 = vmatpush1.msra.mxu0 0.0
        %885 = vmatprep.subr.mxu0 0.0
        %886 = vmatpush1.msra.mxu0 0.0
        %887 = vmatprep.subr.mxu0 0.0
        %888 = vmatpush1.msra.mxu0 0.0
        %889 = vmatprep.subr.mxu0 0.0
        %890 = vmatpush1.msra.mxu0 0.0
        %891 = vmatprep.subr.mxu0 0.0
        %892 = vmatpush1.msra.mxu0 0.0
        %893 = vmatprep.subr.mxu0 0.0
        %894 = vmatpush1.msra.mxu0 0.0
        %895 = vmatprep.subr.mxu0 0.0
        %896 = vmatpush1.msra.mxu0 0.0
        %897 = vmatprep.subr.mxu0 0.0
        %898 = vmatpush1.msra.mxu0 0.0
        %899 = vmatprep.mubr.f32.mxu0 0.0
        %900 = vmatmul.mubr.f32.gmra.mrb[0].mxu0 %v715
        %v901 = vpop.f32.mrb[0].mxu0
        %v902 = vadd.f32 %v833, %v901
        %v903 = vpop.f32.mrb[0].mxu0
        %904 = vdwg.mxu0
        %v905 = vld [vmem:[%s7] sm:$0xff]
        %v906 = vld [vmem:[%s7 + $0x8] sm:$0xff]
        %v907 = vld [vmem:[%s7 + $0x10] sm:$0xff]
        %v908 = vld [vmem:[%s7 + $0x18] sm:$0xff]
        %v909 = vld [vmem:[%s8] sm:$0x1]
        %911 = vrot.lane.b32.xlu0 %v809, 112
        %v912 = vpop.permute.xlu0 %911
        %914 = vrot.lane.b32.xlu0 %v902, 112
        %v915 = vpop.permute.xlu0 %914
        %vm916 = vcmask 130048
        %v917 = vsel %vm916, %v809, 0
        %v919 = vsel %vm916, %v902, 0
        %921 = vmatprep.subr.mxu0 0.0
        %922 = vmatpush1.xpose.msra.mxu0 %v919
        %923 = vmatprep.subr.mxu0 0.0
        %924 = vmatpush1.xpose.msra.mxu0 0.0
        %925 = vmatprep.subr.mxu0 0.0
        %926 = vmatpush1.xpose.msra.mxu0 0.0
        %927 = vmatprep.subr.mxu0 0.0
        %928 = vmatpush1.xpose.msra.mxu0 0.0
        %929 = vmatprep.subr.mxu0 0.0
        %930 = vmatpush1.xpose.msra.mxu0 0.0
        %931 = vmatprep.subr.mxu0 0.0
        %932 = vmatpush1.xpose.msra.mxu0 0.0
        %933 = vmatprep.subr.mxu0 0.0
        %934 = vmatpush1.xpose.msra.mxu0 0.0
        %935 = vmatprep.subr.mxu0 0.0
        %936 = vmatpush1.xpose.msra.mxu0 0.0
        %937 = vmatprep.subr.mxu0 0.0
        %938 = vmatpush1.xpose.msra.mxu0 0.0
        %939 = vmatprep.subr.mxu0 0.0
        %940 = vmatpush1.xpose.msra.mxu0 0.0
        %941 = vmatprep.subr.mxu0 0.0
        %942 = vmatpush1.xpose.msra.mxu0 0.0
        %943 = vmatprep.subr.mxu0 0.0
        %944 = vmatpush1.xpose.msra.mxu0 0.0
        %945 = vmatprep.subr.mxu0 0.0
        %946 = vmatpush1.xpose.msra.mxu0 0.0
        %947 = vmatprep.subr.mxu0 0.0
        %948 = vmatpush1.xpose.msra.mxu0 0.0
        %949 = vmatprep.subr.mxu0 0.0
        %950 = vmatpush1.xpose.msra.mxu0 0.0
        %951 = vmatprep.subr.mxu0 0.0
        %952 = vmatpush1.xpose.msra.mxu0 0.0
        %953 = vmatprep.subr.mxu0 0.0
        %954 = vmatpush1.xpose.msra.mxu0 0.0
        %955 = vmatprep.subr.mxu0 0.0
        %956 = vmatpush1.xpose.msra.mxu0 0.0
        %957 = vmatprep.subr.mxu0 0.0
        %958 = vmatpush1.xpose.msra.mxu0 0.0
        %959 = vmatprep.subr.mxu0 0.0
        %960 = vmatpush1.xpose.msra.mxu0 0.0
        %961 = vmatprep.subr.mxu0 0.0
        %962 = vmatpush1.xpose.msra.mxu0 0.0
        %963 = vmatprep.subr.mxu0 0.0
        %964 = vmatpush1.xpose.msra.mxu0 0.0
        %965 = vmatprep.subr.mxu0 0.0
        %966 = vmatpush1.xpose.msra.mxu0 0.0
        %967 = vmatprep.subr.mxu0 0.0
        %968 = vmatpush1.xpose.msra.mxu0 0.0
        %969 = vmatprep.subr.mxu0 0.0
        %970 = vmatpush1.xpose.msra.mxu0 0.0
        %971 = vmatprep.subr.mxu0 0.0
        %972 = vmatpush1.xpose.msra.mxu0 0.0
        %973 = vmatprep.subr.mxu0 0.0
        %974 = vmatpush1.xpose.msra.mxu0 0.0
        %975 = vmatprep.subr.mxu0 0.0
        %976 = vmatpush1.xpose.msra.mxu0 0.0
        %977 = vmatprep.subr.mxu0 0.0
        %978 = vmatpush1.xpose.msra.mxu0 0.0
        %979 = vmatprep.subr.mxu0 0.0
        %980 = vmatpush1.xpose.msra.mxu0 0.0
        %981 = vmatprep.subr.mxu0 0.0
        %982 = vmatpush1.xpose.msra.mxu0 0.0
        %983 = vmatprep.subr.mxu0 0.0
        %984 = vmatpush1.xpose.msra.mxu0 0.0
        %985 = vmatprep.mubr.f32.mxu0 0.0
        %986 = vmatmul.mubr.f32.gmra.mrb[0].mxu0 %v917
        %v987 = vpop.f32.mrb[0].mxu0
        %v988 = vadd.f32 0.0, %v987
        %v989 = vpop.f32.mrb[0].mxu0
        %990 = vdwg.mxu0
        %v991 = vsel %vm916, %v912, 0
        %v993 = vsel %vm916, %v915, 0
        %995 = vmatprep.subr.mxu0 0.0
        %996 = vmatpush1.xpose.msra.mxu0 %v993
        %997 = vmatprep.subr.mxu0 0.0
        %998 = vmatpush1.xpose.msra.mxu0 0.0
        %999 = vmatprep.subr.mxu0 0.0
        %1000 = vmatpush1.xpose.msra.mxu0 0.0
        %1001 = vmatprep.subr.mxu0 0.0
        %1002 = vmatpush1.xpose.msra.mxu0 0.0
        %1003 = vmatprep.subr.mxu0 0.0
        %1004 = vmatpush1.xpose.msra.mxu0 0.0
        %1005 = vmatprep.subr.mxu0 0.0
        %1006 = vmatpush1.xpose.msra.mxu0 0.0
        %1007 = vmatprep.subr.mxu0 0.0
        %1008 = vmatpush1.xpose.msra.mxu0 0.0
        %1009 = vmatprep.subr.mxu0 0.0
        %1010 = vmatpush1.xpose.msra.mxu0 0.0
        %1011 = vmatprep.subr.mxu0 0.0
        %1012 = vmatpush1.xpose.msra.mxu0 0.0
        %1013 = vmatprep.subr.mxu0 0.0
        %1014 = vmatpush1.xpose.msra.mxu0 0.0
        %1015 = vmatprep.subr.mxu0 0.0
        %1016 = vmatpush1.xpose.msra.mxu0 0.0
        %1017 = vmatprep.subr.mxu0 0.0
        %1018 = vmatpush1.xpose.msra.mxu0 0.0
        %1019 = vmatprep.subr.mxu0 0.0
        %1020 = vmatpush1.xpose.msra.mxu0 0.0
        %1021 = vmatprep.subr.mxu0 0.0
        %1022 = vmatpush1.xpose.msra.mxu0 0.0
        %1023 = vmatprep.subr.mxu0 0.0
        %1024 = vmatpush1.xpose.msra.mxu0 0.0
        %1025 = vmatprep.subr.mxu0 0.0
        %1026 = vmatpush1.xpose.msra.mxu0 0.0
        %1027 = vmatprep.subr.mxu0 0.0
        %1028 = vmatpush1.xpose.msra.mxu0 0.0
        %1029 = vmatprep.subr.mxu0 0.0
        %1030 = vmatpush1.xpose.msra.mxu0 0.0
        %1031 = vmatprep.subr.mxu0 0.0
        %1032 = vmatpush1.xpose.msra.mxu0 0.0
        %1033 = vmatprep.subr.mxu0 0.0
        %1034 = vmatpush1.xpose.msra.mxu0 0.0
        %1035 = vmatprep.subr.mxu0 0.0
        %1036 = vmatpush1.xpose.msra.mxu0 0.0
        %1037 = vmatprep.subr.mxu0 0.0
        %1038 = vmatpush1.xpose.msra.mxu0 0.0
        %1039 = vmatprep.subr.mxu0 0.0
        %1040 = vmatpush1.xpose.msra.mxu0 0.0
        %1041 = vmatprep.subr.mxu0 0.0
        %1042 = vmatpush1.xpose.msra.mxu0 0.0
        %1043 = vmatprep.subr.mxu0 0.0
        %1044 = vmatpush1.xpose.msra.mxu0 0.0
        %1045 = vmatprep.subr.mxu0 0.0
        %1046 = vmatpush1.xpose.msra.mxu0 0.0
        %1047 = vmatprep.subr.mxu0 0.0
        %1048 = vmatpush1.xpose.msra.mxu0 0.0
        %1049 = vmatprep.subr.mxu0 0.0
        %1050 = vmatpush1.xpose.msra.mxu0 0.0
        %1051 = vmatprep.subr.mxu0 0.0
        %1052 = vmatpush1.xpose.msra.mxu0 0.0
        %1053 = vmatprep.subr.mxu0 0.0
        %1054 = vmatpush1.xpose.msra.mxu0 0.0
        %1055 = vmatprep.subr.mxu0 0.0
        %1056 = vmatpush1.xpose.msra.mxu0 0.0
        %1057 = vmatprep.subr.mxu0 0.0
        %1058 = vmatpush1.xpose.msra.mxu0 0.0
        %1059 = vmatprep.mubr.f32.mxu0 0.0
        %1060 = vmatmul.mubr.f32.gmra.mrb[0].mxu0 %v991
        %v1061 = vpop.f32.mrb[0].mxu0
        %v1062 = vadd.f32 0.0, %v1061
        %v1063 = vpop.f32.mrb[0].mxu0
        %1064 = vdwg.mxu0
        %v1065 = vmul.f32 %v988, 0.25
        %v1066 = vmul.f32 %v1062, 0.25
        %v1067 = vlaneseq
        %v1068 = vshrl.u32 %v1067, 7
        %v1069 = vstv %s718
        %v1070 = vadd.s32 %v1068, %v1069
        %v1071 = vlaneseq
        %v1072 = vand.u32 %v1071, 127
        %vm1073 = vcmp.gt.s32.totalorder %v1072, %v1070
        %v1074 = vsel %vm1073, 1, 0
        %vm1075 = vcmp.eq.s32.totalorder %v1074, 1
        %v1076 = vsel %vm1075, -1e+30, %v1065
        %v1077 = vsel %vm1075, -1e+30, %v1066
        %vm1078 = vcmask 64512
        %v1079 = vsel %vm1078, %v1076, -inf
        %1080 = vmax.xlane.f32.xlu0 %v1079
        %v1081 = vpop.xlane.xlu0 %1080
        %v1082 = vsel %vm1078, %v1077, -inf
        %1083 = vmax.xlane.f32.xlu0 %v1082
        %v1084 = vpop.xlane.xlu0 %1083
        %v1085 = vsub.f32 %v1076, %v1081
        %v1086 = vsub.f32 %v1077, %v1084
        %v1087 = vmul.f32 %v1085, 1.442695
        %v1088 = vpow.pop %v1087
        %v1089 = vmul.f32 %v1086, 1.442695
        %v1090 = vpow.pop %v1089
        %v1091 = vsel %vm1078, %v1088, 0.0
        %1092 = vadd.xlane.f32.xlu0 %v1091
        %v1093 = vpop.xlane.xlu0 %1092
        %v1094 = vsel %vm1078, %v1090, 0.0
        %1095 = vadd.xlane.f32.xlu0 %v1094
        %v1096 = vpop.xlane.xlu0 %1095
        %v1097 = vrcp.pop %v1093
        %v1098 = vrcp.pop %v1096
        %v1099 = vmul.f32 %v1093, %v1097
        %v1100 = vmul.f32 %v1096, %v1098
        %v1101 = vsub.f32 2.0, %v1099
        %v1102 = vsub.f32 2.0, %v1100
        %v1103 = vmul.f32 %v1097, %v1101
        %v1104 = vmul.f32 %v1098, %v1102
        %1105 = vrot.lane.b32.xlu0 %v902, 96
        %v1106 = vpop.permute.xlu0 %1105
        %v1109 = vsel %vm1078, %v1088, 0
        %1111 = vmatprep.subr.mxu0 0.0
        %1112 = vmatpush1.msra.mxu0 %v1106
        %1113 = vmatprep.subr.mxu0 0.0
        %1114 = vmatpush1.msra.mxu0 0.0
        %1115 = vmatprep.subr.mxu0 0.0
        %1116 = vmatpush1.msra.mxu0 0.0
        %1117 = vmatprep.subr.mxu0 0.0
        %1118 = vmatpush1.msra.mxu0 0.0
        %1119 = vmatprep.subr.mxu0 0.0
        %1120 = vmatpush1.msra.mxu0 0.0
        %1121 = vmatprep.subr.mxu0 0.0
        %1122 = vmatpush1.msra.mxu0 0.0
        %1123 = vmatprep.subr.mxu0 0.0
        %1124 = vmatpush1.msra.mxu0 0.0
        %1125 = vmatprep.subr.mxu0 0.0
        %1126 = vmatpush1.msra.mxu0 0.0
        %1127 = vmatprep.subr.mxu0 0.0
        %1128 = vmatpush1.msra.mxu0 0.0
        %1129 = vmatprep.subr.mxu0 0.0
        %1130 = vmatpush1.msra.mxu0 0.0
        %1131 = vmatprep.subr.mxu0 0.0
        %1132 = vmatpush1.msra.mxu0 0.0
        %1133 = vmatprep.subr.mxu0 0.0
        %1134 = vmatpush1.msra.mxu0 0.0
        %1135 = vmatprep.subr.mxu0 0.0
        %1136 = vmatpush1.msra.mxu0 0.0
        %1137 = vmatprep.subr.mxu0 0.0
        %1138 = vmatpush1.msra.mxu0 0.0
        %1139 = vmatprep.subr.mxu0 0.0
        %1140 = vmatpush1.msra.mxu0 0.0
        %1141 = vmatprep.subr.mxu0 0.0
        %1142 = vmatpush1.msra.mxu0 0.0
        %1143 = vmatprep.subr.mxu0 0.0
        %1144 = vmatpush1.msra.mxu0 0.0
        %1145 = vmatprep.subr.mxu0 0.0
        %1146 = vmatpush1.msra.mxu0 0.0
        %1147 = vmatprep.subr.mxu0 0.0
        %1148 = vmatpush1.msra.mxu0 0.0
        %1149 = vmatprep.subr.mxu0 0.0
        %1150 = vmatpush1.msra.mxu0 0.0
        %1151 = vmatprep.subr.mxu0 0.0
        %1152 = vmatpush1.msra.mxu0 0.0
        %1153 = vmatprep.subr.mxu0 0.0
        %1154 = vmatpush1.msra.mxu0 0.0
        %1155 = vmatprep.subr.mxu0 0.0
        %1156 = vmatpush1.msra.mxu0 0.0
        %1157 = vmatprep.subr.mxu0 0.0
        %1158 = vmatpush1.msra.mxu0 0.0
        %1159 = vmatprep.subr.mxu0 0.0
        %1160 = vmatpush1.msra.mxu0 0.0
        %1161 = vmatprep.subr.mxu0 0.0
        %1162 = vmatpush1.msra.mxu0 0.0
        %1163 = vmatprep.subr.mxu0 0.0
        %1164 = vmatpush1.msra.mxu0 0.0
        %1165 = vmatprep.subr.mxu0 0.0
        %1166 = vmatpush1.msra.mxu0 0.0
        %1167 = vmatprep.subr.mxu0 0.0
        %1168 = vmatpush1.msra.mxu0 0.0
        %1169 = vmatprep.subr.mxu0 0.0
        %1170 = vmatpush1.msra.mxu0 0.0
        %1171 = vmatprep.subr.mxu0 0.0
        %1172 = vmatpush1.msra.mxu0 0.0
        %1173 = vmatprep.subr.mxu0 0.0
        %1174 = vmatpush1.msra.mxu0 0.0
        %1175 = vmatprep.mubr.f32.mxu0 0.0
        %1176 = vmatmul.mubr.f32.gmra.mrb[0].mxu0 %v1109
        %v1177 = vpop.f32.mrb[0].mxu0
        %v1178 = vadd.f32 0.0, %v1177
        %v1179 = vpop.f32.mrb[0].mxu0
        %1180 = vdwg.mxu0
        %1181 = vrot.lane.b32.xlu0 %v915, 96
        %v1182 = vpop.permute.xlu0 %1181
        %v1185 = vsel %vm1078, %v1090, 0
        %1187 = vmatprep.subr.mxu0 0.0
        %1188 = vmatpush1.msra.mxu0 %v1182
        %1189 = vmatprep.subr.mxu0 0.0
        %1190 = vmatpush1.msra.mxu0 0.0
        %1191 = vmatprep.subr.mxu0 0.0
        %1192 = vmatpush1.msra.mxu0 0.0
        %1193 = vmatprep.subr.mxu0 0.0
        %1194 = vmatpush1.msra.mxu0 0.0
        %1195 = vmatprep.subr.mxu0 0.0
        %1196 = vmatpush1.msra.mxu0 0.0
        %1197 = vmatprep.subr.mxu0 0.0
        %1198 = vmatpush1.msra.mxu0 0.0
        %1199 = vmatprep.subr.mxu0 0.0
        %1200 = vmatpush1.msra.mxu0 0.0
        %1201 = vmatprep.subr.mxu0 0.0
        %1202 = vmatpush1.msra.mxu0 0.0
        %1203 = vmatprep.subr.mxu0 0.0
        %1204 = vmatpush1.msra.mxu0 0.0
        %1205 = vmatprep.subr.mxu0 0.0
        %1206 = vmatpush1.msra.mxu0 0.0
        %1207 = vmatprep.subr.mxu0 0.0
        %1208 = vmatpush1.msra.mxu0 0.0
        %1209 = vmatprep.subr.mxu0 0.0
        %1210 = vmatpush1.msra.mxu0 0.0
        %1211 = vmatprep.subr.mxu0 0.0
        %1212 = vmatpush1.msra.mxu0 0.0
        %1213 = vmatprep.subr.mxu0 0.0
        %1214 = vmatpush1.msra.mxu0 0.0
        %1215 = vmatprep.subr.mxu0 0.0
        %1216 = vmatpush1.msra.mxu0 0.0
        %1217 = vmatprep.subr.mxu0 0.0
        %1218 = vmatpush1.msra.mxu0 0.0
        %1219 = vmatprep.subr.mxu0 0.0
        %1220 = vmatpush1.msra.mxu0 0.0
        %1221 = vmatprep.subr.mxu0 0.0
        %1222 = vmatpush1.msra.mxu0 0.0
        %1223 = vmatprep.subr.mxu0 0.0
        %1224 = vmatpush1.msra.mxu0 0.0
        %1225 = vmatprep.subr.mxu0 0.0
        %1226 = vmatpush1.msra.mxu0 0.0
        %1227 = vmatprep.subr.mxu0 0.0
        %1228 = vmatpush1.msra.mxu0 0.0
        %1229 = vmatprep.subr.mxu0 0.0
        %1230 = vmatpush1.msra.mxu0 0.0
        %1231 = vmatprep.subr.mxu0 0.0
        %1232 = vmatpush1.msra.mxu0 0.0
        %1233 = vmatprep.subr.mxu0 0.0
        %1234 = vmatpush1.msra.mxu0 0.0
        %1235 = vmatprep.subr.mxu0 0.0
        %1236 = vmatpush1.msra.mxu0 0.0
        %1237 = vmatprep.subr.mxu0 0.0
        %1238 = vmatpush1.msra.mxu0 0.0
        %1239 = vmatprep.subr.mxu0 0.0
        %1240 = vmatpush1.msra.mxu0 0.0
        %1241 = vmatprep.subr.mxu0 0.0
        %1242 = vmatpush1.msra.mxu0 0.0
        %1243 = vmatprep.subr.mxu0 0.0
        %1244 = vmatpush1.msra.mxu0 0.0
        %1245 = vmatprep.subr.mxu0 0.0
        %1246 = vmatpush1.msra.mxu0 0.0
        %1247 = vmatprep.subr.mxu0 0.0
        %1248 = vmatpush1.msra.mxu0 0.0
        %1249 = vmatprep.subr.mxu0 0.0
        %1250 = vmatpush1.msra.mxu0 0.0
        %1251 = vmatprep.mubr.f32.mxu0 0.0
        %1252 = vmatmul.mubr.f32.gmra.mrb[0].mxu0 %v1185
        %v1253 = vpop.f32.mrb[0].mxu0
        %v1254 = vadd.f32 0.0, %v1253
        %v1255 = vpop.f32.mrb[0].mxu0
        %1256 = vdwg.mxu0
        %v1257 = vmul.f32 %v1178, %v1103
        %v1258 = vmul.f32 %v1254, %v1104
        %v1260 = vsel %vm916, %v1257, 0
        %1262 = vmatprep.subr.mxu0 0.0
        %1263 = vmatpush1.msra.mxu0 %v905
        %1264 = vmatprep.subr.mxu0 0.0
        %1265 = vmatpush1.msra.mxu0 %v906
        %1266 = vmatprep.subr.mxu0 0.0
        %1267 = vmatpush1.msra.mxu0 0.0
        %1268 = vmatprep.subr.mxu0 0.0
        %1269 = vmatpush1.msra.mxu0 0.0
        %1270 = vmatprep.subr.mxu0 0.0
        %1271 = vmatpush1.msra.mxu0 0.0
        %1272 = vmatprep.subr.mxu0 0.0
        %1273 = vmatpush1.msra.mxu0 0.0
        %1274 = vmatprep.subr.mxu0 0.0
        %1275 = vmatpush1.msra.mxu0 0.0
        %1276 = vmatprep.subr.mxu0 0.0
        %1277 = vmatpush1.msra.mxu0 0.0
        %1278 = vmatprep.subr.mxu0 0.0
        %1279 = vmatpush1.msra.mxu0 0.0
        %1280 = vmatprep.subr.mxu0 0.0
        %1281 = vmatpush1.msra.mxu0 0.0
        %1282 = vmatprep.subr.mxu0 0.0
        %1283 = vmatpush1.msra.mxu0 0.0
        %1284 = vmatprep.subr.mxu0 0.0
        %1285 = vmatpush1.msra.mxu0 0.0
        %1286 = vmatprep.subr.mxu0 0.0
        %1287 = vmatpush1.msra.mxu0 0.0
        %1288 = vmatprep.subr.mxu0 0.0
        %1289 = vmatpush1.msra.mxu0 0.0
        %1290 = vmatprep.subr.mxu0 0.0
        %1291 = vmatpush1.msra.mxu0 0.0
        %1292 = vmatprep.subr.mxu0 0.0
        %1293 = vmatpush1.msra.mxu0 0.0
        %1294 = vmatprep.subr.mxu0 0.0
        %1295 = vmatpush1.msra.mxu0 0.0
        %1296 = vmatprep.subr.mxu0 0.0
        %1297 = vmatpush1.msra.mxu0 0.0
        %1298 = vmatprep.subr.mxu0 0.0
        %1299 = vmatpush1.msra.mxu0 0.0
        %1300 = vmatprep.subr.mxu0 0.0
        %1301 = vmatpush1.msra.mxu0 0.0
        %1302 = vmatprep.subr.mxu0 0.0
        %1303 = vmatpush1.msra.mxu0 0.0
        %1304 = vmatprep.subr.mxu0 0.0
        %1305 = vmatpush1.msra.mxu0 0.0
        %1306 = vmatprep.subr.mxu0 0.0
        %1307 = vmatpush1.msra.mxu0 0.0
        %1308 = vmatprep.subr.mxu0 0.0
        %1309 = vmatpush1.msra.mxu0 0.0
        %1310 = vmatprep.subr.mxu0 0.0
        %1311 = vmatpush1.msra.mxu0 0.0
        %1312 = vmatprep.subr.mxu0 0.0
        %1313 = vmatpush1.msra.mxu0 0.0
        %1314 = vmatprep.subr.mxu0 0.0
        %1315 = vmatpush1.msra.mxu0 0.0
        %1316 = vmatprep.subr.mxu0 0.0
        %1317 = vmatpush1.msra.mxu0 0.0
        %1318 = vmatprep.subr.mxu0 0.0
        %1319 = vmatpush1.msra.mxu0 0.0
        %1320 = vmatprep.subr.mxu0 0.0
        %1321 = vmatpush1.msra.mxu0 0.0
        %1322 = vmatprep.subr.mxu0 0.0
        %1323 = vmatpush1.msra.mxu0 0.0
        %1324 = vmatprep.subr.mxu0 0.0
        %1325 = vmatpush1.msra.mxu0 0.0
        %1326 = vmatprep.mubr.f32.mxu0 0.0
        %1327 = vmatmul.mubr.f32.gmra.mrb[0].mxu0 %v1260
        %v1328 = vpop.f32.mrb[0].mxu0
        %v1329 = vadd.f32 0.0, %v1328
        %v1330 = vpop.f32.mrb[0].mxu0
        %1331 = vdwg.mxu0
        %v1333 = vsel %vm916, %v1258, 0
        %1335 = vmatprep.subr.mxu0 0.0
        %1336 = vmatpush1.msra.mxu0 %v907
        %1337 = vmatprep.subr.mxu0 0.0
        %1338 = vmatpush1.msra.mxu0 %v908
        %1339 = vmatprep.subr.mxu0 0.0
        %1340 = vmatpush1.msra.mxu0 0.0
        %1341 = vmatprep.subr.mxu0 0.0
        %1342 = vmatpush1.msra.mxu0 0.0
        %1343 = vmatprep.subr.mxu0 0.0
        %1344 = vmatpush1.msra.mxu0 0.0
        %1345 = vmatprep.subr.mxu0 0.0
        %1346 = vmatpush1.msra.mxu0 0.0
        %1347 = vmatprep.subr.mxu0 0.0
        %1348 = vmatpush1.msra.mxu0 0.0
        %1349 = vmatprep.subr.mxu0 0.0
        %1350 = vmatpush1.msra.mxu0 0.0
        %1351 = vmatprep.subr.mxu0 0.0
        %1352 = vmatpush1.msra.mxu0 0.0
        %1353 = vmatprep.subr.mxu0 0.0
        %1354 = vmatpush1.msra.mxu0 0.0
        %1355 = vmatprep.subr.mxu0 0.0
        %1356 = vmatpush1.msra.mxu0 0.0
        %1357 = vmatprep.subr.mxu0 0.0
        %1358 = vmatpush1.msra.mxu0 0.0
        %1359 = vmatprep.subr.mxu0 0.0
        %1360 = vmatpush1.msra.mxu0 0.0
        %1361 = vmatprep.subr.mxu0 0.0
        %1362 = vmatpush1.msra.mxu0 0.0
        %1363 = vmatprep.subr.mxu0 0.0
        %1364 = vmatpush1.msra.mxu0 0.0
        %1365 = vmatprep.subr.mxu0 0.0
        %1366 = vmatpush1.msra.mxu0 0.0
        %1367 = vmatprep.subr.mxu0 0.0
        %1368 = vmatpush1.msra.mxu0 0.0
        %1369 = vmatprep.subr.mxu0 0.0
        %1370 = vmatpush1.msra.mxu0 0.0
        %1371 = vmatprep.subr.mxu0 0.0
        %1372 = vmatpush1.msra.mxu0 0.0
        %1373 = vmatprep.subr.mxu0 0.0
        %1374 = vmatpush1.msra.mxu0 0.0
        %1375 = vmatprep.subr.mxu0 0.0
        %1376 = vmatpush1.msra.mxu0 0.0
        %1377 = vmatprep.subr.mxu0 0.0
        %1378 = vmatpush1.msra.mxu0 0.0
        %1379 = vmatprep.subr.mxu0 0.0
        %1380 = vmatpush1.msra.mxu0 0.0
        %1381 = vmatprep.subr.mxu0 0.0
        %1382 = vmatpush1.msra.mxu0 0.0
        %1383 = vmatprep.subr.mxu0 0.0
        %1384 = vmatpush1.msra.mxu0 0.0
        %1385 = vmatprep.subr.mxu0 0.0
        %1386 = vmatpush1.msra.mxu0 0.0
        %1387 = vmatprep.subr.mxu0 0.0
        %1388 = vmatpush1.msra.mxu0 0.0
        %1389 = vmatprep.subr.mxu0 0.0
        %1390 = vmatpush1.msra.mxu0 0.0
        %1391 = vmatprep.subr.mxu0 0.0
        %1392 = vmatpush1.msra.mxu0 0.0
        %1393 = vmatprep.subr.mxu0 0.0
        %1394 = vmatpush1.msra.mxu0 0.0
        %1395 = vmatprep.subr.mxu0 0.0
        %1396 = vmatpush1.msra.mxu0 0.0
        %1397 = vmatprep.subr.mxu0 0.0
        %1398 = vmatpush1.msra.mxu0 0.0
        %1399 = vmatprep.mubr.f32.mxu0 0.0
        %1400 = vmatmul.mubr.f32.gmra.mrb[0].mxu0 %v1333
        %v1401 = vpop.f32.mrb[0].mxu0
        %v1402 = vadd.f32 0.0, %v1401
        %v1403 = vpop.f32.mrb[0].mxu0
        %1404 = vdwg.mxu0
        %v1405 = vadd.f32 %v1329, %v1402
        %v1407 = vlaneseq
        %v1408 = vshrl.u32 %v1407, 7
        %v1409 = vsub.s32 0, %v1408
        %v1410 = vrot.slane %v909, %v1409
        %v1412 = vadd.f32 %v1405, %v1410
        %v1413 = vadd.f32 %v714, %v1412
        %v1414 = vld [vmem:[%s19] sm:$0x1]
        %v1415 = vld [vmem:[%s20] sm:$0x1]
        %1416 = vadd.xlane.f32.xlu0 %v1413
        %v1417 = vpop.xlane.xlu0 %1416
        %v1418 = vmul.f32 %v1417, 0.03125
        %v1419 = vsub.f32 %v1413, %v1418
        %v1420 = vmul.f32 %v1419, %v1419
        %1421 = vadd.xlane.f32.xlu0 %v1420
        %v1422 = vpop.xlane.xlu0 %1421
        %v1423 = vmul.f32 %v1418, 96.0
        %v1424 = vmul.f32 %v1423, %v1418
        %v1425 = vsub.f32 %v1422, %v1424
        %v1426 = vmul.f32 %v1425, 0.03125
        %v1427 = vmax.f32 %v1426, 0.0
        %v1428 = vadd.f32 %v1427, 1e-05
        %v1429 = vrsqrt.pop %v1428
        %v1430 = vmul.f32 %v1419, %v1429
        %v1431 = vlaneseq
        %v1432 = vshrl.u32 %v1431, 7
        %v1433 = vsub.s32 0, %v1432
        %v1434 = vrot.slane %v1414, %v1433
        %v1435 = vmul.f32 %v1430, %v1434
        %v1436 = vlaneseq
        %v1437 = vshrl.u32 %v1436, 7
        %v1438 = vsub.s32 0, %v1437
        %v1439 = vrot.slane %v1415, %v1438
        %v1440 = vadd.f32 %v1435, %v1439
        %v1441 = vld [vmem:[%s9] sm:$0xff]
        %v1442 = vld [vmem:[%s9 + $0x8] sm:$0xff]
        %v1443 = vld [vmem:[%s9 + $0x10] sm:$0xff]
        %v1444 = vld [vmem:[%s9 + $0x18] sm:$0xff]
        %v1445 = vld [vmem:[%s9 + $0x20] sm:$0xff]
        %v1446 = vld [vmem:[%s9 + $0x28] sm:$0xff]
        %v1447 = vld [vmem:[%s9 + $0x30] sm:$0xff]
        %v1448 = vld [vmem:[%s9 + $0x38] sm:$0xff]
        %v1449 = vld [vmem:[%s9 + $0x40] sm:$0xff]
        %v1450 = vld [vmem:[%s9 + $0x48] sm:$0xff]
        %v1451 = vld [vmem:[%s9 + $0x50] sm:$0xff]
        %v1452 = vld [vmem:[%s9 + $0x58] sm:$0xff]
        %v1453 = vld [vmem:[%s9 + $0x60] sm:$0xff]
        %v1454 = vld [vmem:[%s9 + $0x68] sm:$0xff]
        %v1455 = vld [vmem:[%s9 + $0x70] sm:$0xff]
        %v1456 = vld [vmem:[%s9 + $0x78] sm:$0xff]
        %v1457 = vld [vmem:[%s10] sm:$0x1]
        %v1459 = vlaneseq
        %v1460 = vshrl.u32 %v1459, 7
        %v1461 = vsub.s32 0, %v1460
        %v1462 = vrot.slane %v1457, %v1461
        %1464 = vmatprep.subr.mxu0 0.0
        %1465 = vmatpush1.msra.mxu0 %v1441
        %1466 = vmatprep.subr.mxu0 0.0
        %1467 = vmatpush1.msra.mxu0 %v1442
        %1468 = vmatprep.subr.mxu0 0.0
        %1469 = vmatpush1.msra.mxu0 %v1443
        %1470 = vmatprep.subr.mxu0 0.0
        %1471 = vmatpush1.msra.mxu0 %v1444
        %1472 = vmatprep.subr.mxu0 0.0
        %1473 = vmatpush1.msra.mxu0 %v1445
        %1474 = vmatprep.subr.mxu0 0.0
        %1475 = vmatpush1.msra.mxu0 %v1446
        %1476 = vmatprep.subr.mxu0 0.0
        %1477 = vmatpush1.msra.mxu0 %v1447
        %1478 = vmatprep.subr.mxu0 0.0
        %1479 = vmatpush1.msra.mxu0 %v1448
        %1480 = vmatprep.subr.mxu0 0.0
        %1481 = vmatpush1.msra.mxu0 %v1449
        %1482 = vmatprep.subr.mxu0 0.0
        %1483 = vmatpush1.msra.mxu0 %v1450
        %1484 = vmatprep.subr.mxu0 0.0
        %1485 = vmatpush1.msra.mxu0 %v1451
        %1486 = vmatprep.subr.mxu0 0.0
        %1487 = vmatpush1.msra.mxu0 %v1452
        %1488 = vmatprep.subr.mxu0 0.0
        %1489 = vmatpush1.msra.mxu0 %v1453
        %1490 = vmatprep.subr.mxu0 0.0
        %1491 = vmatpush1.msra.mxu0 %v1454
        %1492 = vmatprep.subr.mxu0 0.0
        %1493 = vmatpush1.msra.mxu0 %v1455
        %1494 = vmatprep.subr.mxu0 0.0
        %1495 = vmatpush1.msra.mxu0 %v1456
        %1496 = vmatprep.subr.mxu0 0.0
        %1497 = vmatpush1.msra.mxu0 0.0
        %1498 = vmatprep.subr.mxu0 0.0
        %1499 = vmatpush1.msra.mxu0 0.0
        %1500 = vmatprep.subr.mxu0 0.0
        %1501 = vmatpush1.msra.mxu0 0.0
        %1502 = vmatprep.subr.mxu0 0.0
        %1503 = vmatpush1.msra.mxu0 0.0
        %1504 = vmatprep.subr.mxu0 0.0
        %1505 = vmatpush1.msra.mxu0 0.0
        %1506 = vmatprep.subr.mxu0 0.0
        %1507 = vmatpush1.msra.mxu0 0.0
        %1508 = vmatprep.subr.mxu0 0.0
        %1509 = vmatpush1.msra.mxu0 0.0
        %1510 = vmatprep.subr.mxu0 0.0
        %1511 = vmatpush1.msra.mxu0 0.0
        %1512 = vmatprep.subr.mxu0 0.0
        %1513 = vmatpush1.msra.mxu0 0.0
        %1514 = vmatprep.subr.mxu0 0.0
        %1515 = vmatpush1.msra.mxu0 0.0
        %1516 = vmatprep.subr.mxu0 0.0
        %1517 = vmatpush1.msra.mxu0 0.0
        %1518 = vmatprep.subr.mxu0 0.0
        %1519 = vmatpush1.msra.mxu0 0.0
        %1520 = vmatprep.subr.mxu0 0.0
        %1521 = vmatpush1.msra.mxu0 0.0
        %1522 = vmatprep.subr.mxu0 0.0
        %1523 = vmatpush1.msra.mxu0 0.0
        %1524 = vmatprep.subr.mxu0 0.0
        %1525 = vmatpush1.msra.mxu0 0.0
        %1526 = vmatprep.subr.mxu0 0.0
        %1527 = vmatpush1.msra.mxu0 0.0
        %1528 = vmatprep.mubr.f32.mxu0 0.0
        %1529 = vmatmul.mubr.f32.gmra.mrb[0].mxu0 %v1440
        %v1530 = vpop.f32.mrb[0].mxu0
        %v1531 = vadd.f32 %v1462, %v1530
        %v1532 = vpop.f32.mrb[0].mxu0
        %1533 = vdwg.mxu0
        %v1534 = vld [vmem:[%s11] sm:$0xff]
        %v1535 = vld [vmem:[%s11 + $0x8] sm:$0xff]
        %v1536 = vld [vmem:[%s11 + $0x10] sm:$0xff]
        %v1537 = vld [vmem:[%s11 + $0x18] sm:$0xff]
        %v1538 = vld [vmem:[%s11 + $0x20] sm:$0xff]
        %v1539 = vld [vmem:[%s11 + $0x28] sm:$0xff]
        %v1540 = vld [vmem:[%s11 + $0x30] sm:$0xff]
        %v1541 = vld [vmem:[%s11 + $0x38] sm:$0xff]
        %v1542 = vld [vmem:[%s11 + $0x40] sm:$0xff]
        %v1543 = vld [vmem:[%s11 + $0x48] sm:$0xff]
        %v1544 = vld [vmem:[%s11 + $0x50] sm:$0xff]
        %v1545 = vld [vmem:[%s11 + $0x58] sm:$0xff]
        %v1546 = vld [vmem:[%s11 + $0x60] sm:$0xff]
        %v1547 = vld [vmem:[%s11 + $0x68] sm:$0xff]
        %v1548 = vld [vmem:[%s11 + $0x70] sm:$0xff]
        %v1549 = vld [vmem:[%s11 + $0x78] sm:$0xff]
        %v1550 = vld [vmem:[%s12] sm:$0x1]
        %v1552 = vlaneseq
        %v1553 = vshrl.u32 %v1552, 7
        %v1554 = vsub.s32 0, %v1553
        %v1555 = vrot.slane %v1550, %v1554
        %1557 = vmatprep.subr.mxu0 0.0
        %1558 = vmatpush1.msra.mxu0 %v1534
        %1559 = vmatprep.subr.mxu0 0.0
        %1560 = vmatpush1.msra.mxu0 %v1535
        %1561 = vmatprep.subr.mxu0 0.0
        %1562 = vmatpush1.msra.mxu0 %v1536
        %1563 = vmatprep.subr.mxu0 0.0
        %1564 = vmatpush1.msra.mxu0 %v1537
        %1565 = vmatprep.subr.mxu0 0.0
        %1566 = vmatpush1.msra.mxu0 %v1538
        %1567 = vmatprep.subr.mxu0 0.0
        %1568 = vmatpush1.msra.mxu0 %v1539
        %1569 = vmatprep.subr.mxu0 0.0
        %1570 = vmatpush1.msra.mxu0 %v1540
        %1571 = vmatprep.subr.mxu0 0.0
        %1572 = vmatpush1.msra.mxu0 %v1541
        %1573 = vmatprep.subr.mxu0 0.0
        %1574 = vmatpush1.msra.mxu0 %v1542
        %1575 = vmatprep.subr.mxu0 0.0
        %1576 = vmatpush1.msra.mxu0 %v1543
        %1577 = vmatprep.subr.mxu0 0.0
        %1578 = vmatpush1.msra.mxu0 %v1544
        %1579 = vmatprep.subr.mxu0 0.0
        %1580 = vmatpush1.msra.mxu0 %v1545
        %1581 = vmatprep.subr.mxu0 0.0
        %1582 = vmatpush1.msra.mxu0 %v1546
        %1583 = vmatprep.subr.mxu0 0.0
        %1584 = vmatpush1.msra.mxu0 %v1547
        %1585 = vmatprep.subr.mxu0 0.0
        %1586 = vmatpush1.msra.mxu0 %v1548
        %1587 = vmatprep.subr.mxu0 0.0
        %1588 = vmatpush1.msra.mxu0 %v1549
        %1589 = vmatprep.subr.mxu0 0.0
        %1590 = vmatpush1.msra.mxu0 0.0
        %1591 = vmatprep.subr.mxu0 0.0
        %1592 = vmatpush1.msra.mxu0 0.0
        %1593 = vmatprep.subr.mxu0 0.0
        %1594 = vmatpush1.msra.mxu0 0.0
        %1595 = vmatprep.subr.mxu0 0.0
        %1596 = vmatpush1.msra.mxu0 0.0
        %1597 = vmatprep.subr.mxu0 0.0
        %1598 = vmatpush1.msra.mxu0 0.0
        %1599 = vmatprep.subr.mxu0 0.0
        %1600 = vmatpush1.msra.mxu0 0.0
        %1601 = vmatprep.subr.mxu0 0.0
        %1602 = vmatpush1.msra.mxu0 0.0
        %1603 = vmatprep.subr.mxu0 0.0
        %1604 = vmatpush1.msra.mxu0 0.0
        %1605 = vmatprep.subr.mxu0 0.0
        %1606 = vmatpush1.msra.mxu0 0.0
        %1607 = vmatprep.subr.mxu0 0.0
        %1608 = vmatpush1.msra.mxu0 0.0
        %1609 = vmatprep.subr.mxu0 0.0
        %1610 = vmatpush1.msra.mxu0 0.0
        %1611 = vmatprep.subr.mxu0 0.0
        %1612 = vmatpush1.msra.mxu0 0.0
        %1613 = vmatprep.subr.mxu0 0.0
        %1614 = vmatpush1.msra.mxu0 0.0
        %1615 = vmatprep.subr.mxu0 0.0
        %1616 = vmatpush1.msra.mxu0 0.0
        %1617 = vmatprep.subr.mxu0 0.0
        %1618 = vmatpush1.msra.mxu0 0.0
        %1619 = vmatprep.subr.mxu0 0.0
        %1620 = vmatpush1.msra.mxu0 0.0
        %1621 = vmatprep.mubr.f32.mxu0 0.0
        %1622 = vmatmul.mubr.f32.gmra.mrb[0].mxu0 %v716
        %v1623 = vpop.f32.mrb[0].mxu0
        %v1624 = vadd.f32 %v1555, %v1623
        %v1625 = vpop.f32.mrb[0].mxu0
        %1626 = vmatprep.mubr.f32.mxu0 0.0
        %1627 = vmatmul.mubr.f32.gmra.mrb[0].mxu0 %v717
        %v1628 = vpop.f32.mrb[0].mxu0
        %v1629 = vadd.f32 %v1555, %v1628
        %v1630 = vpop.f32.mrb[0].mxu0
        %1631 = vdwg.mxu0
        %v1632 = vld [vmem:[%s13] sm:$0xff]
        %v1633 = vld [vmem:[%s13 + $0x8] sm:$0xff]
        %v1634 = vld [vmem:[%s13 + $0x10] sm:$0xff]
        %v1635 = vld [vmem:[%s13 + $0x18] sm:$0xff]
        %v1636 = vld [vmem:[%s14] sm:$0x1]
        %1638 = vrot.lane.b32.xlu0 %v1531, 112
        %v1639 = vpop.permute.xlu0 %1638
        %1642 = vrot.lane.b32.xlu0 %v1624, 112
        %v1643 = vpop.permute.xlu0 %1642
        %1644 = vrot.lane.b32.xlu0 %v1629, 112
        %v1645 = vpop.permute.xlu0 %1644
        %v1646 = vsel %vm916, %v1531, 0
        %v1648 = vsel %vm916, %v1624, 0
        %v1650 = vsel %vm916, %v1629, 0
        %1652 = vmatprep.subr.mxu0 0.0
        %1653 = vmatpush1.xpose.msra.mxu0 %v1648
        %1654 = vmatprep.subr.mxu0 0.0
        %1655 = vmatpush1.xpose.msra.mxu0 %v1650
        %1656 = vmatprep.subr.mxu0 0.0
        %1657 = vmatpush1.xpose.msra.mxu0 0.0
        %1658 = vmatprep.subr.mxu0 0.0
        %1659 = vmatpush1.xpose.msra.mxu0 0.0
        %1660 = vmatprep.subr.mxu0 0.0
        %1661 = vmatpush1.xpose.msra.mxu0 0.0
        %1662 = vmatprep.subr.mxu0 0.0
        %1663 = vmatpush1.xpose.msra.mxu0 0.0
        %1664 = vmatprep.subr.mxu0 0.0
        %1665 = vmatpush1.xpose.msra.mxu0 0.0
        %1666 = vmatprep.subr.mxu0 0.0
        %1667 = vmatpush1.xpose.msra.mxu0 0.0
        %1668 = vmatprep.subr.mxu0 0.0
        %1669 = vmatpush1.xpose.msra.mxu0 0.0
        %1670 = vmatprep.subr.mxu0 0.0
        %1671 = vmatpush1.xpose.msra.mxu0 0.0
        %1672 = vmatprep.subr.mxu0 0.0
        %1673 = vmatpush1.xpose.msra.mxu0 0.0
        %1674 = vmatprep.subr.mxu0 0.0
        %1675 = vmatpush1.xpose.msra.mxu0 0.0
        %1676 = vmatprep.subr.mxu0 0.0
        %1677 = vmatpush1.xpose.msra.mxu0 0.0
        %1678 = vmatprep.subr.mxu0 0.0
        %1679 = vmatpush1.xpose.msra.mxu0 0.0
        %1680 = vmatprep.subr.mxu0 0.0
        %1681 = vmatpush1.xpose.msra.mxu0 0.0
        %1682 = vmatprep.subr.mxu0 0.0
        %1683 = vmatpush1.xpose.msra.mxu0 0.0
        %1684 = vmatprep.subr.mxu0 0.0
        %1685 = vmatpush1.xpose.msra.mxu0 0.0
        %1686 = vmatprep.subr.mxu0 0.0
        %1687 = vmatpush1.xpose.msra.mxu0 0.0
        %1688 = vmatprep.subr.mxu0 0.0
        %1689 = vmatpush1.xpose.msra.mxu0 0.0
        %1690 = vmatprep.subr.mxu0 0.0
        %1691 = vmatpush1.xpose.msra.mxu0 0.0
        %1692 = vmatprep.subr.mxu0 0.0
        %1693 = vmatpush1.xpose.msra.mxu0 0.0
        %1694 = vmatprep.subr.mxu0 0.0
        %1695 = vmatpush1.xpose.msra.mxu0 0.0
        %1696 = vmatprep.subr.mxu0 0.0
        %1697 = vmatpush1.xpose.msra.mxu0 0.0
        %1698 = vmatprep.subr.mxu0 0.0
        %1699 = vmatpush1.xpose.msra.mxu0 0.0
        %1700 = vmatprep.subr.mxu0 0.0
        %1701 = vmatpush1.xpose.msra.mxu0 0.0
        %1702 = vmatprep.subr.mxu0 0.0
        %1703 = vmatpush1.xpose.msra.mxu0 0.0
        %1704 = vmatprep.subr.mxu0 0.0
        %1705 = vmatpush1.xpose.msra.mxu0 0.0
        %1706 = vmatprep.subr.mxu0 0.0
        %1707 = vmatpush1.xpose.msra.mxu0 0.0
        %1708 = vmatprep.subr.mxu0 0.0
        %1709 = vmatpush1.xpose.msra.mxu0 0.0
        %1710 = vmatprep.subr.mxu0 0.0
        %1711 = vmatpush1.xpose.msra.mxu0 0.0
        %1712 = vmatprep.subr.mxu0 0.0
        %1713 = vmatpush1.xpose.msra.mxu0 0.0
        %1714 = vmatprep.subr.mxu0 0.0
        %1715 = vmatpush1.xpose.msra.mxu0 0.0
        %1716 = vmatprep.mubr.f32.mxu0 0.0
        %1717 = vmatmul.mubr.f32.gmra.mrb[0].mxu0 %v1646
        %v1718 = vpop.f32.mrb[0].mxu0
        %v1719 = vadd.f32 0.0, %v1718
        %v1720 = vpop.f32.mrb[0].mxu0
        %1721 = vdwg.mxu0
        %v1722 = vsel %vm916, %v1639, 0
        %v1724 = vsel %vm916, %v1643, 0
        %v1726 = vsel %vm916, %v1645, 0
        %1728 = vmatprep.subr.mxu0 0.0
        %1729 = vmatpush1.xpose.msra.mxu0 %v1724
        %1730 = vmatprep.subr.mxu0 0.0
        %1731 = vmatpush1.xpose.msra.mxu0 %v1726
        %1732 = vmatprep.subr.mxu0 0.0
        %1733 = vmatpush1.xpose.msra.mxu0 0.0
        %1734 = vmatprep.subr.mxu0 0.0
        %1735 = vmatpush1.xpose.msra.mxu0 0.0
        %1736 = vmatprep.subr.mxu0 0.0
        %1737 = vmatpush1.xpose.msra.mxu0 0.0
        %1738 = vmatprep.subr.mxu0 0.0
        %1739 = vmatpush1.xpose.msra.mxu0 0.0
        %1740 = vmatprep.subr.mxu0 0.0
        %1741 = vmatpush1.xpose.msra.mxu0 0.0
        %1742 = vmatprep.subr.mxu0 0.0
        %1743 = vmatpush1.xpose.msra.mxu0 0.0
        %1744 = vmatprep.subr.mxu0 0.0
        %1745 = vmatpush1.xpose.msra.mxu0 0.0
        %1746 = vmatprep.subr.mxu0 0.0
        %1747 = vmatpush1.xpose.msra.mxu0 0.0
        %1748 = vmatprep.subr.mxu0 0.0
        %1749 = vmatpush1.xpose.msra.mxu0 0.0
        %1750 = vmatprep.subr.mxu0 0.0
        %1751 = vmatpush1.xpose.msra.mxu0 0.0
        %1752 = vmatprep.subr.mxu0 0.0
        %1753 = vmatpush1.xpose.msra.mxu0 0.0
        %1754 = vmatprep.subr.mxu0 0.0
        %1755 = vmatpush1.xpose.msra.mxu0 0.0
        %1756 = vmatprep.subr.mxu0 0.0
        %1757 = vmatpush1.xpose.msra.mxu0 0.0
        %1758 = vmatprep.subr.mxu0 0.0
        %1759 = vmatpush1.xpose.msra.mxu0 0.0
        %1760 = vmatprep.subr.mxu0 0.0
        %1761 = vmatpush1.xpose.msra.mxu0 0.0
        %1762 = vmatprep.subr.mxu0 0.0
        %1763 = vmatpush1.xpose.msra.mxu0 0.0
        %1764 = vmatprep.subr.mxu0 0.0
        %1765 = vmatpush1.xpose.msra.mxu0 0.0
        %1766 = vmatprep.subr.mxu0 0.0
        %1767 = vmatpush1.xpose.msra.mxu0 0.0
        %1768 = vmatprep.subr.mxu0 0.0
        %1769 = vmatpush1.xpose.msra.mxu0 0.0
        %1770 = vmatprep.subr.mxu0 0.0
        %1771 = vmatpush1.xpose.msra.mxu0 0.0
        %1772 = vmatprep.subr.mxu0 0.0
        %1773 = vmatpush1.xpose.msra.mxu0 0.0
        %1774 = vmatprep.subr.mxu0 0.0
        %1775 = vmatpush1.xpose.msra.mxu0 0.0
        %1776 = vmatprep.subr.mxu0 0.0
        %1777 = vmatpush1.xpose.msra.mxu0 0.0
        %1778 = vmatprep.subr.mxu0 0.0
        %1779 = vmatpush1.xpose.msra.mxu0 0.0
        %1780 = vmatprep.subr.mxu0 0.0
        %1781 = vmatpush1.xpose.msra.mxu0 0.0
        %1782 = vmatprep.subr.mxu0 0.0
        %1783 = vmatpush1.xpose.msra.mxu0 0.0
        %1784 = vmatprep.subr.mxu0 0.0
        %1785 = vmatpush1.xpose.msra.mxu0 0.0
        %1786 = vmatprep.subr.mxu0 0.0
        %1787 = vmatpush1.xpose.msra.mxu0 0.0
        %1788 = vmatprep.subr.mxu0 0.0
        %1789 = vmatpush1.xpose.msra.mxu0 0.0
        %1790 = vmatprep.subr.mxu0 0.0
        %1791 = vmatpush1.xpose.msra.mxu0 0.0
        %1792 = vmatprep.mubr.f32.mxu0 0.0
        %1793 = vmatmul.mubr.f32.gmra.mrb[0].mxu0 %v1722
        %v1794 = vpop.f32.mrb[0].mxu0
        %v1795 = vadd.f32 0.0, %v1794
        %v1796 = vpop.f32.mrb[0].mxu0
        %1797 = vdwg.mxu0
        %v1798 = vmul.f32 %v1719, 0.25
        %v1799 = vmul.f32 %v1795, 0.25
        %vm1800 = vcmask 80896
        %v1801 = vsel %vm1800, %v1798, -inf
        %1802 = vmax.xlane.f32.xlu0 %v1801
        %v1803 = vpop.xlane.xlu0 %1802
        %v1804 = vsel %vm1800, %v1799, -inf
        %1805 = vmax.xlane.f32.xlu0 %v1804
        %v1806 = vpop.xlane.xlu0 %1805
        %v1807 = vsub.f32 %v1798, %v1803
        %v1808 = vsub.f32 %v1799, %v1806
        %v1809 = vmul.f32 %v1807, 1.442695
        %v1810 = vpow.pop %v1809
        %v1811 = vmul.f32 %v1808, 1.442695
        %v1812 = vpow.pop %v1811
        %v1813 = vsel %vm1800, %v1810, 0.0
        %1814 = vadd.xlane.f32.xlu0 %v1813
        %v1815 = vpop.xlane.xlu0 %1814
        %v1816 = vsel %vm1800, %v1812, 0.0
        %1817 = vadd.xlane.f32.xlu0 %v1816
        %v1818 = vpop.xlane.xlu0 %1817
        %v1819 = vrcp.pop %v1815
        %v1820 = vrcp.pop %v1818
        %v1821 = vmul.f32 %v1815, %v1819
        %v1822 = vmul.f32 %v1818, %v1820
        %v1823 = vsub.f32 2.0, %v1821
        %v1824 = vsub.f32 2.0, %v1822
        %v1825 = vmul.f32 %v1819, %v1823
        %v1826 = vmul.f32 %v1820, %v1824
        %1827 = vrot.lane.b32.xlu0 %v1624, 96
        %v1828 = vpop.permute.xlu0 %1827
        %1829 = vrot.lane.b32.xlu0 %v1629, 96
        %v1830 = vpop.permute.xlu0 %1829
        %v1833 = vsel %vm1800, %v1810, 0
        %vm1835 = vcmask 1041408
        %v1836 = vsel %vm1835, %v1830, 0
        %1838 = vmatprep.subr.mxu0 0.0
        %1839 = vmatpush1.msra.mxu0 %v1828
        %1840 = vmatprep.subr.mxu0 0.0
        %1841 = vmatpush1.msra.mxu0 %v1836
        %1842 = vmatprep.subr.mxu0 0.0
        %1843 = vmatpush1.msra.mxu0 0.0
        %1844 = vmatprep.subr.mxu0 0.0
        %1845 = vmatpush1.msra.mxu0 0.0
        %1846 = vmatprep.subr.mxu0 0.0
        %1847 = vmatpush1.msra.mxu0 0.0
        %1848 = vmatprep.subr.mxu0 0.0
        %1849 = vmatpush1.msra.mxu0 0.0
        %1850 = vmatprep.subr.mxu0 0.0
        %1851 = vmatpush1.msra.mxu0 0.0
        %1852 = vmatprep.subr.mxu0 0.0
        %1853 = vmatpush1.msra.mxu0 0.0
        %1854 = vmatprep.subr.mxu0 0.0
        %1855 = vmatpush1.msra.mxu0 0.0
        %1856 = vmatprep.subr.mxu0 0.0
        %1857 = vmatpush1.msra.mxu0 0.0
        %1858 = vmatprep.subr.mxu0 0.0
        %1859 = vmatpush1.msra.mxu0 0.0
        %1860 = vmatprep.subr.mxu0 0.0
        %1861 = vmatpush1.msra.mxu0 0.0
        %1862 = vmatprep.subr.mxu0 0.0
        %1863 = vmatpush1.msra.mxu0 0.0
        %1864 = vmatprep.subr.mxu0 0.0
        %1865 = vmatpush1.msra.mxu0 0.0
        %1866 = vmatprep.subr.mxu0 0.0
        %1867 = vmatpush1.msra.mxu0 0.0
        %1868 = vmatprep.subr.mxu0 0.0
        %1869 = vmatpush1.msra.mxu0 0.0
        %1870 = vmatprep.subr.mxu0 0.0
        %1871 = vmatpush1.msra.mxu0 0.0
        %1872 = vmatprep.subr.mxu0 0.0
        %1873 = vmatpush1.msra.mxu0 0.0
        %1874 = vmatprep.subr.mxu0 0.0
        %1875 = vmatpush1.msra.mxu0 0.0
        %1876 = vmatprep.subr.mxu0 0.0
        %1877 = vmatpush1.msra.mxu0 0.0
        %1878 = vmatprep.subr.mxu0 0.0
        %1879 = vmatpush1.msra.mxu0 0.0
        %1880 = vmatprep.subr.mxu0 0.0
        %1881 = vmatpush1.msra.mxu0 0.0
        %1882 = vmatprep.subr.mxu0 0.0
        %1883 = vmatpush1.msra.mxu0 0.0
        %1884 = vmatprep.subr.mxu0 0.0
        %1885 = vmatpush1.msra.mxu0 0.0
        %1886 = vmatprep.subr.mxu0 0.0
        %1887 = vmatpush1.msra.mxu0 0.0
        %1888 = vmatprep.subr.mxu0 0.0
        %1889 = vmatpush1.msra.mxu0 0.0
        %1890 = vmatprep.subr.mxu0 0.0
        %1891 = vmatpush1.msra.mxu0 0.0
        %1892 = vmatprep.subr.mxu0 0.0
        %1893 = vmatpush1.msra.mxu0 0.0
        %1894 = vmatprep.subr.mxu0 0.0
        %1895 = vmatpush1.msra.mxu0 0.0
        %1896 = vmatprep.subr.mxu0 0.0
        %1897 = vmatpush1.msra.mxu0 0.0
        %1898 = vmatprep.subr.mxu0 0.0
        %1899 = vmatpush1.msra.mxu0 0.0
        %1900 = vmatprep.subr.mxu0 0.0
        %1901 = vmatpush1.msra.mxu0 0.0
        %1902 = vmatprep.mubr.f32.mxu0 0.0
        %1903 = vmatmul.mubr.f32.gmra.mrb[0].mxu0 %v1833
        %v1904 = vpop.f32.mrb[0].mxu0
        %v1905 = vadd.f32 0.0, %v1904
        %v1906 = vpop.f32.mrb[0].mxu0
        %1907 = vdwg.mxu0
        %1908 = vrot.lane.b32.xlu0 %v1643, 96
        %v1909 = vpop.permute.xlu0 %1908
        %1910 = vrot.lane.b32.xlu0 %v1645, 96
        %v1911 = vpop.permute.xlu0 %1910
        %v1914 = vsel %vm1800, %v1812, 0
        %v1916 = vsel %vm1835, %v1911, 0
        %1918 = vmatprep.subr.mxu0 0.0
        %1919 = vmatpush1.msra.mxu0 %v1909
        %1920 = vmatprep.subr.mxu0 0.0
        %1921 = vmatpush1.msra.mxu0 %v1916
        %1922 = vmatprep.subr.mxu0 0.0
        %1923 = vmatpush1.msra.mxu0 0.0
        %1924 = vmatprep.subr.mxu0 0.0
        %1925 = vmatpush1.msra.mxu0 0.0
        %1926 = vmatprep.subr.mxu0 0.0
        %1927 = vmatpush1.msra.mxu0 0.0
        %1928 = vmatprep.subr.mxu0 0.0
        %1929 = vmatpush1.msra.mxu0 0.0
        %1930 = vmatprep.subr.mxu0 0.0
        %1931 = vmatpush1.msra.mxu0 0.0
        %1932 = vmatprep.subr.mxu0 0.0
        %1933 = vmatpush1.msra.mxu0 0.0
        %1934 = vmatprep.subr.mxu0 0.0
        %1935 = vmatpush1.msra.mxu0 0.0
        %1936 = vmatprep.subr.mxu0 0.0
        %1937 = vmatpush1.msra.mxu0 0.0
        %1938 = vmatprep.subr.mxu0 0.0
        %1939 = vmatpush1.msra.mxu0 0.0
        %1940 = vmatprep.subr.mxu0 0.0
        %1941 = vmatpush1.msra.mxu0 0.0
        %1942 = vmatprep.subr.mxu0 0.0
        %1943 = vmatpush1.msra.mxu0 0.0
        %1944 = vmatprep.subr.mxu0 0.0
        %1945 = vmatpush1.msra.mxu0 0.0
        %1946 = vmatprep.subr.mxu0 0.0
        %1947 = vmatpush1.msra.mxu0 0.0
        %1948 = vmatprep.subr.mxu0 0.0
        %1949 = vmatpush1.msra.mxu0 0.0
        %1950 = vmatprep.subr.mxu0 0.0
        %1951 = vmatpush1.msra.mxu0 0.0
        %1952 = vmatprep.subr.mxu0 0.0
        %1953 = vmatpush1.msra.mxu0 0.0
        %1954 = vmatprep.subr.mxu0 0.0
        %1955 = vmatpush1.msra.mxu0 0.0
        %1956 = vmatprep.subr.mxu0 0.0
        %1957 = vmatpush1.msra.mxu0 0.0
        %1958 = vmatprep.subr.mxu0 0.0
        %1959 = vmatpush1.msra.mxu0 0.0
        %1960 = vmatprep.subr.mxu0 0.0
        %1961 = vmatpush1.msra.mxu0 0.0
        %1962 = vmatprep.subr.mxu0 0.0
        %1963 = vmatpush1.msra.mxu0 0.0
        %1964 = vmatprep.subr.mxu0 0.0
        %1965 = vmatpush1.msra.mxu0 0.0
        %1966 = vmatprep.subr.mxu0 0.0
        %1967 = vmatpush1.msra.mxu0 0.0
        %1968 = vmatprep.subr.mxu0 0.0
        %1969 = vmatpush1.msra.mxu0 0.0
        %1970 = vmatprep.subr.mxu0 0.0
        %1971 = vmatpush1.msra.mxu0 0.0
        %1972 = vmatprep.subr.mxu0 0.0
        %1973 = vmatpush1.msra.mxu0 0.0
        %1974 = vmatprep.subr.mxu0 0.0
        %1975 = vmatpush1.msra.mxu0 0.0
        %1976 = vmatprep.subr.mxu0 0.0
        %1977 = vmatpush1.msra.mxu0 0.0
        %1978 = vmatprep.subr.mxu0 0.0
        %1979 = vmatpush1.msra.mxu0 0.0
        %1980 = vmatprep.subr.mxu0 0.0
        %1981 = vmatpush1.msra.mxu0 0.0
        %1982 = vmatprep.mubr.f32.mxu0 0.0
        %1983 = vmatmul.mubr.f32.gmra.mrb[0].mxu0 %v1914
        %v1984 = vpop.f32.mrb[0].mxu0
        %v1985 = vadd.f32 0.0, %v1984
        %v1986 = vpop.f32.mrb[0].mxu0
        %1987 = vdwg.mxu0
        %v1988 = vmul.f32 %v1905, %v1825
        %v1989 = vmul.f32 %v1985, %v1826
        %v1991 = vsel %vm916, %v1988, 0
        %1993 = vmatprep.subr.mxu0 0.0
        %1994 = vmatpush1.msra.mxu0 %v1632
        %1995 = vmatprep.subr.mxu0 0.0
        %1996 = vmatpush1.msra.mxu0 %v1633
        %1997 = vmatprep.subr.mxu0 0.0
        %1998 = vmatpush1.msra.mxu0 0.0
        %1999 = vmatprep.subr.mxu0 0.0
        %2000 = vmatpush1.msra.mxu0 0.0
        %2001 = vmatprep.subr.mxu0 0.0
        %2002 = vmatpush1.msra.mxu0 0.0
        %2003 = vmatprep.subr.mxu0 0.0
        %2004 = vmatpush1.msra.mxu0 0.0
        %2005 = vmatprep.subr.mxu0 0.0
        %2006 = vmatpush1.msra.mxu0 0.0
        %2007 = vmatprep.subr.mxu0 0.0
        %2008 = vmatpush1.msra.mxu0 0.0
        %2009 = vmatprep.subr.mxu0 0.0
        %2010 = vmatpush1.msra.mxu0 0.0
        %2011 = vmatprep.subr.mxu0 0.0
        %2012 = vmatpush1.msra.mxu0 0.0
        %2013 = vmatprep.subr.mxu0 0.0
        %2014 = vmatpush1.msra.mxu0 0.0
        %2015 = vmatprep.subr.mxu0 0.0
        %2016 = vmatpush1.msra.mxu0 0.0
        %2017 = vmatprep.subr.mxu0 0.0
        %2018 = vmatpush1.msra.mxu0 0.0
        %2019 = vmatprep.subr.mxu0 0.0
        %2020 = vmatpush1.msra.mxu0 0.0
        %2021 = vmatprep.subr.mxu0 0.0
        %2022 = vmatpush1.msra.mxu0 0.0
        %2023 = vmatprep.subr.mxu0 0.0
        %2024 = vmatpush1.msra.mxu0 0.0
        %2025 = vmatprep.subr.mxu0 0.0
        %2026 = vmatpush1.msra.mxu0 0.0
        %2027 = vmatprep.subr.mxu0 0.0
        %2028 = vmatpush1.msra.mxu0 0.0
        %2029 = vmatprep.subr.mxu0 0.0
        %2030 = vmatpush1.msra.mxu0 0.0
        %2031 = vmatprep.subr.mxu0 0.0
        %2032 = vmatpush1.msra.mxu0 0.0
        %2033 = vmatprep.subr.mxu0 0.0
        %2034 = vmatpush1.msra.mxu0 0.0
        %2035 = vmatprep.subr.mxu0 0.0
        %2036 = vmatpush1.msra.mxu0 0.0
        %2037 = vmatprep.subr.mxu0 0.0
        %2038 = vmatpush1.msra.mxu0 0.0
        %2039 = vmatprep.subr.mxu0 0.0
        %2040 = vmatpush1.msra.mxu0 0.0
        %2041 = vmatprep.subr.mxu0 0.0
        %2042 = vmatpush1.msra.mxu0 0.0
        %2043 = vmatprep.subr.mxu0 0.0
        %2044 = vmatpush1.msra.mxu0 0.0
        %2045 = vmatprep.subr.mxu0 0.0
        %2046 = vmatpush1.msra.mxu0 0.0
        %2047 = vmatprep.subr.mxu0 0.0
        %2048 = vmatpush1.msra.mxu0 0.0
        %2049 = vmatprep.subr.mxu0 0.0
        %2050 = vmatpush1.msra.mxu0 0.0
        %2051 = vmatprep.subr.mxu0 0.0
        %2052 = vmatpush1.msra.mxu0 0.0
        %2053 = vmatprep.subr.mxu0 0.0
        %2054 = vmatpush1.msra.mxu0 0.0
        %2055 = vmatprep.subr.mxu0 0.0
        %2056 = vmatpush1.msra.mxu0 0.0
        %2057 = vmatprep.mubr.f32.mxu0 0.0
        %2058 = vmatmul.mubr.f32.gmra.mrb[0].mxu0 %v1991
        %v2059 = vpop.f32.mrb[0].mxu0
        %v2060 = vadd.f32 0.0, %v2059
        %v2061 = vpop.f32.mrb[0].mxu0
        %2062 = vdwg.mxu0
        %v2064 = vsel %vm916, %v1989, 0
        %2066 = vmatprep.subr.mxu0 0.0
        %2067 = vmatpush1.msra.mxu0 %v1634
        %2068 = vmatprep.subr.mxu0 0.0
        %2069 = vmatpush1.msra.mxu0 %v1635
        %2070 = vmatprep.subr.mxu0 0.0
        %2071 = vmatpush1.msra.mxu0 0.0
        %2072 = vmatprep.subr.mxu0 0.0
        %2073 = vmatpush1.msra.mxu0 0.0
        %2074 = vmatprep.subr.mxu0 0.0
        %2075 = vmatpush1.msra.mxu0 0.0
        %2076 = vmatprep.subr.mxu0 0.0
        %2077 = vmatpush1.msra.mxu0 0.0
        %2078 = vmatprep.subr.mxu0 0.0
        %2079 = vmatpush1.msra.mxu0 0.0
        %2080 = vmatprep.subr.mxu0 0.0
        %2081 = vmatpush1.msra.mxu0 0.0
        %2082 = vmatprep.subr.mxu0 0.0
        %2083 = vmatpush1.msra.mxu0 0.0
        %2084 = vmatprep.subr.mxu0 0.0
        %2085 = vmatpush1.msra.mxu0 0.0
        %2086 = vmatprep.subr.mxu0 0.0
        %2087 = vmatpush1.msra.mxu0 0.0
        %2088 = vmatprep.subr.mxu0 0.0
        %2089 = vmatpush1.msra.mxu0 0.0
        %2090 = vmatprep.subr.mxu0 0.0
        %2091 = vmatpush1.msra.mxu0 0.0
        %2092 = vmatprep.subr.mxu0 0.0
        %2093 = vmatpush1.msra.mxu0 0.0
        %2094 = vmatprep.subr.mxu0 0.0
        %2095 = vmatpush1.msra.mxu0 0.0
        %2096 = vmatprep.subr.mxu0 0.0
        %2097 = vmatpush1.msra.mxu0 0.0
        %2098 = vmatprep.subr.mxu0 0.0
        %2099 = vmatpush1.msra.mxu0 0.0
        %2100 = vmatprep.subr.mxu0 0.0
        %2101 = vmatpush1.msra.mxu0 0.0
        %2102 = vmatprep.subr.mxu0 0.0
        %2103 = vmatpush1.msra.mxu0 0.0
        %2104 = vmatprep.subr.mxu0 0.0
        %2105 = vmatpush1.msra.mxu0 0.0
        %2106 = vmatprep.subr.mxu0 0.0
        %2107 = vmatpush1.msra.mxu0 0.0
        %2108 = vmatprep.subr.mxu0 0.0
        %2109 = vmatpush1.msra.mxu0 0.0
        %2110 = vmatprep.subr.mxu0 0.0
        %2111 = vmatpush1.msra.mxu0 0.0
        %2112 = vmatprep.subr.mxu0 0.0
        %2113 = vmatpush1.msra.mxu0 0.0
        %2114 = vmatprep.subr.mxu0 0.0
        %2115 = vmatpush1.msra.mxu0 0.0
        %2116 = vmatprep.subr.mxu0 0.0
        %2117 = vmatpush1.msra.mxu0 0.0
        %2118 = vmatprep.subr.mxu0 0.0
        %2119 = vmatpush1.msra.mxu0 0.0
        %2120 = vmatprep.subr.mxu0 0.0
        %2121 = vmatpush1.msra.mxu0 0.0
        %2122 = vmatprep.subr.mxu0 0.0
        %2123 = vmatpush1.msra.mxu0 0.0
        %2124 = vmatprep.subr.mxu0 0.0
        %2125 = vmatpush1.msra.mxu0 0.0
        %2126 = vmatprep.subr.mxu0 0.0
        %2127 = vmatpush1.msra.mxu0 0.0
        %2128 = vmatprep.subr.mxu0 0.0
        %2129 = vmatpush1.msra.mxu0 0.0
        %2130 = vmatprep.mubr.f32.mxu0 0.0
        %2131 = vmatmul.mubr.f32.gmra.mrb[0].mxu0 %v2064
        %v2132 = vpop.f32.mrb[0].mxu0
        %v2133 = vadd.f32 0.0, %v2132
        %v2134 = vpop.f32.mrb[0].mxu0
        %2135 = vdwg.mxu0
        %v2136 = vadd.f32 %v2060, %v2133
        %v2138 = vlaneseq
        %v2139 = vshrl.u32 %v2138, 7
        %v2140 = vsub.s32 0, %v2139
        %v2141 = vrot.slane %v1636, %v2140
        %v2143 = vadd.f32 %v2136, %v2141
        %v2144 = vadd.f32 %v1440, %v2143
        %v2145 = vld [vmem:[%s19 + $0x1] sm:$0x1]
        %v2146 = vld [vmem:[%s20 + $0x1] sm:$0x1]
        %2147 = vadd.xlane.f32.xlu0 %v2144
        %v2148 = vpop.xlane.xlu0 %2147
        %v2149 = vmul.f32 %v2148, 0.03125
        %v2150 = vsub.f32 %v2144, %v2149
        %v2151 = vmul.f32 %v2150, %v2150
        %2152 = vadd.xlane.f32.xlu0 %v2151
        %v2153 = vpop.xlane.xlu0 %2152
        %v2154 = vmul.f32 %v2149, 96.0
        %v2155 = vmul.f32 %v2154, %v2149
        %v2156 = vsub.f32 %v2153, %v2155
        %v2157 = vmul.f32 %v2156, 0.03125
        %v2158 = vmax.f32 %v2157, 0.0
        %v2159 = vadd.f32 %v2158, 1e-05
        %v2160 = vrsqrt.pop %v2159
        %v2161 = vmul.f32 %v2150, %v2160
        %v2162 = vlaneseq
        %v2163 = vshrl.u32 %v2162, 7
        %v2164 = vsub.s32 0, %v2163
        %v2165 = vrot.slane %v2145, %v2164
        %v2166 = vmul.f32 %v2161, %v2165
        %v2167 = vlaneseq
        %v2168 = vshrl.u32 %v2167, 7
        %v2169 = vsub.s32 0, %v2168
        %v2170 = vrot.slane %v2146, %v2169
        %v2171 = vadd.f32 %v2166, %v2170
        %v2172 = vld [vmem:[%s15] sm:$0xff]
        %v2173 = vld [vmem:[%s15 + $0x8] sm:$0xff]
        %v2174 = vld [vmem:[%s15 + $0x10] sm:$0xff]
        %v2175 = vld [vmem:[%s15 + $0x18] sm:$0xff]
        %v2176 = vld [vmem:[%s15 + $0x20] sm:$0xff]
        %v2177 = vld [vmem:[%s15 + $0x28] sm:$0xff]
        %v2178 = vld [vmem:[%s15 + $0x30] sm:$0xff]
        %v2179 = vld [vmem:[%s15 + $0x38] sm:$0xff]
        %v2180 = vld [vmem:[%s15 + $0x40] sm:$0xff]
        %v2181 = vld [vmem:[%s15 + $0x48] sm:$0xff]
        %v2182 = vld [vmem:[%s15 + $0x50] sm:$0xff]
        %v2183 = vld [vmem:[%s15 + $0x58] sm:$0xff]
        %v2184 = vld [vmem:[%s15 + $0x60] sm:$0xff]
        %v2185 = vld [vmem:[%s15 + $0x68] sm:$0xff]
        %v2186 = vld [vmem:[%s15 + $0x70] sm:$0xff]
        %v2187 = vld [vmem:[%s15 + $0x78] sm:$0xff]
        %v2188 = vld [vmem:[%s16] sm:$0x1]
        %v2190 = vlaneseq
        %v2191 = vshrl.u32 %v2190, 7
        %v2192 = vsub.s32 0, %v2191
        %v2193 = vrot.slane %v2188, %v2192
        %2195 = vmatprep.subr.mxu0 0.0
        %2196 = vmatpush1.msra.mxu0 %v2172
        %2197 = vmatprep.subr.mxu0 0.0
        %2198 = vmatpush1.msra.mxu0 %v2173
        %2199 = vmatprep.subr.mxu0 0.0
        %2200 = vmatpush1.msra.mxu0 %v2174
        %2201 = vmatprep.subr.mxu0 0.0
        %2202 = vmatpush1.msra.mxu0 %v2175
        %2203 = vmatprep.subr.mxu0 0.0
        %2204 = vmatpush1.msra.mxu0 %v2176
        %2205 = vmatprep.subr.mxu0 0.0
        %2206 = vmatpush1.msra.mxu0 %v2177
        %2207 = vmatprep.subr.mxu0 0.0
        %2208 = vmatpush1.msra.mxu0 %v2178
        %2209 = vmatprep.subr.mxu0 0.0
        %2210 = vmatpush1.msra.mxu0 %v2179
        %2211 = vmatprep.subr.mxu0 0.0
        %2212 = vmatpush1.msra.mxu0 %v2180
        %2213 = vmatprep.subr.mxu0 0.0
        %2214 = vmatpush1.msra.mxu0 %v2181
        %2215 = vmatprep.subr.mxu0 0.0
        %2216 = vmatpush1.msra.mxu0 %v2182
        %2217 = vmatprep.subr.mxu0 0.0
        %2218 = vmatpush1.msra.mxu0 %v2183
        %2219 = vmatprep.subr.mxu0 0.0
        %2220 = vmatpush1.msra.mxu0 %v2184
        %2221 = vmatprep.subr.mxu0 0.0
        %2222 = vmatpush1.msra.mxu0 %v2185
        %2223 = vmatprep.subr.mxu0 0.0
        %2224 = vmatpush1.msra.mxu0 %v2186
        %2225 = vmatprep.subr.mxu0 0.0
        %2226 = vmatpush1.msra.mxu0 %v2187
        %2227 = vmatprep.subr.mxu0 0.0
        %2228 = vmatpush1.msra.mxu0 0.0
        %2229 = vmatprep.subr.mxu0 0.0
        %2230 = vmatpush1.msra.mxu0 0.0
        %2231 = vmatprep.subr.mxu0 0.0
        %2232 = vmatpush1.msra.mxu0 0.0
        %2233 = vmatprep.subr.mxu0 0.0
        %2234 = vmatpush1.msra.mxu0 0.0
        %2235 = vmatprep.subr.mxu0 0.0
        %2236 = vmatpush1.msra.mxu0 0.0
        %2237 = vmatprep.subr.mxu0 0.0
        %2238 = vmatpush1.msra.mxu0 0.0
        %2239 = vmatprep.subr.mxu0 0.0
        %2240 = vmatpush1.msra.mxu0 0.0
        %2241 = vmatprep.subr.mxu0 0.0
        %2242 = vmatpush1.msra.mxu0 0.0
        %2243 = vmatprep.subr.mxu0 0.0
        %2244 = vmatpush1.msra.mxu0 0.0
        %2245 = vmatprep.subr.mxu0 0.0
        %2246 = vmatpush1.msra.mxu0 0.0
        %2247 = vmatprep.subr.mxu0 0.0
        %2248 = vmatpush1.msra.mxu0 0.0
        %2249 = vmatprep.subr.mxu0 0.0
        %2250 = vmatpush1.msra.mxu0 0.0
        %2251 = vmatprep.subr.mxu0 0.0
        %2252 = vmatpush1.msra.mxu0 0.0
        %2253 = vmatprep.subr.mxu0 0.0
        %2254 = vmatpush1.msra.mxu0 0.0
        %2255 = vmatprep.subr.mxu0 0.0
        %2256 = vmatpush1.msra.mxu0 0.0
        %2257 = vmatprep.subr.mxu0 0.0
        %2258 = vmatpush1.msra.mxu0 0.0
        %2259 = vmatprep.mubr.f32.mxu0 0.0
        %2260 = vmatmul.mubr.f32.gmra.mrb[0].mxu0 %v2171
        %v2261 = vpop.f32.mrb[0].mxu0
        %v2262 = vadd.f32 %v2193, %v2261
        %v2263 = vpop.f32.mrb[0].mxu0
        %2264 = vdwg.mxu0
        %v2265 = vmax.f32 %v2262, 0.0
        %v2266 = vld [vmem:[%s17] sm:$0xff]
        %v2267 = vld [vmem:[%s17 + $0x8] sm:$0xff]
        %v2268 = vld [vmem:[%s17 + $0x10] sm:$0xff]
        %v2269 = vld [vmem:[%s17 + $0x18] sm:$0xff]
        %v2270 = vld [vmem:[%s17 + $0x20] sm:$0xff]
        %v2271 = vld [vmem:[%s17 + $0x28] sm:$0xff]
        %v2272 = vld [vmem:[%s17 + $0x30] sm:$0xff]
        %v2273 = vld [vmem:[%s17 + $0x38] sm:$0xff]
        %v2274 = vld [vmem:[%s17 + $0x40] sm:$0xff]
        %v2275 = vld [vmem:[%s17 + $0x48] sm:$0xff]
        %v2276 = vld [vmem:[%s17 + $0x50] sm:$0xff]
        %v2277 = vld [vmem:[%s17 + $0x58] sm:$0xff]
        %v2278 = vld [vmem:[%s17 + $0x60] sm:$0xff]
        %v2279 = vld [vmem:[%s17 + $0x68] sm:$0xff]
        %v2280 = vld [vmem:[%s17 + $0x70] sm:$0xff]
        %v2281 = vld [vmem:[%s17 + $0x78] sm:$0xff]
        %v2282 = vld [vmem:[%s18] sm:$0x1]
        %v2284 = vlaneseq
        %v2285 = vshrl.u32 %v2284, 7
        %v2286 = vsub.s32 0, %v2285
        %v2287 = vrot.slane %v2282, %v2286
        %2289 = vmatprep.subr.mxu0 0.0
        %2290 = vmatpush1.msra.mxu0 %v2266
        %2291 = vmatprep.subr.mxu0 0.0
        %2292 = vmatpush1.msra.mxu0 %v2267
        %2293 = vmatprep.subr.mxu0 0.0
        %2294 = vmatpush1.msra.mxu0 %v2268
        %2295 = vmatprep.subr.mxu0 0.0
        %2296 = vmatpush1.msra.mxu0 %v2269
        %2297 = vmatprep.subr.mxu0 0.0
        %2298 = vmatpush1.msra.mxu0 %v2270
        %2299 = vmatprep.subr.mxu0 0.0
        %2300 = vmatpush1.msra.mxu0 %v2271
        %2301 = vmatprep.subr.mxu0 0.0
        %2302 = vmatpush1.msra.mxu0 %v2272
        %2303 = vmatprep.subr.mxu0 0.0
        %2304 = vmatpush1.msra.mxu0 %v2273
        %2305 = vmatprep.subr.mxu0 0.0
        %2306 = vmatpush1.msra.mxu0 %v2274
        %2307 = vmatprep.subr.mxu0 0.0
        %2308 = vmatpush1.msra.mxu0 %v2275
        %2309 = vmatprep.subr.mxu0 0.0
        %2310 = vmatpush1.msra.mxu0 %v2276
        %2311 = vmatprep.subr.mxu0 0.0
        %2312 = vmatpush1.msra.mxu0 %v2277
        %2313 = vmatprep.subr.mxu0 0.0
        %2314 = vmatpush1.msra.mxu0 %v2278
        %2315 = vmatprep.subr.mxu0 0.0
        %2316 = vmatpush1.msra.mxu0 %v2279
        %2317 = vmatprep.subr.mxu0 0.0
        %2318 = vmatpush1.msra.mxu0 %v2280
        %2319 = vmatprep.subr.mxu0 0.0
        %2320 = vmatpush1.msra.mxu0 %v2281
        %2321 = vmatprep.subr.mxu0 0.0
        %2322 = vmatpush1.msra.mxu0 0.0
        %2323 = vmatprep.subr.mxu0 0.0
        %2324 = vmatpush1.msra.mxu0 0.0
        %2325 = vmatprep.subr.mxu0 0.0
        %2326 = vmatpush1.msra.mxu0 0.0
        %2327 = vmatprep.subr.mxu0 0.0
        %2328 = vmatpush1.msra.mxu0 0.0
        %2329 = vmatprep.subr.mxu0 0.0
        %2330 = vmatpush1.msra.mxu0 0.0
        %2331 = vmatprep.subr.mxu0 0.0
        %2332 = vmatpush1.msra.mxu0 0.0
        %2333 = vmatprep.subr.mxu0 0.0
        %2334 = vmatpush1.msra.mxu0 0.0
        %2335 = vmatprep.subr.mxu0 0.0
        %2336 = vmatpush1.msra.mxu0 0.0
        %2337 = vmatprep.subr.mxu0 0.0
        %2338 = vmatpush1.msra.mxu0 0.0
        %2339 = vmatprep.subr.mxu0 0.0
        %2340 = vmatpush1.msra.mxu0 0.0
        %2341 = vmatprep.subr.mxu0 0.0
        %2342 = vmatpush1.msra.mxu0 0.0
        %2343 = vmatprep.subr.mxu0 0.0
        %2344 = vmatpush1.msra.mxu0 0.0
        %2345 = vmatprep.subr.mxu0 0.0
        %2346 = vmatpush1.msra.mxu0 0.0
        %2347 = vmatprep.subr.mxu0 0.0
        %2348 = vmatpush1.msra.mxu0 0.0
        %2349 = vmatprep.subr.mxu0 0.0
        %2350 = vmatpush1.msra.mxu0 0.0
        %2351 = vmatprep.subr.mxu0 0.0
        %2352 = vmatpush1.msra.mxu0 0.0
        %2353 = vmatprep.mubr.f32.mxu0 0.0
        %2354 = vmatmul.mubr.f32.gmra.mrb[0].mxu0 %v2265
        %v2355 = vpop.f32.mrb[0].mxu0
        %v2356 = vadd.f32 %v2287, %v2355
        %v2357 = vpop.f32.mrb[0].mxu0
        %2358 = vdwg.mxu0
        %v2359 = vadd.f32 %v2171, %v2356
        %v2360 = vld [vmem:[%s19 + $0x2] sm:$0x1]
        %v2361 = vld [vmem:[%s20 + $0x2] sm:$0x1]
        %2362 = vadd.xlane.f32.xlu0 %v2359
        %v2363 = vpop.xlane.xlu0 %2362
        %v2364 = vmul.f32 %v2363, 0.03125
        %v2365 = vsub.f32 %v2359, %v2364
        %v2366 = vmul.f32 %v2365, %v2365
        %2367 = vadd.xlane.f32.xlu0 %v2366
        %v2368 = vpop.xlane.xlu0 %2367
        %v2369 = vmul.f32 %v2364, 96.0
        %v2370 = vmul.f32 %v2369, %v2364
        %v2371 = vsub.f32 %v2368, %v2370
        %v2372 = vmul.f32 %v2371, 0.03125
        %v2373 = vmax.f32 %v2372, 0.0
        %v2374 = vadd.f32 %v2373, 1e-05
        %v2375 = vrsqrt.pop %v2374
        %v2376 = vmul.f32 %v2365, %v2375
        %v2377 = vlaneseq
        %v2378 = vshrl.u32 %v2377, 7
        %v2379 = vsub.s32 0, %v2378
        %v2380 = vrot.slane %v2360, %v2379
        %v2381 = vmul.f32 %v2376, %v2380
        %v2382 = vlaneseq
        %v2383 = vshrl.u32 %v2382, 7
        %v2384 = vsub.s32 0, %v2383
        %v2385 = vrot.slane %v2361, %v2384
        %v2386 = vadd.f32 %v2381, %v2385
        %2387 = vst [vmem:[%s697] sm:$0xff] %v2386
        %s2388 = sand.u32 %s515, 1
        %s2389 = scalar_lea.sflag [#allocation3], %s2388
        %s2390 = sand.u32 %s515, 1
        %s2391 = smul.addr %s2390, 8
        %s2392 = scalar_lea.vmem [#allocation2], %s2391
        // Predicated region
        $region105: #{tpu_custom_call.1} parent=103 // pred_check
          %p2393 = pneg %p525
        $region106: #{tpu_custom_call.1} parent=103 // pred_check_branch
          %2395 = sbr.rel (%p2393) target = $region108
        $region107: #{tpu_custom_call.1} parent=103 // pred_region
          %s2397 = ssub.s32 128, 128
          %2398 = vsyncadd %s2389, %s2397
          %s2399 = sadd.s32 %s40, %s39
          %s2400 = smul.addr %s2399, 128
          %s2401 = scalar_lea.hbm %s21, %s2400
          %s2403 = sshll.u32 %s2392, 4
          %s2404 = int_to_ptr.vmem [resolvable:$true] %s2403
          %2406 = dma.vmem_to_hbm [thread:$0]  %s2404, 128, %s2401, %s2389
        $region108: #{tpu_custom_call.1} parent=103 // pred_fallthru
          _
      $region104: #{tpu_custom_call.1} parent=5 // pred_fallthru
        _
      %p2407 = scmp.le.s32.totalorder 2, %s30
      // Predicated region
      $region109: #{tpu_custom_call.1} parent=5 // pred_check
        %p2408 = pneg %p2407
      $region110: #{tpu_custom_call.1} parent=5 // pred_check_branch
        %2410 = sbr.rel (%p2408) target = $region112
      $region111: #{tpu_custom_call.1} parent=5 // pred_region
        %s2411 = ssub.s32 %s30, 2
        // Predicated region
        $region113: #{tpu_custom_call.1} parent=111 // pred_check
          %p2412 = pneg %p531
        $region114: #{tpu_custom_call.1} parent=111 // pred_check_branch
          %2414 = sbr.rel (%p2412) target = $region116
        $region115: #{tpu_custom_call.1} parent=111 // pred_region
          %s2415 = sand.u32 %s516, 1
          %s2416 = scalar_lea.sflag [#allocation3], %s2415
          %s2417 = sand.u32 %s516, 1
          %s2418 = smul.addr %s2417, 8
          %s2419 = scalar_lea.vmem [#allocation2], %s2418
          %2420 = dma.done %s2416, 128
        $region116: #{tpu_custom_call.1} parent=111 // pred_fallthru
          _
      $region112: #{tpu_custom_call.1} parent=5 // pred_fallthru
        _
    $region6: #{tpu_custom_call.1} parent=1 // loop_footer
      %s34 = sadd.s32 1, %s30
    $region7: #{tpu_custom_call.1} parent=1 // loop_footer_branch
      %29 = sbr.rel target = $region3
    $region8: #{tpu_custom_call.1} parent=1 // loop_exit
      _
    %2421 = vsyncpa [#allocation3], 1
    %s2422 = scalar_lea.sflag [#allocation3], 1
    %2423 = vsyncpa %s2422, 1

</llo_original>
